<compile_context>
chip_gen: v7x
topology: tpu7x:2x2x1
jax: 0.10.0
libtpu: 0.0.40
codegen_flags: <defaults>
</compile_context>

<pallas_src>
import functools
import math

import jax
import jax.numpy as jnp
from jax import lax
from jax.experimental import pallas as pl
from jax.experimental.pallas import tpu as pltpu

_LANE = 128


def _round_up(x, m):
    return ((x + m - 1) // m) * m


def _vmem_limit_bytes():
    """Generation-aware scoped-VMEM request (~5/8 of physical, conservative fallback)."""
    try:
        cap = int(pltpu.get_tpu_info().vmem_capacity_bytes)
    except Exception:
        cap = 0
    if cap <= 0:
        return 32 * 1024 * 1024            # safe everywhere (incl. v7x 64 MiB physical)
    return min((cap * 5) // 8, 100 * 1024 * 1024)


# ---------------------------------------------------------------------------
# Fused Pallas kernel
# ---------------------------------------------------------------------------
def _fused_residual_block_kernel(x_ref, w1_ref, b1_ref, a_ref, w2_ref, b2_ref,
                                 o_ref, o1_scr, *, tile_h, w_out, cp, scale):
    """One row-tile of y = x + scale * conv2(pad_r(PReLU(conv1(pad_r(x)))))."""
    j = pl.program_id(1)
    r0 = pl.multiple_of(j * tile_h, tile_h)

    # (tile_h+4)-row halo window of the padded image (already resident in VMEM;
    # no extra HBM traffic for the halo or the residual).
    s = x_ref[pl.ds(r0, tile_h + 4), :, :]                 # (tile_h+4, W+2, Cp)

    def conv3x3(src, w_ref, rows):
        # K-folded taps: per kernel-row ki build a (rows*W, 3*Cp) row-im2col patch in
        # VMEM and do ONE K=3*Cp MXU matmul; 3 matmuls total instead of 9 (K=Cp).
        m = rows * w_out
        acc = jnp.zeros((m, cp), jnp.float32)
        for ki in range(3):
            rws = src[ki:ki + rows]
            patch = jnp.concatenate(
                [rws[:, 0:w_out], rws[:, 1:w_out + 1], rws[:, 2:w_out + 2]],
                axis=-1).reshape(m, 3 * cp)
            acc = acc + jnp.dot(patch, w_ref[ki],
                                preferred_element_type=jnp.float32)
        return acc

    # ---- conv1 + bias + PReLU over tile_h+2 rows (2 recomputed halo rows) ----------
    o1 = conv3x3(s, w1_ref, tile_h + 2) + b1_ref[...]
    o1 = jnp.where(o1 >= 0.0, o1, a_ref[...] * o1)
    o1 = o1.reshape(tile_h + 2, w_out, cp).astype(o1_scr.dtype)

    # ---- ReflectionPad2d(1) of the intermediate, entirely in VMEM ------------------
    o1_scr[:, 1:w_out + 1, :] = o1
    o1_scr[:, 0:1, :] = o1[:, 1:2, :]                                  # left col <- 1
    o1_scr[:, w_out + 1:w_out + 2, :] = o1[:, w_out - 2:w_out - 1, :]  # right col

    @pl.when(j == 0)                                       # image top: row -1 <- row 1
    def _():
        o1_scr[0, :, :] = o1_scr[2, :, :]

    @pl.when(j == pl.num_programs(1) - 1)                  # image bottom: H <- H-2
    def _():
        o1_scr[tile_h + 1, :, :] = o1_scr[tile_h - 1, :, :]

    # ---- conv2 + bias, * scale, + residual (residual taken from the input slab) ----
    y = (conv3x3(o1_scr[...], w2_ref, tile_h) + b2_ref[...]) * scale
    resid = s[2:2 + tile_h, 1:1 + w_out, :].astype(jnp.float32)
    y = y + resid.reshape(tile_h * w_out, cp)
    o_ref[...] = y.reshape(tile_h, w_out, cp).astype(o_ref.dtype)


# ---------------------------------------------------------------------------
# Tiling / VMEM heuristics
# ---------------------------------------------------------------------------
def _default_tile_h(h, w_out, n):
    best = 1
    for th in range(1, h + 1):
        if h % th:
            continue
        if th > 1 and th * w_out > 256:
            continue                       # cap matmul M ~256 (acc/patch pressure)
        if n == 1 and th == h and h > 1:
            continue                       # keep >=2 row tiles so both v7x TCs work
        best = th
    return best


def _estimate_vmem_bytes(h, w_out, cp, tile_h, act_esize):
    inp = 2 * (h + 4) * (w_out + 2) * cp * act_esize        # double-buffered image
    wts = 2 * 2 * 9 * cp * cp * act_esize                   # w1 + w2, 2 buffers each
    outp = 2 * tile_h * w_out * cp * 4                      # double-buffered out tile
    scr = (tile_h + 2) * (w_out + 2) * cp * act_esize       # o1 scratch
    tmp = (tile_h + 2) * w_out * cp * (3 * act_esize + 4) * 2   # im2col patches + accs
    return inp + wts + outp + scr + tmp


# ---------------------------------------------------------------------------
# Parameters (deterministic, PyTorch-Conv2d-style init)
# ---------------------------------------------------------------------------
def make_params(channels, seed=42):
    keys = jax.random.split(jax.random.PRNGKey(seed), 4)
    fan_in = 3 * 3 * channels
    bound = 1.0 / math.sqrt(fan_in)
    u = lambda k, shape: jax.random.uniform(k, shape, jnp.float32, -bound, bound)
    return {
        "w1": u(keys[0], (3, 3, channels, channels)),   # (KH, KW, Cin, Cout)
        "b1": u(keys[1], (channels,)),
        "w2": u(keys[2], (3, 3, channels, channels)),
        "b2": u(keys[3], (channels,)),
        "alpha": jnp.asarray(0.25, jnp.float32),        # nn.PReLU() default
    }


def _pad_channels(x, cp):
    c = x.shape[-1]
    if c == cp:
        return x
    return jnp.pad(x, ((0, 0),) * (x.ndim - 1) + ((0, cp - c),))


def _prepare_params(params, c, cp, matmul_dtype):
    def prep_w(wt):                          # (3,3,C,C) -> (3, 3*Cp, Cp), K = kj*Cp+cin
        wt = jnp.pad(wt, ((0, 0), (0, 0), (0, cp - c), (0, cp - c)))
        return wt.reshape(3, 3 * cp, cp).astype(matmul_dtype)

    def prep_b(b):
        return jnp.pad(b, (0, cp - c)).reshape(1, cp).astype(jnp.float32)

    alpha = jnp.full((1, cp), params["alpha"], jnp.float32)
    return (prep_w(params["w1"]), prep_b(params["b1"]), alpha,
            prep_w(params["w2"]), prep_b(params["b2"]))


# ---------------------------------------------------------------------------
# Forward pass
# ---------------------------------------------------------------------------
def residual_block_forward(params, x_nchw, *, tile_h=None,
                           matmul_dtype=jnp.bfloat16):
    """y = x + 0.1 * conv2(reflect_pad(PReLU(conv1(reflect_pad(x)))))."""
    x = jnp.transpose(x_nchw, (0, 2, 3, 1)).astype(jnp.float32)     # NHWC
    n, h, w, c = x.shape
    cp = _round_up(c, _LANE)                 # lane-dense channels (K multiple of 128)
    if tile_h is None:
        tile_h = _default_tile_h(h, w, n)
    assert h % tile_h == 0, "tile_h must divide H"
    t = h // tile_h

    vmem_limit = _vmem_limit_bytes()
    act_esize = jnp.dtype(matmul_dtype).itemsize
    assert _estimate_vmem_bytes(h, w, cp, tile_h, act_esize) <= vmem_limit, (
        "padded image too large to keep resident in VMEM; a manual row-slab DMA "
        "variant is required for this size")

    w1, b1, alpha, w2, b2 = _prepare_params(params, c, cp, matmul_dtype)

    # ReflectionPad2d(1) in H and W, plus one extra *don't-care* edge row on top and
    # bottom so every row tile can read a (tile_h+4)-row window without branching
    # (the values in those outer rows only feed o1 halo rows that get overwritten by
    # the in-kernel reflection of the intermediate).
    xp = jnp.pad(x, ((0, 0), (1, 1), (1, 1), (0, 0)), mode="reflect")
    xpe = jnp.pad(xp, ((0, 0), (1, 1), (0, 0), (0, 0)), mode="edge")
    xpe = _pad_channels(xpe, cp).astype(matmul_dtype)               # (N, H+4, W+2, Cp)

    kernel = functools.partial(_fused_residual_block_kernel,
                               tile_h=tile_h, w_out=w, cp=cp, scale=0.1)

    y = pl.pallas_call(
        kernel,
        out_shape=jax.ShapeDtypeStruct((n, h, w, cp), jnp.float32),
        grid=(n, t),
        in_specs=[
            # Whole padded image per grid step; the block index only changes with the
            # image index i, so Pallas DMAs it once per image and keeps it resident
            # across all row tiles (no halo re-read / no HBM re-materialization).
            pl.BlockSpec((None, h + 4, w + 2, cp), lambda i, j: (i, 0, 0, 0)),
            # Weights / biases / PReLU slope: constant index map -> VMEM-resident.
            pl.BlockSpec((3, 3 * cp, cp), lambda i, j: (0, 0, 0)),
            pl.BlockSpec((1, cp), lambda i, j: (0, 0)),
            pl.BlockSpec((1, cp), lambda i, j: (0, 0)),
            pl.BlockSpec((3, 3 * cp, cp), lambda i, j: (0, 0, 0)),
            pl.BlockSpec((1, cp), lambda i, j: (0, 0)),
        ],
        out_specs=pl.BlockSpec((None, tile_h, w, cp), lambda i, j: (i, j, 0, 0)),
        scratch_shapes=[pltpu.VMEM((tile_h + 2, w + 2, cp), matmul_dtype)],
        compiler_params=pltpu.CompilerParams(
            dimension_semantics=("parallel", "parallel"),
            vmem_limit_bytes=vmem_limit),
    )(xpe, w1, b1, alpha, w2, b2)

    y = y[..., :c]                            # drop channel padding
    return jnp.transpose(y, (0, 3, 1, 2))     # back to NCHW


# ---------------------------------------------------------------------------
# Pure-JAX reference (correctness check only)
# ---------------------------------------------------------------------------
def reference_forward(params, x_nchw):
    x = jnp.transpose(x_nchw, (0, 2, 3, 1)).astype(jnp.float32)

    def conv(z, wt, b):
        zp = jnp.pad(z, ((0, 0), (1, 1), (1, 1), (0, 0)), mode="reflect")
        out = lax.conv_general_dilated(
            zp, wt, window_strides=(1, 1), padding="VALID",
            dimension_numbers=("NHWC", "HWIO", "NHWC"))
        return out + b

    o1 = conv(x, params["w1"], params["b1"])
    o1 = jnp.where(o1 >= 0.0, o1, params["alpha"] * o1)
    y = conv(o1, params["w2"], params["b2"]) * 0.1 + x
    return jnp.transpose(y, (0, 3, 1, 2))


# ---------------------------------------------------------------------------
if __name__ == "__main__":
    batch, channels, hw = 2, 64, 16
    params = make_params(channels, seed=42)
    x = jax.random.normal(jax.random.PRNGKey(0), (batch, channels, hw, hw),
                          jnp.float32)

    # bf16 path uses the auto tile_h chooser; f32 path forces tile_h=8 (exercises
    # both the single-row-tile and multi-row-tile code paths).
    fwd_bf16 = jax.jit(functools.partial(residual_block_forward,
                                         matmul_dtype=jnp.bfloat16))
    fwd_f32 = jax.jit(functools.partial(residual_block_forward,
                                        tile_h=8, matmul_dtype=jnp.float32))

    y_bf16 = jax.block_until_ready(fwd_bf16(params, x))
    y_f32 = jax.block_until_ready(fwd_f32(params, x))
    y_ref = jax.block_until_ready(jax.jit(reference_forward)(params, x))

    assert y_bf16.shape == x.shape and y_f32.shape == x.shape
    err_f32 = float(jnp.max(jnp.abs(y_f32 - y_ref)))
    err_bf16 = float(jnp.max(jnp.abs(y_bf16 - y_ref)))
    assert err_f32 < 1e-2, f"f32 kernel mismatch vs reference: {err_f32}"
    assert err_bf16 < 1e-1, f"bf16 kernel mismatch vs reference: {err_bf16}"
    print("KERNEL_OK")
</pallas_src>

<mosaic_0001>
module attributes {stable_mosaic.version = 11 : i64} {
  func.func @_fused_residual_block_kernel(%arg0: i32, %arg1: i32, %arg2: memref<1x20x18x128xbf16, #tpu.memory_space<vmem>>, %arg3: memref<3x384x128xbf16, #tpu.memory_space<vmem>>, %arg4: memref<1x128xf32, #tpu.memory_space<vmem>>, %arg5: memref<1x128xf32, #tpu.memory_space<vmem>>, %arg6: memref<3x384x128xbf16, #tpu.memory_space<vmem>>, %arg7: memref<1x128xf32, #tpu.memory_space<vmem>>, %arg8: memref<1x16x16x128xf32, #tpu.memory_space<vmem>>, %arg9: memref<18x18x128xbf16, #tpu.memory_space<vmem>>) attributes {dimension_semantics = [#tpu.dimension_semantics<parallel>, #tpu.dimension_semantics<parallel>], iteration_bounds = array<i64: 2, 1>, scalar_prefetch = 0 : i64, scratch_operands = 1 : i64, tpu.core_type = #tpu.core_type<tc>, window_params = [{transform_indices = @transform_0, window_bounds = array<i64: 1, 20, 18, 128>}, {pipeline_mode = #tpu.pipeline_mode<synchronous>, transform_indices = @transform_1, window_bounds = array<i64: 3, 384, 128>}, {pipeline_mode = #tpu.pipeline_mode<synchronous>, transform_indices = @transform_2, window_bounds = array<i64: 1, 128>}, {pipeline_mode = #tpu.pipeline_mode<synchronous>, transform_indices = @transform_3, window_bounds = array<i64: 1, 128>}, {pipeline_mode = #tpu.pipeline_mode<synchronous>, transform_indices = @transform_4, window_bounds = array<i64: 3, 384, 128>}, {pipeline_mode = #tpu.pipeline_mode<synchronous>, transform_indices = @transform_5, window_bounds = array<i64: 1, 128>}, {transform_indices = @transform_6, window_bounds = array<i64: 1, 16, 16, 128>}]} {
    %c16_i32 = arith.constant 16 : i32
    %0 = arith.muli %arg1, %c16_i32 : i32
    %1 = tpu.assume_multiple %0, 16 : i32
    %c0 = arith.constant 0 : index
    %2 = arith.index_cast %1 : i32 to index
    %c0_0 = arith.constant 0 : index
    %c0_1 = arith.constant 0 : index
    %3 = vector.load %arg2[%c0, %2, %c0_0, %c0_1] : memref<1x20x18x128xbf16, #tpu.memory_space<vmem>>, vector<1x20x18x128xbf16>
    %4 = vector.shape_cast %3 : vector<1x20x18x128xbf16> to vector<20x18x128xbf16>
    %cst = arith.constant 0.000000e+00 : f32
    %5 = vector.broadcast %cst : f32 to vector<288x128xf32>
    %6 = vector.extract_strided_slice %4 {offsets = [0, 0, 0], sizes = [18, 18, 128], strides = [1, 1, 1]} : vector<20x18x128xbf16> to vector<18x18x128xbf16>
    %7 = vector.extract_strided_slice %6 {offsets = [0, 0, 0], sizes = [18, 16, 128], strides = [1, 1, 1]} : vector<18x18x128xbf16> to vector<18x16x128xbf16>
    %8 = vector.extract_strided_slice %6 {offsets = [0, 1, 0], sizes = [18, 16, 128], strides = [1, 1, 1]} : vector<18x18x128xbf16> to vector<18x16x128xbf16>
    %9 = vector.extract_strided_slice %6 {offsets = [0, 2, 0], sizes = [18, 16, 128], strides = [1, 1, 1]} : vector<18x18x128xbf16> to vector<18x16x128xbf16>
    %10 = tpu.concatenate %7, %8, %9 in 2 : vector<18x16x128xbf16>, vector<18x16x128xbf16>, vector<18x16x128xbf16> -> vector<18x16x384xbf16>
    %11 = vector.shape_cast %10 : vector<18x16x384xbf16> to vector<288x384xbf16>
    %c0_2 = arith.constant 0 : index
    %c0_3 = arith.constant 0 : index
    %c0_4 = arith.constant 0 : index
    %12 = vector.load %arg3[%c0_2, %c0_3, %c0_4] : memref<3x384x128xbf16, #tpu.memory_space<vmem>>, vector<1x384x128xbf16>
    %13 = vector.shape_cast %12 : vector<1x384x128xbf16> to vector<384x128xbf16>
    %cst_5 = arith.constant dense<0.000000e+00> : vector<288x128xf32>
    %14 = tpu.matmul %11, %13, %cst_5 {dimension_numbers = #tpu.dot_dimension_numbers<[1], [0], [0], [1], [0, 0, 1, 1], [], []>} : vector<288x384xbf16>, vector<384x128xbf16>, vector<288x128xf32> -> vector<288x128xf32>
    %15 = arith.addf %5, %14 : vector<288x128xf32>
    %16 = vector.extract_strided_slice %4 {offsets = [1, 0, 0], sizes = [18, 18, 128], strides = [1, 1, 1]} : vector<20x18x128xbf16> to vector<18x18x128xbf16>
    %17 = vector.extract_strided_slice %16 {offsets = [0, 0, 0], sizes = [18, 16, 128], strides = [1, 1, 1]} : vector<18x18x128xbf16> to vector<18x16x128xbf16>
    %18 = vector.extract_strided_slice %16 {offsets = [0, 1, 0], sizes = [18, 16, 128], strides = [1, 1, 1]} : vector<18x18x128xbf16> to vector<18x16x128xbf16>
    %19 = vector.extract_strided_slice %16 {offsets = [0, 2, 0], sizes = [18, 16, 128], strides = [1, 1, 1]} : vector<18x18x128xbf16> to vector<18x16x128xbf16>
    %20 = tpu.concatenate %17, %18, %19 in 2 : vector<18x16x128xbf16>, vector<18x16x128xbf16>, vector<18x16x128xbf16> -> vector<18x16x384xbf16>
    %21 = vector.shape_cast %20 : vector<18x16x384xbf16> to vector<288x384xbf16>
    %c1 = arith.constant 1 : index
    %c0_6 = arith.constant 0 : index
    %c0_7 = arith.constant 0 : index
    %22 = vector.load %arg3[%c1, %c0_6, %c0_7] : memref<3x384x128xbf16, #tpu.memory_space<vmem>>, vector<1x384x128xbf16>
    %23 = vector.shape_cast %22 : vector<1x384x128xbf16> to vector<384x128xbf16>
    %cst_8 = arith.constant dense<0.000000e+00> : vector<288x128xf32>
    %24 = tpu.matmul %21, %23, %cst_8 {dimension_numbers = #tpu.dot_dimension_numbers<[1], [0], [0], [1], [0, 0, 1, 1], [], []>} : vector<288x384xbf16>, vector<384x128xbf16>, vector<288x128xf32> -> vector<288x128xf32>
    %25 = arith.addf %15, %24 : vector<288x128xf32>
    %26 = vector.extract_strided_slice %4 {offsets = [2, 0, 0], sizes = [18, 18, 128], strides = [1, 1, 1]} : vector<20x18x128xbf16> to vector<18x18x128xbf16>
    %27 = vector.extract_strided_slice %26 {offsets = [0, 0, 0], sizes = [18, 16, 128], strides = [1, 1, 1]} : vector<18x18x128xbf16> to vector<18x16x128xbf16>
    %28 = vector.extract_strided_slice %26 {offsets = [0, 1, 0], sizes = [18, 16, 128], strides = [1, 1, 1]} : vector<18x18x128xbf16> to vector<18x16x128xbf16>
    %29 = vector.extract_strided_slice %26 {offsets = [0, 2, 0], sizes = [18, 16, 128], strides = [1, 1, 1]} : vector<18x18x128xbf16> to vector<18x16x128xbf16>
    %30 = tpu.concatenate %27, %28, %29 in 2 : vector<18x16x128xbf16>, vector<18x16x128xbf16>, vector<18x16x128xbf16> -> vector<18x16x384xbf16>
    %31 = vector.shape_cast %30 : vector<18x16x384xbf16> to vector<288x384xbf16>
    %c2 = arith.constant 2 : index
    %c0_9 = arith.constant 0 : index
    %c0_10 = arith.constant 0 : index
    %32 = vector.load %arg3[%c2, %c0_9, %c0_10] : memref<3x384x128xbf16, #tpu.memory_space<vmem>>, vector<1x384x128xbf16>
    %33 = vector.shape_cast %32 : vector<1x384x128xbf16> to vector<384x128xbf16>
    %cst_11 = arith.constant dense<0.000000e+00> : vector<288x128xf32>
    %34 = tpu.matmul %31, %33, %cst_11 {dimension_numbers = #tpu.dot_dimension_numbers<[1], [0], [0], [1], [0, 0, 1, 1], [], []>} : vector<288x384xbf16>, vector<384x128xbf16>, vector<288x128xf32> -> vector<288x128xf32>
    %35 = arith.addf %25, %34 : vector<288x128xf32>
    %c0_12 = arith.constant 0 : index
    %c0_13 = arith.constant 0 : index
    %36 = vector.load %arg4[%c0_12, %c0_13] : memref<1x128xf32, #tpu.memory_space<vmem>>, vector<1x128xf32>
    %37 = vector.broadcast %36 : vector<1x128xf32> to vector<288x128xf32>
    %38 = arith.addf %35, %37 : vector<288x128xf32>
    %cst_14 = arith.constant 0.000000e+00 : f32
    %39 = vector.broadcast %cst_14 : f32 to vector<288x128xf32>
    %40 = arith.cmpf oge, %38, %39 : vector<288x128xf32>
    %c0_15 = arith.constant 0 : index
    %c0_16 = arith.constant 0 : index
    %41 = vector.load %arg5[%c0_15, %c0_16] : memref<1x128xf32, #tpu.memory_space<vmem>>, vector<1x128xf32>
    %42 = vector.broadcast %41 : vector<1x128xf32> to vector<288x128xf32>
    %43 = arith.mulf %42, %38 : vector<288x128xf32>
    %44 = arith.select %40, %38, %43 : vector<288x128xi1>, vector<288x128xf32>
    %45 = vector.shape_cast %44 : vector<288x128xf32> to vector<18x16x128xf32>
    %46 = arith.truncf %45 : vector<18x16x128xf32> to vector<18x16x128xbf16>
    %c0_17 = arith.constant 0 : index
    %c1_18 = arith.constant 1 : index
    %c0_19 = arith.constant 0 : index
    %47 = vector.load %arg9[%c0_17, %c1_18, %c0_19] : memref<18x18x128xbf16, #tpu.memory_space<vmem>>, vector<18x16x128xbf16>
    tpu.vector_store %arg9[%c0_17, %c1_18, %c0_19], %46 {strides = array<i32>} : memref<18x18x128xbf16, #tpu.memory_space<vmem>>, vector<18x16x128xbf16>,
    %48 = vector.extract_strided_slice %46 {offsets = [0, 1, 0], sizes = [18, 1, 128], strides = [1, 1, 1]} : vector<18x16x128xbf16> to vector<18x1x128xbf16>
    %c0_20 = arith.constant 0 : index
    %c0_21 = arith.constant 0 : index
    %c0_22 = arith.constant 0 : index
    %49 = vector.load %arg9[%c0_20, %c0_21, %c0_22] : memref<18x18x128xbf16, #tpu.memory_space<vmem>>, vector<18x1x128xbf16>
    tpu.vector_store %arg9[%c0_20, %c0_21, %c0_22], %48 {strides = array<i32>} : memref<18x18x128xbf16, #tpu.memory_space<vmem>>, vector<18x1x128xbf16>,
    %50 = vector.extract_strided_slice %46 {offsets = [0, 14, 0], sizes = [18, 1, 128], strides = [1, 1, 1]} : vector<18x16x128xbf16> to vector<18x1x128xbf16>
    %c0_23 = arith.constant 0 : index
    %c17 = arith.constant 17 : index
    %c0_24 = arith.constant 0 : index
    %51 = vector.load %arg9[%c0_23, %c17, %c0_24] : memref<18x18x128xbf16, #tpu.memory_space<vmem>>, vector<18x1x128xbf16>
    tpu.vector_store %arg9[%c0_23, %c17, %c0_24], %50 {strides = array<i32>} : memref<18x18x128xbf16, #tpu.memory_space<vmem>>, vector<18x1x128xbf16>,
    %c0_i32 = arith.constant 0 : i32
    %52 = arith.cmpi eq, %arg1, %c0_i32 : i32
    %53 = arith.extui %52 : i1 to i32
    %c0_i32_25 = arith.constant 0 : i32
    %54 = arith.cmpi ne, %53, %c0_i32_25 : i32
    scf.if %54 {
      %c2_51 = arith.constant 2 : index
      %c0_52 = arith.constant 0 : index
      %c0_53 = arith.constant 0 : index
      %103 = vector.load %arg9[%c2_51, %c0_52, %c0_53] : memref<18x18x128xbf16, #tpu.memory_space<vmem>>, vector<1x18x128xbf16>
      %104 = vector.shape_cast %103 : vector<1x18x128xbf16> to vector<18x128xbf16>
      %c0_54 = arith.constant 0 : index
      %c0_55 = arith.constant 0 : index
      %c0_56 = arith.constant 0 : index
      %105 = vector.load %arg9[%c0_54, %c0_55, %c0_56] : memref<18x18x128xbf16, #tpu.memory_space<vmem>>, vector<1x18x128xbf16>
      %106 = vector.shape_cast %105 : vector<1x18x128xbf16> to vector<18x128xbf16>
      %107 = vector.shape_cast %104 : vector<18x128xbf16> to vector<1x18x128xbf16>
      tpu.vector_store %arg9[%c0_54, %c0_55, %c0_56], %107 {strides = array<i32>} : memref<18x18x128xbf16, #tpu.memory_space<vmem>>, vector<1x18x128xbf16>,
    } else {
    }
    %c0_i32_26 = arith.constant 0 : i32
    %55 = arith.cmpi eq, %arg1, %c0_i32_26 : i32
    %56 = arith.extui %55 : i1 to i32
    %c0_i32_27 = arith.constant 0 : i32
    %57 = arith.cmpi ne, %56, %c0_i32_27 : i32
    scf.if %57 {
      %c15 = arith.constant 15 : index
      %c0_51 = arith.constant 0 : index
      %c0_52 = arith.constant 0 : index
      %103 = vector.load %arg9[%c15, %c0_51, %c0_52] : memref<18x18x128xbf16, #tpu.memory_space<vmem>>, vector<1x18x128xbf16>
      %104 = vector.shape_cast %103 : vector<1x18x128xbf16> to vector<18x128xbf16>
      %c17_53 = arith.constant 17 : index
      %c0_54 = arith.constant 0 : index
      %c0_55 = arith.constant 0 : index
      %105 = vector.load %arg9[%c17_53, %c0_54, %c0_55] : memref<18x18x128xbf16, #tpu.memory_space<vmem>>, vector<1x18x128xbf16>
      %106 = vector.shape_cast %105 : vector<1x18x128xbf16> to vector<18x128xbf16>
      %107 = vector.shape_cast %104 : vector<18x128xbf16> to vector<1x18x128xbf16>
      tpu.vector_store %arg9[%c17_53, %c0_54, %c0_55], %107 {strides = array<i32>} : memref<18x18x128xbf16, #tpu.memory_space<vmem>>, vector<1x18x128xbf16>,
    } else {
    }
    %c0_28 = arith.constant 0 : index
    %c0_29 = arith.constant 0 : index
    %c0_30 = arith.constant 0 : index
    %58 = vector.load %arg9[%c0_28, %c0_29, %c0_30] : memref<18x18x128xbf16, #tpu.memory_space<vmem>>, vector<18x18x128xbf16>
    %cst_31 = arith.constant 0.000000e+00 : f32
    %59 = vector.broadcast %cst_31 : f32 to vector<256x128xf32>
    %60 = vector.extract_strided_slice %58 {offsets = [0, 0, 0], sizes = [16, 18, 128], strides = [1, 1, 1]} : vector<18x18x128xbf16> to vector<16x18x128xbf16>
    %61 = vector.extract_strided_slice %60 {offsets = [0, 0, 0], sizes = [16, 16, 128], strides = [1, 1, 1]} : vector<16x18x128xbf16> to vector<16x16x128xbf16>
    %62 = vector.extract_strided_slice %60 {offsets = [0, 1, 0], sizes = [16, 16, 128], strides = [1, 1, 1]} : vector<16x18x128xbf16> to vector<16x16x128xbf16>
    %63 = vector.extract_strided_slice %60 {offsets = [0, 2, 0], sizes = [16, 16, 128], strides = [1, 1, 1]} : vector<16x18x128xbf16> to vector<16x16x128xbf16>
    %64 = tpu.concatenate %61, %62, %63 in 2 : vector<16x16x128xbf16>, vector<16x16x128xbf16>, vector<16x16x128xbf16> -> vector<16x16x384xbf16>
    %65 = vector.shape_cast %64 : vector<16x16x384xbf16> to vector<256x384xbf16>
    %c0_32 = arith.constant 0 : index
    %c0_33 = arith.constant 0 : index
    %c0_34 = arith.constant 0 : index
    %66 = vector.load %arg6[%c0_32, %c0_33, %c0_34] : memref<3x384x128xbf16, #tpu.memory_space<vmem>>, vector<1x384x128xbf16>
    %67 = vector.shape_cast %66 : vector<1x384x128xbf16> to vector<384x128xbf16>
    %cst_35 = arith.constant dense<0.000000e+00> : vector<256x128xf32>
    %68 = tpu.matmul %65, %67, %cst_35 {dimension_numbers = #tpu.dot_dimension_numbers<[1], [0], [0], [1], [0, 0, 1, 1], [], []>} : vector<256x384xbf16>, vector<384x128xbf16>, vector<256x128xf32> -> vector<256x128xf32>
    %69 = arith.addf %59, %68 : vector<256x128xf32>
    %70 = vector.extract_strided_slice %58 {offsets = [1, 0, 0], sizes = [16, 18, 128], strides = [1, 1, 1]} : vector<18x18x128xbf16> to vector<16x18x128xbf16>
    %71 = vector.extract_strided_slice %70 {offsets = [0, 0, 0], sizes = [16, 16, 128], strides = [1, 1, 1]} : vector<16x18x128xbf16> to vector<16x16x128xbf16>
    %72 = vector.extract_strided_slice %70 {offsets = [0, 1, 0], sizes = [16, 16, 128], strides = [1, 1, 1]} : vector<16x18x128xbf16> to vector<16x16x128xbf16>
    %73 = vector.extract_strided_slice %70 {offsets = [0, 2, 0], sizes = [16, 16, 128], strides = [1, 1, 1]} : vector<16x18x128xbf16> to vector<16x16x128xbf16>
    %74 = tpu.concatenate %71, %72, %73 in 2 : vector<16x16x128xbf16>, vector<16x16x128xbf16>, vector<16x16x128xbf16> -> vector<16x16x384xbf16>
    %75 = vector.shape_cast %74 : vector<16x16x384xbf16> to vector<256x384xbf16>
    %c1_36 = arith.constant 1 : index
    %c0_37 = arith.constant 0 : index
    %c0_38 = arith.constant 0 : index
    %76 = vector.load %arg6[%c1_36, %c0_37, %c0_38] : memref<3x384x128xbf16, #tpu.memory_space<vmem>>, vector<1x384x128xbf16>
    %77 = vector.shape_cast %76 : vector<1x384x128xbf16> to vector<384x128xbf16>
    %cst_39 = arith.constant dense<0.000000e+00> : vector<256x128xf32>
    %78 = tpu.matmul %75, %77, %cst_39 {dimension_numbers = #tpu.dot_dimension_numbers<[1], [0], [0], [1], [0, 0, 1, 1], [], []>} : vector<256x384xbf16>, vector<384x128xbf16>, vector<256x128xf32> -> vector<256x128xf32>
    %79 = arith.addf %69, %78 : vector<256x128xf32>
    %80 = vector.extract_strided_slice %58 {offsets = [2, 0, 0], sizes = [16, 18, 128], strides = [1, 1, 1]} : vector<18x18x128xbf16> to vector<16x18x128xbf16>
    %81 = vector.extract_strided_slice %80 {offsets = [0, 0, 0], sizes = [16, 16, 128], strides = [1, 1, 1]} : vector<16x18x128xbf16> to vector<16x16x128xbf16>
    %82 = vector.extract_strided_slice %80 {offsets = [0, 1, 0], sizes = [16, 16, 128], strides = [1, 1, 1]} : vector<16x18x128xbf16> to vector<16x16x128xbf16>
    %83 = vector.extract_strided_slice %80 {offsets = [0, 2, 0], sizes = [16, 16, 128], strides = [1, 1, 1]} : vector<16x18x128xbf16> to vector<16x16x128xbf16>
    %84 = tpu.concatenate %81, %82, %83 in 2 : vector<16x16x128xbf16>, vector<16x16x128xbf16>, vector<16x16x128xbf16> -> vector<16x16x384xbf16>
    %85 = vector.shape_cast %84 : vector<16x16x384xbf16> to vector<256x384xbf16>
    %c2_40 = arith.constant 2 : index
    %c0_41 = arith.constant 0 : index
    %c0_42 = arith.constant 0 : index
    %86 = vector.load %arg6[%c2_40, %c0_41, %c0_42] : memref<3x384x128xbf16, #tpu.memory_space<vmem>>, vector<1x384x128xbf16>
    %87 = vector.shape_cast %86 : vector<1x384x128xbf16> to vector<384x128xbf16>
    %cst_43 = arith.constant dense<0.000000e+00> : vector<256x128xf32>
    %88 = tpu.matmul %85, %87, %cst_43 {dimension_numbers = #tpu.dot_dimension_numbers<[1], [0], [0], [1], [0, 0, 1, 1], [], []>} : vector<256x384xbf16>, vector<384x128xbf16>, vector<256x128xf32> -> vector<256x128xf32>
    %89 = arith.addf %79, %88 : vector<256x128xf32>
    %c0_44 = arith.constant 0 : index
    %c0_45 = arith.constant 0 : index
    %90 = vector.load %arg7[%c0_44, %c0_45] : memref<1x128xf32, #tpu.memory_space<vmem>>, vector<1x128xf32>
    %91 = vector.broadcast %90 : vector<1x128xf32> to vector<256x128xf32>
    %92 = arith.addf %89, %91 : vector<256x128xf32>
    %cst_46 = arith.constant 1.000000e-01 : f32
    %93 = vector.broadcast %cst_46 : f32 to vector<256x128xf32>
    %94 = arith.mulf %92, %93 : vector<256x128xf32>
    %95 = vector.extract_strided_slice %4 {offsets = [2, 1, 0], sizes = [16, 16, 128], strides = [1, 1, 1]} : vector<20x18x128xbf16> to vector<16x16x128xbf16>
    %96 = arith.extf %95 : vector<16x16x128xbf16> to vector<16x16x128xf32>
    %97 = vector.shape_cast %96 : vector<16x16x128xf32> to vector<256x128xf32>
    %98 = arith.addf %94, %97 : vector<256x128xf32>
    %99 = vector.shape_cast %98 : vector<256x128xf32> to vector<16x16x128xf32>
    %c0_47 = arith.constant 0 : index
    %c0_48 = arith.constant 0 : index
    %c0_49 = arith.constant 0 : index
    %c0_50 = arith.constant 0 : index
    %100 = vector.load %arg8[%c0_47, %c0_48, %c0_49, %c0_50] : memref<1x16x16x128xf32, #tpu.memory_space<vmem>>, vector<1x16x16x128xf32>
    %101 = vector.shape_cast %100 : vector<1x16x16x128xf32> to vector<16x16x128xf32>
    %102 = vector.shape_cast %99 : vector<16x16x128xf32> to vector<1x16x16x128xf32>
    tpu.vector_store %arg8[%c0_47, %c0_48, %c0_49, %c0_50], %102 {strides = array<i32>} : memref<1x16x16x128xf32, #tpu.memory_space<vmem>>, vector<1x16x16x128xf32>,
    return
  }
  func.func @transform_0(%arg0: i32, %arg1: i32) -> (i32, i32, i32, i32) {
    %c0_i32 = arith.constant 0 : i32
    %c0_i32_0 = arith.constant 0 : i32
    %c0_i32_1 = arith.constant 0 : i32
    %c0_i32_2 = arith.constant 0 : i32
    return %arg0, %c0_i32, %c0_i32_0, %c0_i32_1 : i32, i32, i32, i32
  }
  func.func @transform_1(%arg0: i32, %arg1: i32) -> (i32, i32, i32) {
    %c0_i32 = arith.constant 0 : i32
    %c0_i32_0 = arith.constant 0 : i32
    %c0_i32_1 = arith.constant 0 : i32
    %c0_i32_2 = arith.constant 0 : i32
    return %c0_i32, %c0_i32_0, %c0_i32_1 : i32, i32, i32
  }
  func.func @transform_2(%arg0: i32, %arg1: i32) -> (i32, i32) {
    %c0_i32 = arith.constant 0 : i32
    %c0_i32_0 = arith.constant 0 : i32
    %c0_i32_1 = arith.constant 0 : i32
    return %c0_i32, %c0_i32_0 : i32, i32
  }
  func.func @transform_3(%arg0: i32, %arg1: i32) -> (i32, i32) {
    %c0_i32 = arith.constant 0 : i32
    %c0_i32_0 = arith.constant 0 : i32
    %c0_i32_1 = arith.constant 0 : i32
    return %c0_i32, %c0_i32_0 : i32, i32
  }
  func.func @transform_4(%arg0: i32, %arg1: i32) -> (i32, i32, i32) {
    %c0_i32 = arith.constant 0 : i32
    %c0_i32_0 = arith.constant 0 : i32
    %c0_i32_1 = arith.constant 0 : i32
    %c0_i32_2 = arith.constant 0 : i32
    return %c0_i32, %c0_i32_0, %c0_i32_1 : i32, i32, i32
  }
  func.func @transform_5(%arg0: i32, %arg1: i32) -> (i32, i32) {
    %c0_i32 = arith.constant 0 : i32
    %c0_i32_0 = arith.constant 0 : i32
    %c0_i32_1 = arith.constant 0 : i32
    return %c0_i32, %c0_i32_0 : i32, i32
  }
  func.func @transform_6(%arg0: i32, %arg1: i32) -> (i32, i32, i32, i32) {
    %c0_i32 = arith.constant 0 : i32
    %c0_i32_0 = arith.constant 0 : i32
    %c0_i32_1 = arith.constant 0 : i32
    return %arg0, %arg1, %c0_i32, %c0_i32_0 : i32, i32, i32, i32
  }
}

</mosaic_0001>

<llo_original>
// kernel: residual_block_forward.1
$region0: #{residual_block_forward.1}
  #allocation0 [shape = 'u32[]', space=smem, size = 0x4, offset = 0x4, fixed_abs, tag = 'smem constant byte address 0x4 - core index']
  #allocation1 [shape = 'u32[144,128]{1,0:T(1,128)}', space=vmem, size = 0x12000, scoped, tag = 'internal scratch']
  #allocation2 [shape = 'bf16[18,18,128]{2,1,0:T(8,128)(2,1)}', space=vmem, size = 0x1b000, scoped, tag = 'scratch operand']
  %s0 = inlined_call_operand.vmem [shape: bf16[2,20,18,128], index: 0, kind: input, shape index: {}]
  %s1 = inlined_call_operand.vmem [shape: bf16[3,384,128], index: 1, kind: input, shape index: {}]
  %s2 = inlined_call_operand.vmem [shape: f32[1,128], index: 2, kind: input, shape index: {}]
  %s3 = inlined_call_operand.vmem [shape: f32[1,128], index: 3, kind: input, shape index: {}]
  %s4 = inlined_call_operand.vmem [shape: bf16[3,384,128], index: 4, kind: input, shape index: {}]
  %s5 = inlined_call_operand.vmem [shape: f32[1,128], index: 5, kind: input, shape index: {}]
  %s6 = inlined_call_operand.vmem [shape: f32[2,16,16,128], index: 6, kind: output, shape index: {}]
  %s7 = sld [smem:[#allocation0]]
  $region61: #{residual_block_forward.1} parent=0
    _
  %s9 = ssub.s32 1, %s7
  %s10 = scalar_select 0, %s9, %s7
  loop: start=0, step=1, limit=4
  $region2: #{residual_block_forward.1} parent=0 // loop_pre_header
    _
  $region3: #{residual_block_forward.1} parent=0 // loop_header
    %s12 = sphi 0, %s16
    %p13 = scmp.ge.s32.totalorder %s12, 4
    %s19 = sphi 0, %s31
    %s20 = sphi 0, %s27
    %s21 = sphi 0, %s19
    %s22 = sphi 0, %s20
    %s23 = sphi 0, %s21
    %s24 = sphi 0, %s22
    %s34 = sphi 0, %s36
    %s37 = sphi 0, %s34
    %s38 = sphi 0, %s37
    %s54 = sphi 0, %s38
    %s58 = sphi 0, %s58
    %s60 = sphi 0, %s58
    %s61 = sphi 0, %s60
    %s75 = sphi 0, %s61
    %s79 = sphi 0, %s79
    %s81 = sphi 0, %s79
    %s82 = sphi 0, %s81
    %s96 = sphi 0, %s82
    %s100 = sphi 0, %s100
    %s102 = sphi 0, %s100
    %s103 = sphi 0, %s102
    %s117 = sphi 0, %s103
    %s121 = sphi 0, %s121
    %s123 = sphi 0, %s121
    %s124 = sphi 0, %s123
    %s138 = sphi 0, %s124
    %s142 = sphi 0, %s142
    %s144 = sphi 0, %s142
    %s145 = sphi 0, %s144
    %s159 = sphi 0, %s145
    %s167 = sphi 0, %s169
    %s170 = sphi 0, %s167
    %s171 = sphi 0, %s170
    %s187 = sphi 0, %s171
  $region4: #{residual_block_forward.1} parent=0 // loop_header_branch
    %15 = sbr.rel (%p13) target = $region8
  $region5: #{residual_block_forward.1} parent=0 // loop_body
    %s17 = ssub.s32 %s12, 1
    %s18 = ssub.s32 %s12, 2
    %s25 = sadd.s32 1, %s20
    %p26 = scmp.ge.s32.totalorder %s25, 1
    %s27 = scalar_select %p26, 0, %s25
    %s28 = sadd.s32 1, %s19
    %s29 = scalar_select %p26, %s28, %s19
    %p30 = scmp.ge.s32.totalorder %s29, 2
    %s31 = scalar_select %p30, 0, %s29
    %s32 = ssub.s32 %s19, %s31
    %p33 = scmp.eq.s32.totalorder %s32, 0
    %s35 = sadd.s32 %s34, 1
    %s36 = scalar_select %p33, %s34, %s35
    %p39 = pneg %p33
    %p40 = scmp.eq.s32.totalorder %s12, 1
    %p41 = por %p39, %p40
    %p42 = scmp.ne.s32.totalorder %s34, %s37
    %p43 = scmp.eq.s32.totalorder %s12, 0
    %p44 = por %p42, %p43
    %p45 = scmp.ne.s32.totalorder %s34, %s37
    %p46 = scmp.eq.s32.totalorder %s17, 1
    %p47 = por %p45, %p46
    %p48 = scmp.ne.s32.totalorder %s37, %s38
    %p49 = scmp.eq.s32.totalorder %s17, 0
    %p50 = por %p48, %p49
    %p51 = scmp.ne.s32.totalorder %s37, %s38
    %p52 = scmp.eq.s32.totalorder %s18, 1
    %p53 = por %p51, %p52
    %p55 = scmp.ne.s32.totalorder %s38, %s54
    %p56 = scmp.eq.s32.totalorder %s18, 0
    %p57 = por %p55, %p56
    %s59 = sadd.s32 %s58, 1
    %p62 = scmp.eq.s32.totalorder %s12, 1
    %p63 = scmp.ne.s32.totalorder %s58, %s60
    %p64 = scmp.eq.s32.totalorder %s12, 0
    %p65 = por %p63, %p64
    %p66 = scmp.ne.s32.totalorder %s58, %s60
    %p67 = scmp.eq.s32.totalorder %s17, 1
    %p68 = por %p66, %p67
    %p69 = scmp.ne.s32.totalorder %s60, %s61
    %p70 = scmp.eq.s32.totalorder %s17, 0
    %p71 = por %p69, %p70
    %p72 = scmp.ne.s32.totalorder %s60, %s61
    %p73 = scmp.eq.s32.totalorder %s18, 1
    %p74 = por %p72, %p73
    %p76 = scmp.ne.s32.totalorder %s61, %s75
    %p77 = scmp.eq.s32.totalorder %s18, 0
    %p78 = por %p76, %p77
    %s80 = sadd.s32 %s79, 1
    %p83 = scmp.eq.s32.totalorder %s12, 1
    %p84 = scmp.ne.s32.totalorder %s79, %s81
    %p85 = scmp.eq.s32.totalorder %s12, 0
    %p86 = por %p84, %p85
    %p87 = scmp.ne.s32.totalorder %s79, %s81
    %p88 = scmp.eq.s32.totalorder %s17, 1
    %p89 = por %p87, %p88
    %p90 = scmp.ne.s32.totalorder %s81, %s82
    %p91 = scmp.eq.s32.totalorder %s17, 0
    %p92 = por %p90, %p91
    %p93 = scmp.ne.s32.totalorder %s81, %s82
    %p94 = scmp.eq.s32.totalorder %s18, 1
    %p95 = por %p93, %p94
    %p97 = scmp.ne.s32.totalorder %s82, %s96
    %p98 = scmp.eq.s32.totalorder %s18, 0
    %p99 = por %p97, %p98
    %s101 = sadd.s32 %s100, 1
    %p104 = scmp.eq.s32.totalorder %s12, 1
    %p105 = scmp.ne.s32.totalorder %s100, %s102
    %p106 = scmp.eq.s32.totalorder %s12, 0
    %p107 = por %p105, %p106
    %p108 = scmp.ne.s32.totalorder %s100, %s102
    %p109 = scmp.eq.s32.totalorder %s17, 1
    %p110 = por %p108, %p109
    %p111 = scmp.ne.s32.totalorder %s102, %s103
    %p112 = scmp.eq.s32.totalorder %s17, 0
    %p113 = por %p111, %p112
    %p114 = scmp.ne.s32.totalorder %s102, %s103
    %p115 = scmp.eq.s32.totalorder %s18, 1
    %p116 = por %p114, %p115
    %p118 = scmp.ne.s32.totalorder %s103, %s117
    %p119 = scmp.eq.s32.totalorder %s18, 0
    %p120 = por %p118, %p119
    %s122 = sadd.s32 %s121, 1
    %p125 = scmp.eq.s32.totalorder %s12, 1
    %p126 = scmp.ne.s32.totalorder %s121, %s123
    %p127 = scmp.eq.s32.totalorder %s12, 0
    %p128 = por %p126, %p127
    %p129 = scmp.ne.s32.totalorder %s121, %s123
    %p130 = scmp.eq.s32.totalorder %s17, 1
    %p131 = por %p129, %p130
    %p132 = scmp.ne.s32.totalorder %s123, %s124
    %p133 = scmp.eq.s32.totalorder %s17, 0
    %p134 = por %p132, %p133
    %p135 = scmp.ne.s32.totalorder %s123, %s124
    %p136 = scmp.eq.s32.totalorder %s18, 1
    %p137 = por %p135, %p136
    %p139 = scmp.ne.s32.totalorder %s124, %s138
    %p140 = scmp.eq.s32.totalorder %s18, 0
    %p141 = por %p139, %p140
    %s143 = sadd.s32 %s142, 1
    %p146 = scmp.eq.s32.totalorder %s12, 1
    %p147 = scmp.ne.s32.totalorder %s142, %s144
    %p148 = scmp.eq.s32.totalorder %s12, 0
    %p149 = por %p147, %p148
    %p150 = scmp.ne.s32.totalorder %s142, %s144
    %p151 = scmp.eq.s32.totalorder %s17, 1
    %p152 = por %p150, %p151
    %p153 = scmp.ne.s32.totalorder %s144, %s145
    %p154 = scmp.eq.s32.totalorder %s17, 0
    %p155 = por %p153, %p154
    %p156 = scmp.ne.s32.totalorder %s144, %s145
    %p157 = scmp.eq.s32.totalorder %s18, 1
    %p158 = por %p156, %p157
    %p160 = scmp.ne.s32.totalorder %s145, %s159
    %p161 = scmp.eq.s32.totalorder %s18, 0
    %p162 = por %p160, %p161
    %s163 = ssub.s32 %s19, %s31
    %s164 = ssub.s32 %s20, %s27
    %s165 = sor.u32 %s163, %s164
    %p166 = scmp.eq.s32.totalorder %s165, 0
    %s168 = sadd.s32 %s167, 1
    %s169 = scalar_select %p166, %s167, %s168
    %p172 = pneg %p166
    %p173 = scmp.eq.s32.totalorder %s12, 1
    %p174 = por %p172, %p173
    %p175 = scmp.ne.s32.totalorder %s167, %s170
    %p176 = scmp.eq.s32.totalorder %s12, 0
    %p177 = por %p175, %p176
    %p178 = scmp.ne.s32.totalorder %s167, %s170
    %p179 = scmp.eq.s32.totalorder %s17, 1
    %p180 = por %p178, %p179
    %p181 = scmp.ne.s32.totalorder %s170, %s171
    %p182 = scmp.eq.s32.totalorder %s17, 0
    %p183 = por %p181, %p182
    %p184 = scmp.ne.s32.totalorder %s170, %s171
    %p185 = scmp.eq.s32.totalorder %s18, 1
    %p186 = por %p184, %p185
    %p188 = scmp.ne.s32.totalorder %s171, %s187
    %p189 = scmp.eq.s32.totalorder %s18, 0
    %p190 = por %p188, %p189
    %p191 = scmp.le.s32.totalorder 1, %s12
    %p192 = scmp.lt.s32.totalorder %s12, 3
    %p193 = pnand %p191, %p192
    %p194 = pneg %p193
    // Predicated region
    $region9: #{residual_block_forward.1} parent=5 // pred_check
      _
    $region10: #{residual_block_forward.1} parent=5 // pred_check_branch
      %196 = sbr.rel (%p193) target = $region12
    $region11: #{residual_block_forward.1} parent=5 // pred_region
      %s197 = ssub.s32 %s12, 1
      // Predicated region
      $region13: #{residual_block_forward.1} parent=11 // pred_check
        %p198 = pneg %p71
      $region14: #{residual_block_forward.1} parent=11 // pred_check_branch
        %200 = sbr.rel (%p198) target = $region16
      $region15: #{residual_block_forward.1} parent=11 // pred_region
        _
      $region16: #{residual_block_forward.1} parent=11 // pred_fallthru
        _
      // Predicated region
      $region17: #{residual_block_forward.1} parent=11 // pred_check
        %p201 = pneg %p92
      $region18: #{residual_block_forward.1} parent=11 // pred_check_branch
        %203 = sbr.rel (%p201) target = $region20
      $region19: #{residual_block_forward.1} parent=11 // pred_region
        _
      $region20: #{residual_block_forward.1} parent=11 // pred_fallthru
        _
      // Predicated region
      $region21: #{residual_block_forward.1} parent=11 // pred_check
        %p204 = pneg %p113
      $region22: #{residual_block_forward.1} parent=11 // pred_check_branch
        %206 = sbr.rel (%p204) target = $region24
      $region23: #{residual_block_forward.1} parent=11 // pred_region
        _
      $region24: #{residual_block_forward.1} parent=11 // pred_fallthru
        _
      // Predicated region
      $region25: #{residual_block_forward.1} parent=11 // pred_check
        %p207 = pneg %p134
      $region26: #{residual_block_forward.1} parent=11 // pred_check_branch
        %209 = sbr.rel (%p207) target = $region28
      $region27: #{residual_block_forward.1} parent=11 // pred_region
        _
      $region28: #{residual_block_forward.1} parent=11 // pred_fallthru
        _
      // Predicated region
      $region29: #{residual_block_forward.1} parent=11 // pred_check
        %p210 = pneg %p155
      $region30: #{residual_block_forward.1} parent=11 // pred_check_branch
        %212 = sbr.rel (%p210) target = $region32
      $region31: #{residual_block_forward.1} parent=11 // pred_region
        _
      $region32: #{residual_block_forward.1} parent=11 // pred_fallthru
        _
    $region12: #{residual_block_forward.1} parent=5 // pred_fallthru
      _
    %p213 = scmp.lt.s32.totalorder %s12, 2
    // Predicated region
    $region33: #{residual_block_forward.1} parent=5 // pred_check
      %p214 = pneg %p213
    $region34: #{residual_block_forward.1} parent=5 // pred_check_branch
      %216 = sbr.rel (%p214) target = $region36
    $region35: #{residual_block_forward.1} parent=5 // pred_region
      // Predicated region
      $region37: #{residual_block_forward.1} parent=35 // pred_check
        %p217 = pneg %p44
      $region38: #{residual_block_forward.1} parent=35 // pred_check_branch
        %219 = sbr.rel (%p217) target = $region40
      $region39: #{residual_block_forward.1} parent=35 // pred_region
        %p220 = scmp.lt.s32.totalorder %s19, 1
        %s221 = scalar_select %p220, %s19, 1
        %s222 = smul.addr %s221, 60
        %s223 = smul.addr %s222, 4
        %s224 = scalar_lea.vmem %s0, %s223
      $region40: #{residual_block_forward.1} parent=35 // pred_fallthru
        _
    $region36: #{residual_block_forward.1} parent=5 // pred_fallthru
      _
    %p225 = scmp.le.s32.totalorder 1, %s12
    %p226 = scmp.lt.s32.totalorder %s12, 3
    %p227 = pnand %p225, %p226
    %p228 = pneg %p227
    // Predicated region
    $region41: #{residual_block_forward.1} parent=5 // pred_check
      _
    $region42: #{residual_block_forward.1} parent=5 // pred_check_branch
      %230 = sbr.rel (%p227) target = $region44
    $region43: #{residual_block_forward.1} parent=5 // pred_region
      %s231 = ssub.s32 %s12, 1
      %p232 = scmp.lt.s32.totalorder %s21, 1
      %s233 = scalar_select %p232, %s21, 1
      %s234 = smul.addr %s233, 60
      %s235 = smul.addr %s234, 4
      %s236 = scalar_lea.vmem %s0, %s235
      %p237 = pneg %p50
      %p238 = pneg %p47
      %p239 = pneg %p71
      %p240 = pneg %p68
      %p241 = pneg %p92
      %p242 = pneg %p89
      %p243 = pneg %p113
      %p244 = pneg %p110
      %p245 = pneg %p134
      %p246 = pneg %p131
      %p247 = pneg %p155
      %p248 = pneg %p152
      %p249 = pneg %p183
      %p250 = pneg %p180
      %s251 = smul.u32 16, %s22
      %p252 = scmp.lt.s32.totalorder %s21, 1
      %s253 = scalar_select %p252, %s21, 1
      %p254 = scmp.lt.s32.totalorder %s251, 15
      %s255 = scalar_select %p254, %s251, 15
      %s256 = smul.addr %s255, 2
      %s257 = smul.addr %s253, 32
      %s258 = sadd.s32 %s256, %s257
      %s259 = smul.addr %s258, 8
      %s260 = scalar_lea.vmem %s6, %s259
      %p261 = scmp.lt.s32.totalorder %s21, 1
      %s262 = scalar_select %p261, %s21, 1
      %s263 = smul.addr %s262, 60
      %s264 = smul.addr %s263, 4
      %s265 = scalar_lea.vmem %s0, %s264
      %s266 = smul.u32 16, %s22
      %p267 = scmp.lt.s32.totalorder %s21, 1
      %s268 = scalar_select %p267, %s21, 1
      %p269 = scmp.lt.s32.totalorder %s266, 15
      %s270 = scalar_select %p269, %s266, 15
      %s271 = smul.addr %s270, 2
      %s272 = smul.addr %s268, 32
      %s273 = sadd.s32 %s271, %s272
      %s274 = smul.addr %s273, 8
      %s275 = scalar_lea.vmem %s6, %s274
      %s276 = smul.u32 16, %s22
      %s278 = smul.u32 %s22, 16
      %s279 = smul.u32 %s278, 3
      %s280 = smul.addr %s279, 4
      %s281 = scalar_lea.vmem %s265, %s280
      %v282 = vld [vmem:[%s281] sm:$0xf]
      %v283 = vld [vmem:[%s281 + $0x4] sm:$0xf]
      %v284 = vld [vmem:[%s281 + $0x8] sm:$0x1]
      %v285 = vld [vmem:[%s281 + $0xc] sm:$0xf]
      %v286 = vld [vmem:[%s281 + $0x10] sm:$0xf]
      %v287 = vld [vmem:[%s281 + $0x14] sm:$0x1]
      %v288 = vld [vmem:[%s281 + $0x18] sm:$0xf]
      %v289 = vld [vmem:[%s281 + $0x1c] sm:$0xf]
      %v290 = vld [vmem:[%s281 + $0x20] sm:$0x1]
      %v291 = vld [vmem:[%s281 + $0x24] sm:$0xf]
      %v292 = vld [vmem:[%s281 + $0x28] sm:$0xf]
      %v293 = vld [vmem:[%s281 + $0x2c] sm:$0x1]
      %v294 = vld [vmem:[%s281 + $0x30] sm:$0xf]
      %v295 = vld [vmem:[%s281 + $0x34] sm:$0xf]
      %v296 = vld [vmem:[%s281 + $0x38] sm:$0x1]
      %v297 = vld [vmem:[%s281 + $0x3c] sm:$0xf]
      %v298 = vld [vmem:[%s281 + $0x40] sm:$0xf]
      %v299 = vld [vmem:[%s281 + $0x44] sm:$0x1]
      %v300 = vld [vmem:[%s281 + $0x48] sm:$0xf]
      %v301 = vld [vmem:[%s281 + $0x4c] sm:$0xf]
      %v302 = vld [vmem:[%s281 + $0x50] sm:$0x1]
      %v303 = vld [vmem:[%s281 + $0x54] sm:$0xf]
      %v304 = vld [vmem:[%s281 + $0x58] sm:$0xf]
      %v305 = vld [vmem:[%s281 + $0x5c] sm:$0x1]
      %v306 = vld [vmem:[%s281 + $0x60] sm:$0xf]
      %v307 = vld [vmem:[%s281 + $0x64] sm:$0xf]
      %v308 = vld [vmem:[%s281 + $0x68] sm:$0x1]
      %v309 = vld [vmem:[%s281 + $0x6c] sm:$0xf]
      %v310 = vld [vmem:[%s281 + $0x70] sm:$0xf]
      %v311 = vld [vmem:[%s281 + $0x74] sm:$0x1]
      %v312 = vld [vmem:[%s281 + $0x78] sm:$0xf]
      %v313 = vld [vmem:[%s281 + $0x7c] sm:$0xf]
      %v314 = vld [vmem:[%s281 + $0x80] sm:$0x1]
      %v315 = vld [vmem:[%s281 + $0x84] sm:$0xf]
      %v316 = vld [vmem:[%s281 + $0x88] sm:$0xf]
      %v317 = vld [vmem:[%s281 + $0x8c] sm:$0x1]
      %v318 = vld [vmem:[%s281 + $0x90] sm:$0xf]
      %v319 = vld [vmem:[%s281 + $0x94] sm:$0xf]
      %v320 = vld [vmem:[%s281 + $0x98] sm:$0x1]
      %v321 = vld [vmem:[%s281 + $0x9c] sm:$0xf]
      %v322 = vld [vmem:[%s281 + $0xa0] sm:$0xf]
      %v323 = vld [vmem:[%s281 + $0xa4] sm:$0x1]
      %v324 = vld [vmem:[%s281 + $0xa8] sm:$0xf]
      %v325 = vld [vmem:[%s281 + $0xac] sm:$0xf]
      %v326 = vld [vmem:[%s281 + $0xb0] sm:$0x1]
      %v327 = vld [vmem:[%s281 + $0xb4] sm:$0xf]
      %v328 = vld [vmem:[%s281 + $0xb8] sm:$0xf]
      %v329 = vld [vmem:[%s281 + $0xbc] sm:$0x1]
      %v330 = vld [vmem:[%s281 + $0xc0] sm:$0xf]
      %v331 = vld [vmem:[%s281 + $0xc4] sm:$0xf]
      %v332 = vld [vmem:[%s281 + $0xc8] sm:$0x1]
      %v333 = vld [vmem:[%s281 + $0xcc] sm:$0xf]
      %v334 = vld [vmem:[%s281 + $0xd0] sm:$0xf]
      %v335 = vld [vmem:[%s281 + $0xd4] sm:$0x1]
      %v336 = vld [vmem:[%s281 + $0xd8] sm:$0xf]
      %v337 = vld [vmem:[%s281 + $0xdc] sm:$0xf]
      %v338 = vld [vmem:[%s281 + $0xe0] sm:$0x1]
      %v339 = vld [vmem:[%s281 + $0xe4] sm:$0xf]
      %v340 = vld [vmem:[%s281 + $0xe8] sm:$0xf]
      %v341 = vld [vmem:[%s281 + $0xec] sm:$0x1]
      %v378 = vunpack.c.l.b16 %v282
      %v379 = vunpack.c.l.b16 %v283
      %v380 = vunpack.c.l.b16 %v285
      %v381 = vunpack.c.l.b16 %v286
      %v382 = vunpack.c.l.b16 %v288
      %v383 = vunpack.c.l.b16 %v289
      %v384 = vunpack.c.l.b16 %v291
      %v385 = vunpack.c.l.b16 %v292
      %v386 = vunpack.c.l.b16 %v294
      %v387 = vunpack.c.l.b16 %v295
      %v388 = vunpack.c.l.b16 %v297
      %v389 = vunpack.c.l.b16 %v298
      %v390 = vunpack.c.l.b16 %v300
      %v391 = vunpack.c.l.b16 %v301
      %v392 = vunpack.c.l.b16 %v303
      %v393 = vunpack.c.l.b16 %v304
      %v394 = vunpack.c.l.b16 %v306
      %v395 = vunpack.c.l.b16 %v307
      %v396 = vunpack.c.l.b16 %v309
      %v397 = vunpack.c.l.b16 %v310
      %v398 = vunpack.c.l.b16 %v312
      %v399 = vunpack.c.l.b16 %v313
      %v400 = vunpack.c.l.b16 %v315
      %v401 = vunpack.c.l.b16 %v316
      %v402 = vunpack.c.l.b16 %v318
      %v403 = vunpack.c.l.b16 %v319
      %v404 = vunpack.c.l.b16 %v321
      %v405 = vunpack.c.l.b16 %v322
      %v406 = vunpack.c.l.b16 %v324
      %v407 = vunpack.c.l.b16 %v325
      %v408 = vunpack.c.l.b16 %v327
      %v409 = vunpack.c.l.b16 %v328
      %v410 = vunpack.c.l.b16 %v330
      %v411 = vunpack.c.l.b16 %v331
      %v412 = vunpack.c.l.b16 %v333
      %v413 = vunpack.c.l.b16 %v334
      %v414 = vpack.c.b16 %v379, %v378
      %v415 = vpack.c.b16 %v381, %v380
      %v416 = vpack.c.b16 %v383, %v382
      %v417 = vpack.c.b16 %v385, %v384
      %v418 = vpack.c.b16 %v387, %v386
      %v419 = vpack.c.b16 %v389, %v388
      %v420 = vpack.c.b16 %v391, %v390
      %v421 = vpack.c.b16 %v393, %v392
      %v422 = vpack.c.b16 %v395, %v394
      %v423 = vpack.c.b16 %v397, %v396
      %v424 = vpack.c.b16 %v399, %v398
      %v425 = vpack.c.b16 %v401, %v400
      %v426 = vpack.c.b16 %v403, %v402
      %v427 = vpack.c.b16 %v405, %v404
      %v428 = vpack.c.b16 %v407, %v406
      %v429 = vpack.c.b16 %v409, %v408
      %v430 = vpack.c.b16 %v411, %v410
      %v431 = vpack.c.b16 %v413, %v412
      %v468 = vunpack.c.l.b16 %v284
      %v469 = vunpack.c.l.b16 %v287
      %v470 = vunpack.c.l.b16 %v290
      %v471 = vunpack.c.l.b16 %v293
      %v472 = vunpack.c.l.b16 %v296
      %v473 = vunpack.c.l.b16 %v299
      %v474 = vunpack.c.l.b16 %v302
      %v475 = vunpack.c.l.b16 %v305
      %v476 = vunpack.c.l.b16 %v308
      %v477 = vunpack.c.l.b16 %v311
      %v478 = vunpack.c.l.b16 %v314
      %v479 = vunpack.c.l.b16 %v317
      %v480 = vunpack.c.l.b16 %v320
      %v481 = vunpack.c.l.b16 %v323
      %v482 = vunpack.c.l.b16 %v326
      %v483 = vunpack.c.l.b16 %v329
      %v484 = vunpack.c.l.b16 %v332
      %v485 = vunpack.c.l.b16 %v335
      %v486 = vpack.c.b16 %v468, %v468
      %v487 = vpack.c.b16 %v469, %v469
      %v488 = vpack.c.b16 %v470, %v470
      %v489 = vpack.c.b16 %v471, %v471
      %v490 = vpack.c.b16 %v472, %v472
      %v491 = vpack.c.b16 %v473, %v473
      %v492 = vpack.c.b16 %v474, %v474
      %v493 = vpack.c.b16 %v475, %v475
      %v494 = vpack.c.b16 %v476, %v476
      %v495 = vpack.c.b16 %v477, %v477
      %v496 = vpack.c.b16 %v478, %v478
      %v497 = vpack.c.b16 %v479, %v479
      %v498 = vpack.c.b16 %v480, %v480
      %v499 = vpack.c.b16 %v481, %v481
      %v500 = vpack.c.b16 %v482, %v482
      %v501 = vpack.c.b16 %v483, %v483
      %v502 = vpack.c.b16 %v484, %v484
      %v503 = vpack.c.b16 %v485, %v485
      %vm504 = vsmask.f32 7424
      %v506 = vshrl.u32 %v414, 16
      %v508 = vshll.u32 %v414, 16
      %v510 = vrot.slane %v508, 1
      %v511 = vor.u32 %v506, %v510
      %v513 = vshll.u32 %v486, 16
      %v515 = vrot.slane %v513, 1
      %v516 = vsel %vm504, %v511, %v515
      %v518 = vshrl.u32 %v415, 16
      %v520 = vshll.u32 %v415, 16
      %v522 = vrot.slane %v520, 1
      %v523 = vor.u32 %v518, %v522
      %v525 = vshll.u32 %v487, 16
      %v527 = vrot.slane %v525, 1
      %v528 = vsel %vm504, %v523, %v527
      %v530 = vshrl.u32 %v416, 16
      %v532 = vshll.u32 %v416, 16
      %v534 = vrot.slane %v532, 1
      %v535 = vor.u32 %v530, %v534
      %v537 = vshll.u32 %v488, 16
      %v539 = vrot.slane %v537, 1
      %v540 = vsel %vm504, %v535, %v539
      %v542 = vshrl.u32 %v417, 16
      %v544 = vshll.u32 %v417, 16
      %v546 = vrot.slane %v544, 1
      %v547 = vor.u32 %v542, %v546
      %v549 = vshll.u32 %v489, 16
      %v551 = vrot.slane %v549, 1
      %v552 = vsel %vm504, %v547, %v551
      %v554 = vshrl.u32 %v418, 16
      %v556 = vshll.u32 %v418, 16
      %v558 = vrot.slane %v556, 1
      %v559 = vor.u32 %v554, %v558
      %v561 = vshll.u32 %v490, 16
      %v563 = vrot.slane %v561, 1
      %v564 = vsel %vm504, %v559, %v563
      %v566 = vshrl.u32 %v419, 16
      %v568 = vshll.u32 %v419, 16
      %v570 = vrot.slane %v568, 1
      %v571 = vor.u32 %v566, %v570
      %v573 = vshll.u32 %v491, 16
      %v575 = vrot.slane %v573, 1
      %v576 = vsel %vm504, %v571, %v575
      %v578 = vshrl.u32 %v420, 16
      %v580 = vshll.u32 %v420, 16
      %v582 = vrot.slane %v580, 1
      %v583 = vor.u32 %v578, %v582
      %v585 = vshll.u32 %v492, 16
      %v587 = vrot.slane %v585, 1
      %v588 = vsel %vm504, %v583, %v587
      %v590 = vshrl.u32 %v421, 16
      %v592 = vshll.u32 %v421, 16
      %v594 = vrot.slane %v592, 1
      %v595 = vor.u32 %v590, %v594
      %v597 = vshll.u32 %v493, 16
      %v599 = vrot.slane %v597, 1
      %v600 = vsel %vm504, %v595, %v599
      %v602 = vshrl.u32 %v422, 16
      %v604 = vshll.u32 %v422, 16
      %v606 = vrot.slane %v604, 1
      %v607 = vor.u32 %v602, %v606
      %v609 = vshll.u32 %v494, 16
      %v611 = vrot.slane %v609, 1
      %v612 = vsel %vm504, %v607, %v611
      %v614 = vshrl.u32 %v423, 16
      %v616 = vshll.u32 %v423, 16
      %v618 = vrot.slane %v616, 1
      %v619 = vor.u32 %v614, %v618
      %v621 = vshll.u32 %v495, 16
      %v623 = vrot.slane %v621, 1
      %v624 = vsel %vm504, %v619, %v623
      %v626 = vshrl.u32 %v424, 16
      %v628 = vshll.u32 %v424, 16
      %v630 = vrot.slane %v628, 1
      %v631 = vor.u32 %v626, %v630
      %v633 = vshll.u32 %v496, 16
      %v635 = vrot.slane %v633, 1
      %v636 = vsel %vm504, %v631, %v635
      %v638 = vshrl.u32 %v425, 16
      %v640 = vshll.u32 %v425, 16
      %v642 = vrot.slane %v640, 1
      %v643 = vor.u32 %v638, %v642
      %v645 = vshll.u32 %v497, 16
      %v647 = vrot.slane %v645, 1
      %v648 = vsel %vm504, %v643, %v647
      %v650 = vshrl.u32 %v426, 16
      %v652 = vshll.u32 %v426, 16
      %v654 = vrot.slane %v652, 1
      %v655 = vor.u32 %v650, %v654
      %v657 = vshll.u32 %v498, 16
      %v659 = vrot.slane %v657, 1
      %v660 = vsel %vm504, %v655, %v659
      %v662 = vshrl.u32 %v427, 16
      %v664 = vshll.u32 %v427, 16
      %v666 = vrot.slane %v664, 1
      %v667 = vor.u32 %v662, %v666
      %v669 = vshll.u32 %v499, 16
      %v671 = vrot.slane %v669, 1
      %v672 = vsel %vm504, %v667, %v671
      %v674 = vshrl.u32 %v428, 16
      %v676 = vshll.u32 %v428, 16
      %v678 = vrot.slane %v676, 1
      %v679 = vor.u32 %v674, %v678
      %v681 = vshll.u32 %v500, 16
      %v683 = vrot.slane %v681, 1
      %v684 = vsel %vm504, %v679, %v683
      %v686 = vshrl.u32 %v429, 16
      %v688 = vshll.u32 %v429, 16
      %v690 = vrot.slane %v688, 1
      %v691 = vor.u32 %v686, %v690
      %v693 = vshll.u32 %v501, 16
      %v695 = vrot.slane %v693, 1
      %v696 = vsel %vm504, %v691, %v695
      %v698 = vshrl.u32 %v430, 16
      %v700 = vshll.u32 %v430, 16
      %v702 = vrot.slane %v700, 1
      %v703 = vor.u32 %v698, %v702
      %v705 = vshll.u32 %v502, 16
      %v707 = vrot.slane %v705, 1
      %v708 = vsel %vm504, %v703, %v707
      %v710 = vshrl.u32 %v431, 16
      %v712 = vshll.u32 %v431, 16
      %v714 = vrot.slane %v712, 1
      %v715 = vor.u32 %v710, %v714
      %v717 = vshll.u32 %v503, 16
      %v719 = vrot.slane %v717, 1
      %v720 = vsel %vm504, %v715, %v719
      %vm739 = vcmask 1046528
      %v740 = vrot.slane %v414, 1
      %v741 = vrot.slane %v486, 1
      %v742 = vsel %vm739, %v740, %v741
      %v743 = vrot.slane %v415, 1
      %v744 = vrot.slane %v487, 1
      %v745 = vsel %vm739, %v743, %v744
      %v746 = vrot.slane %v416, 1
      %v747 = vrot.slane %v488, 1
      %v748 = vsel %vm739, %v746, %v747
      %v749 = vrot.slane %v417, 1
      %v750 = vrot.slane %v489, 1
      %v751 = vsel %vm739, %v749, %v750
      %v752 = vrot.slane %v418, 1
      %v753 = vrot.slane %v490, 1
      %v754 = vsel %vm739, %v752, %v753
      %v755 = vrot.slane %v419, 1
      %v756 = vrot.slane %v491, 1
      %v757 = vsel %vm739, %v755, %v756
      %v758 = vrot.slane %v420, 1
      %v759 = vrot.slane %v492, 1
      %v760 = vsel %vm739, %v758, %v759
      %v761 = vrot.slane %v421, 1
      %v762 = vrot.slane %v493, 1
      %v763 = vsel %vm739, %v761, %v762
      %v764 = vrot.slane %v422, 1
      %v765 = vrot.slane %v494, 1
      %v766 = vsel %vm739, %v764, %v765
      %v767 = vrot.slane %v423, 1
      %v768 = vrot.slane %v495, 1
      %v769 = vsel %vm739, %v767, %v768
      %v770 = vrot.slane %v424, 1
      %v771 = vrot.slane %v496, 1
      %v772 = vsel %vm739, %v770, %v771
      %v773 = vrot.slane %v425, 1
      %v774 = vrot.slane %v497, 1
      %v775 = vsel %vm739, %v773, %v774
      %v776 = vrot.slane %v426, 1
      %v777 = vrot.slane %v498, 1
      %v778 = vsel %vm739, %v776, %v777
      %v779 = vrot.slane %v427, 1
      %v780 = vrot.slane %v499, 1
      %v781 = vsel %vm739, %v779, %v780
      %v782 = vrot.slane %v428, 1
      %v783 = vrot.slane %v500, 1
      %v784 = vsel %vm739, %v782, %v783
      %v785 = vrot.slane %v429, 1
      %v786 = vrot.slane %v501, 1
      %v787 = vsel %vm739, %v785, %v786
      %v788 = vrot.slane %v430, 1
      %v789 = vrot.slane %v502, 1
      %v790 = vsel %vm739, %v788, %v789
      %v791 = vrot.slane %v431, 1
      %v792 = vrot.slane %v503, 1
      %v793 = vsel %vm739, %v791, %v792
      %v812 = vld [vmem:[%s1] sm:$0xf]
      %v813 = vld [vmem:[%s1 + $0x4] sm:$0xf]
      %v814 = vld [vmem:[%s1 + $0x8] sm:$0xf]
      %v815 = vld [vmem:[%s1 + $0xc] sm:$0xf]
      %v816 = vld [vmem:[%s1 + $0x10] sm:$0xf]
      %v817 = vld [vmem:[%s1 + $0x14] sm:$0xf]
      %v818 = vld [vmem:[%s1 + $0x18] sm:$0xf]
      %v819 = vld [vmem:[%s1 + $0x1c] sm:$0xf]
      %v820 = vld [vmem:[%s1 + $0x20] sm:$0xf]
      %v821 = vld [vmem:[%s1 + $0x24] sm:$0xf]
      %v822 = vld [vmem:[%s1 + $0x28] sm:$0xf]
      %v823 = vld [vmem:[%s1 + $0x2c] sm:$0xf]
      %v824 = vld [vmem:[%s1 + $0x30] sm:$0xf]
      %v825 = vld [vmem:[%s1 + $0x34] sm:$0xf]
      %v826 = vld [vmem:[%s1 + $0x38] sm:$0xf]
      %v827 = vld [vmem:[%s1 + $0x3c] sm:$0xf]
      %v828 = vld [vmem:[%s1 + $0x40] sm:$0xf]
      %v829 = vld [vmem:[%s1 + $0x44] sm:$0xf]
      %v830 = vld [vmem:[%s1 + $0x48] sm:$0xf]
      %v831 = vld [vmem:[%s1 + $0x4c] sm:$0xf]
      %v832 = vld [vmem:[%s1 + $0x50] sm:$0xf]
      %v833 = vld [vmem:[%s1 + $0x54] sm:$0xf]
      %v834 = vld [vmem:[%s1 + $0x58] sm:$0xf]
      %v835 = vld [vmem:[%s1 + $0x5c] sm:$0xf]
      %v836 = vld [vmem:[%s1 + $0x60] sm:$0xf]
      %v837 = vld [vmem:[%s1 + $0x64] sm:$0xf]
      %v838 = vld [vmem:[%s1 + $0x68] sm:$0xf]
      %v839 = vld [vmem:[%s1 + $0x6c] sm:$0xf]
      %v840 = vld [vmem:[%s1 + $0x70] sm:$0xf]
      %v841 = vld [vmem:[%s1 + $0x74] sm:$0xf]
      %v842 = vld [vmem:[%s1 + $0x78] sm:$0xf]
      %v843 = vld [vmem:[%s1 + $0x7c] sm:$0xf]
      %v844 = vld [vmem:[%s1 + $0x80] sm:$0xf]
      %v845 = vld [vmem:[%s1 + $0x84] sm:$0xf]
      %v846 = vld [vmem:[%s1 + $0x88] sm:$0xf]
      %v847 = vld [vmem:[%s1 + $0x8c] sm:$0xf]
      %v848 = vld [vmem:[%s1 + $0x90] sm:$0xf]
      %v849 = vld [vmem:[%s1 + $0x94] sm:$0xf]
      %v850 = vld [vmem:[%s1 + $0x98] sm:$0xf]
      %v851 = vld [vmem:[%s1 + $0x9c] sm:$0xf]
      %v852 = vld [vmem:[%s1 + $0xa0] sm:$0xf]
      %v853 = vld [vmem:[%s1 + $0xa4] sm:$0xf]
      %v854 = vld [vmem:[%s1 + $0xa8] sm:$0xf]
      %v855 = vld [vmem:[%s1 + $0xac] sm:$0xf]
      %v856 = vld [vmem:[%s1 + $0xb0] sm:$0xf]
      %v857 = vld [vmem:[%s1 + $0xb4] sm:$0xf]
      %v858 = vld [vmem:[%s1 + $0xb8] sm:$0xf]
      %v859 = vld [vmem:[%s1 + $0xbc] sm:$0xf]
      %v862 = vunpack.c.l.b16 %v336
      %v863 = vunpack.c.l.b16 %v337
      %v864 = vpack.c.b16 %v863, %v862
      %v867 = vunpack.c.l.b16 %v338
      %v868 = vpack.c.b16 %v867, %v867
      %v870 = vshrl.u32 %v864, 16
      %v872 = vshll.u32 %v864, 16
      %v874 = vrot.slane %v872, 1
      %v875 = vor.u32 %v870, %v874
      %v877 = vshll.u32 %v868, 16
      %v879 = vrot.slane %v877, 1
      %v880 = vsel %vm504, %v875, %v879
      %v882 = vrot.slane %v864, 1
      %v883 = vrot.slane %v868, 1
      %v884 = vsel %vm739, %v882, %v883
      %s886 = scalar_lea.vmem %s1, 192
      %v887 = vld [vmem:[%s886] sm:$0xf]
      %v888 = vld [vmem:[%s886 + $0x4] sm:$0xf]
      %v889 = vld [vmem:[%s886 + $0x8] sm:$0xf]
      %v890 = vld [vmem:[%s886 + $0xc] sm:$0xf]
      %v891 = vld [vmem:[%s886 + $0x10] sm:$0xf]
      %v892 = vld [vmem:[%s886 + $0x14] sm:$0xf]
      %v893 = vld [vmem:[%s886 + $0x18] sm:$0xf]
      %v894 = vld [vmem:[%s886 + $0x1c] sm:$0xf]
      %v895 = vld [vmem:[%s886 + $0x20] sm:$0xf]
      %v896 = vld [vmem:[%s886 + $0x24] sm:$0xf]
      %v897 = vld [vmem:[%s886 + $0x28] sm:$0xf]
      %v898 = vld [vmem:[%s886 + $0x2c] sm:$0xf]
      %v899 = vld [vmem:[%s886 + $0x30] sm:$0xf]
      %v900 = vld [vmem:[%s886 + $0x34] sm:$0xf]
      %v901 = vld [vmem:[%s886 + $0x38] sm:$0xf]
      %v902 = vld [vmem:[%s886 + $0x3c] sm:$0xf]
      %v903 = vld [vmem:[%s886 + $0x40] sm:$0xf]
      %v904 = vld [vmem:[%s886 + $0x44] sm:$0xf]
      %v905 = vld [vmem:[%s886 + $0x48] sm:$0xf]
      %v906 = vld [vmem:[%s886 + $0x4c] sm:$0xf]
      %v907 = vld [vmem:[%s886 + $0x50] sm:$0xf]
      %v908 = vld [vmem:[%s886 + $0x54] sm:$0xf]
      %v909 = vld [vmem:[%s886 + $0x58] sm:$0xf]
      %v910 = vld [vmem:[%s886 + $0x5c] sm:$0xf]
      %v911 = vld [vmem:[%s886 + $0x60] sm:$0xf]
      %v912 = vld [vmem:[%s886 + $0x64] sm:$0xf]
      %v913 = vld [vmem:[%s886 + $0x68] sm:$0xf]
      %v914 = vld [vmem:[%s886 + $0x6c] sm:$0xf]
      %v915 = vld [vmem:[%s886 + $0x70] sm:$0xf]
      %v916 = vld [vmem:[%s886 + $0x74] sm:$0xf]
      %v917 = vld [vmem:[%s886 + $0x78] sm:$0xf]
      %v918 = vld [vmem:[%s886 + $0x7c] sm:$0xf]
      %v919 = vld [vmem:[%s886 + $0x80] sm:$0xf]
      %v920 = vld [vmem:[%s886 + $0x84] sm:$0xf]
      %v921 = vld [vmem:[%s886 + $0x88] sm:$0xf]
      %v922 = vld [vmem:[%s886 + $0x8c] sm:$0xf]
      %v923 = vld [vmem:[%s886 + $0x90] sm:$0xf]
      %v924 = vld [vmem:[%s886 + $0x94] sm:$0xf]
      %v925 = vld [vmem:[%s886 + $0x98] sm:$0xf]
      %v926 = vld [vmem:[%s886 + $0x9c] sm:$0xf]
      %v927 = vld [vmem:[%s886 + $0xa0] sm:$0xf]
      %v928 = vld [vmem:[%s886 + $0xa4] sm:$0xf]
      %v929 = vld [vmem:[%s886 + $0xa8] sm:$0xf]
      %v930 = vld [vmem:[%s886 + $0xac] sm:$0xf]
      %v931 = vld [vmem:[%s886 + $0xb0] sm:$0xf]
      %v932 = vld [vmem:[%s886 + $0xb4] sm:$0xf]
      %v933 = vld [vmem:[%s886 + $0xb8] sm:$0xf]
      %v934 = vld [vmem:[%s886 + $0xbc] sm:$0xf]
      %v983 = vunpack.c.l.b16 %v887
      %v984 = vunpack.c.l.b16 %v888
      %v985 = vunpack.c.l.b16 %v889
      %v986 = vunpack.c.l.b16 %v890
      %v987 = vunpack.c.l.b16 %v891
      %v988 = vunpack.c.l.b16 %v892
      %v989 = vunpack.c.l.b16 %v893
      %v990 = vunpack.c.l.b16 %v894
      %v991 = vunpack.c.l.b16 %v895
      %v992 = vunpack.c.l.b16 %v896
      %v993 = vunpack.c.l.b16 %v897
      %v994 = vunpack.c.l.b16 %v898
      %v995 = vunpack.c.l.b16 %v899
      %v996 = vunpack.c.l.b16 %v900
      %v997 = vunpack.c.l.b16 %v901
      %v998 = vunpack.c.l.b16 %v902
      %v999 = vunpack.c.l.b16 %v903
      %v1000 = vunpack.c.l.b16 %v904
      %v1001 = vunpack.c.l.b16 %v905
      %v1002 = vunpack.c.l.b16 %v906
      %v1003 = vunpack.c.l.b16 %v907
      %v1004 = vunpack.c.l.b16 %v908
      %v1005 = vunpack.c.l.b16 %v909
      %v1006 = vunpack.c.l.b16 %v910
      %v1007 = vunpack.c.l.b16 %v911
      %v1008 = vunpack.c.l.b16 %v912
      %v1009 = vunpack.c.l.b16 %v913
      %v1010 = vunpack.c.l.b16 %v914
      %v1011 = vunpack.c.l.b16 %v915
      %v1012 = vunpack.c.l.b16 %v916
      %v1013 = vunpack.c.l.b16 %v917
      %v1014 = vunpack.c.l.b16 %v918
      %v1015 = vunpack.c.l.b16 %v919
      %v1016 = vunpack.c.l.b16 %v920
      %v1017 = vunpack.c.l.b16 %v921
      %v1018 = vunpack.c.l.b16 %v922
      %v1019 = vunpack.c.l.b16 %v923
      %v1020 = vunpack.c.l.b16 %v924
      %v1021 = vunpack.c.l.b16 %v925
      %v1022 = vunpack.c.l.b16 %v926
      %v1023 = vunpack.c.l.b16 %v927
      %v1024 = vunpack.c.l.b16 %v928
      %v1025 = vunpack.c.l.b16 %v929
      %v1026 = vunpack.c.l.b16 %v930
      %v1027 = vunpack.c.l.b16 %v931
      %v1028 = vunpack.c.l.b16 %v932
      %v1029 = vunpack.c.l.b16 %v933
      %v1030 = vunpack.c.l.b16 %v934
      %v1031 = vpack.c.b16 %v984, %v983
      %v1032 = vpack.c.b16 %v986, %v985
      %v1033 = vpack.c.b16 %v988, %v987
      %v1034 = vpack.c.b16 %v990, %v989
      %v1035 = vpack.c.b16 %v992, %v991
      %v1036 = vpack.c.b16 %v994, %v993
      %v1037 = vpack.c.b16 %v996, %v995
      %v1038 = vpack.c.b16 %v998, %v997
      %v1039 = vpack.c.b16 %v1000, %v999
      %v1040 = vpack.c.b16 %v1002, %v1001
      %v1041 = vpack.c.b16 %v1004, %v1003
      %v1042 = vpack.c.b16 %v1006, %v1005
      %v1043 = vpack.c.b16 %v1008, %v1007
      %v1044 = vpack.c.b16 %v1010, %v1009
      %v1045 = vpack.c.b16 %v1012, %v1011
      %v1046 = vpack.c.b16 %v1014, %v1013
      %v1047 = vpack.c.b16 %v1016, %v1015
      %v1048 = vpack.c.b16 %v1018, %v1017
      %v1049 = vpack.c.b16 %v1020, %v1019
      %v1050 = vpack.c.b16 %v1022, %v1021
      %v1051 = vpack.c.b16 %v1024, %v1023
      %v1052 = vpack.c.b16 %v1026, %v1025
      %v1053 = vpack.c.b16 %v1028, %v1027
      %v1054 = vpack.c.b16 %v1030, %v1029
      %1079 = vmatprep.subr.bf16.mxu0 0
      %1080 = vmatpush1.bf16.msra.mxu0 %v1031
      %1081 = vmatprep.subr.bf16.mxu0 0
      %1082 = vmatpush1.bf16.msra.mxu0 %v1032
      %1083 = vmatprep.subr.bf16.mxu0 0
      %1084 = vmatpush1.bf16.msra.mxu0 %v1033
      %1085 = vmatprep.subr.bf16.mxu0 0
      %1086 = vmatpush1.bf16.msra.mxu0 %v1034
      %1087 = vmatprep.subr.bf16.mxu0 0
      %1088 = vmatpush1.bf16.msra.mxu0 %v1035
      %1089 = vmatprep.subr.bf16.mxu0 0
      %1090 = vmatpush1.bf16.msra.mxu0 %v1036
      %1091 = vmatprep.subr.bf16.mxu0 0
      %1092 = vmatpush1.bf16.msra.mxu0 %v1037
      %1093 = vmatprep.subr.bf16.mxu0 0
      %1094 = vmatpush1.bf16.msra.mxu0 %v1038
      %1095 = vmatprep.subr.bf16.mxu0 0
      %1096 = vmatpush1.bf16.msra.mxu0 %v1039
      %1097 = vmatprep.subr.bf16.mxu0 0
      %1098 = vmatpush1.bf16.msra.mxu0 %v1040
      %1099 = vmatprep.subr.bf16.mxu0 0
      %1100 = vmatpush1.bf16.msra.mxu0 %v1041
      %1101 = vmatprep.subr.bf16.mxu0 0
      %1102 = vmatpush1.bf16.msra.mxu0 %v1042
      %1103 = vmatprep.subr.bf16.mxu0 0
      %1104 = vmatpush1.bf16.msra.mxu0 %v1043
      %1105 = vmatprep.subr.bf16.mxu0 0
      %1106 = vmatpush1.bf16.msra.mxu0 %v1044
      %1107 = vmatprep.subr.bf16.mxu0 0
      %1108 = vmatpush1.bf16.msra.mxu0 %v1045
      %1109 = vmatprep.subr.bf16.mxu0 0
      %1110 = vmatpush1.bf16.msra.mxu0 %v1046
      %1111 = vmatprep.mubr.bf16.mxu0 %v528
      %1112 = vmatmul.mubr.bf16.gmra.mrb[0].mxu0 %v415
      %v1113 = vpop.f32.mrb[0].mxu0
      %v1114 = vadd.f32 0.0, %v1113
      %v1115 = vpop.f32.mrb[0].mxu0
      %v1116 = vpop.f32.mrb[0].mxu0
      %v1117 = vadd.f32 0.0, %v1116
      %v1118 = vpop.f32.mrb[0].mxu0
      %1119 = vmatprep.mubr.bf16.mxu0 %v540
      %1120 = vmatmul.mubr.bf16.gmra.mrb[0].mxu0 %v416
      %v1121 = vpop.f32.mrb[0].mxu0
      %v1122 = vadd.f32 0.0, %v1121
      %v1123 = vpop.f32.mrb[0].mxu0
      %v1124 = vpop.f32.mrb[0].mxu0
      %v1125 = vadd.f32 0.0, %v1124
      %v1126 = vpop.f32.mrb[0].mxu0
      %1127 = vmatprep.mubr.bf16.mxu0 %v552
      %1128 = vmatmul.mubr.bf16.gmra.mrb[0].mxu0 %v417
      %v1129 = vpop.f32.mrb[0].mxu0
      %v1130 = vadd.f32 0.0, %v1129
      %v1131 = vpop.f32.mrb[0].mxu0
      %v1132 = vpop.f32.mrb[0].mxu0
      %v1133 = vadd.f32 0.0, %v1132
      %v1134 = vpop.f32.mrb[0].mxu0
      %1135 = vmatprep.mubr.bf16.mxu0 %v564
      %1136 = vmatmul.mubr.bf16.gmra.mrb[0].mxu0 %v418
      %v1137 = vpop.f32.mrb[0].mxu0
      %v1138 = vadd.f32 0.0, %v1137
      %v1139 = vpop.f32.mrb[0].mxu0
      %v1140 = vpop.f32.mrb[0].mxu0
      %v1141 = vadd.f32 0.0, %v1140
      %v1142 = vpop.f32.mrb[0].mxu0
      %1143 = vmatprep.mubr.bf16.mxu0 %v576
      %1144 = vmatmul.mubr.bf16.gmra.mrb[0].mxu0 %v419
      %v1145 = vpop.f32.mrb[0].mxu0
      %v1146 = vadd.f32 0.0, %v1145
      %v1147 = vpop.f32.mrb[0].mxu0
      %v1148 = vpop.f32.mrb[0].mxu0
      %v1149 = vadd.f32 0.0, %v1148
      %v1150 = vpop.f32.mrb[0].mxu0
      %1151 = vmatprep.mubr.bf16.mxu0 %v588
      %1152 = vmatmul.mubr.bf16.gmra.mrb[0].mxu0 %v420
      %v1153 = vpop.f32.mrb[0].mxu0
      %v1154 = vadd.f32 0.0, %v1153
      %v1155 = vpop.f32.mrb[0].mxu0
      %v1156 = vpop.f32.mrb[0].mxu0
      %v1157 = vadd.f32 0.0, %v1156
      %v1158 = vpop.f32.mrb[0].mxu0
      %1159 = vmatprep.mubr.bf16.mxu0 %v600
      %1160 = vmatmul.mubr.bf16.gmra.mrb[0].mxu0 %v421
      %v1161 = vpop.f32.mrb[0].mxu0
      %v1162 = vadd.f32 0.0, %v1161
      %v1163 = vpop.f32.mrb[0].mxu0
      %v1164 = vpop.f32.mrb[0].mxu0
      %v1165 = vadd.f32 0.0, %v1164
      %v1166 = vpop.f32.mrb[0].mxu0
      %1167 = vmatprep.mubr.bf16.mxu0 %v612
      %1168 = vmatmul.mubr.bf16.gmra.mrb[0].mxu0 %v422
      %v1169 = vpop.f32.mrb[0].mxu0
      %v1170 = vadd.f32 0.0, %v1169
      %v1171 = vpop.f32.mrb[0].mxu0
      %v1172 = vpop.f32.mrb[0].mxu0
      %v1173 = vadd.f32 0.0, %v1172
      %v1174 = vpop.f32.mrb[0].mxu0
      %1175 = vmatprep.mubr.bf16.mxu0 %v624
      %1176 = vmatmul.mubr.bf16.gmra.mrb[0].mxu0 %v423
      %v1177 = vpop.f32.mrb[0].mxu0
      %v1178 = vadd.f32 0.0, %v1177
      %v1179 = vpop.f32.mrb[0].mxu0
      %v1180 = vpop.f32.mrb[0].mxu0
      %v1181 = vadd.f32 0.0, %v1180
      %v1182 = vpop.f32.mrb[0].mxu0
      %1183 = vmatprep.mubr.bf16.mxu0 %v636
      %1184 = vmatmul.mubr.bf16.gmra.mrb[0].mxu0 %v424
      %v1185 = vpop.f32.mrb[0].mxu0
      %v1186 = vadd.f32 0.0, %v1185
      %v1187 = vpop.f32.mrb[0].mxu0
      %v1188 = vpop.f32.mrb[0].mxu0
      %v1189 = vadd.f32 0.0, %v1188
      %v1190 = vpop.f32.mrb[0].mxu0
      %1191 = vmatprep.mubr.bf16.mxu0 %v648
      %1192 = vmatmul.mubr.bf16.gmra.mrb[0].mxu0 %v425
      %v1193 = vpop.f32.mrb[0].mxu0
      %v1194 = vadd.f32 0.0, %v1193
      %v1195 = vpop.f32.mrb[0].mxu0
      %v1196 = vpop.f32.mrb[0].mxu0
      %v1197 = vadd.f32 0.0, %v1196
      %v1198 = vpop.f32.mrb[0].mxu0
      %1199 = vmatprep.mubr.bf16.mxu0 %v660
      %1200 = vmatmul.mubr.bf16.gmra.mrb[0].mxu0 %v426
      %v1201 = vpop.f32.mrb[0].mxu0
      %v1202 = vadd.f32 0.0, %v1201
      %v1203 = vpop.f32.mrb[0].mxu0
      %v1204 = vpop.f32.mrb[0].mxu0
      %v1205 = vadd.f32 0.0, %v1204
      %v1206 = vpop.f32.mrb[0].mxu0
      %1207 = vmatprep.mubr.bf16.mxu0 %v672
      %1208 = vmatmul.mubr.bf16.gmra.mrb[0].mxu0 %v427
      %v1209 = vpop.f32.mrb[0].mxu0
      %v1210 = vadd.f32 0.0, %v1209
      %v1211 = vpop.f32.mrb[0].mxu0
      %v1212 = vpop.f32.mrb[0].mxu0
      %v1213 = vadd.f32 0.0, %v1212
      %v1214 = vpop.f32.mrb[0].mxu0
      %1215 = vmatprep.mubr.bf16.mxu0 %v684
      %1216 = vmatmul.mubr.bf16.gmra.mrb[0].mxu0 %v428
      %v1217 = vpop.f32.mrb[0].mxu0
      %v1218 = vadd.f32 0.0, %v1217
      %v1219 = vpop.f32.mrb[0].mxu0
      %v1220 = vpop.f32.mrb[0].mxu0
      %v1221 = vadd.f32 0.0, %v1220
      %v1222 = vpop.f32.mrb[0].mxu0
      %1223 = vmatprep.mubr.bf16.mxu0 %v696
      %1224 = vmatmul.mubr.bf16.gmra.mrb[0].mxu0 %v429
      %v1225 = vpop.f32.mrb[0].mxu0
      %v1226 = vadd.f32 0.0, %v1225
      %v1227 = vpop.f32.mrb[0].mxu0
      %v1228 = vpop.f32.mrb[0].mxu0
      %v1229 = vadd.f32 0.0, %v1228
      %v1230 = vpop.f32.mrb[0].mxu0
      %1231 = vmatprep.mubr.bf16.mxu0 %v708
      %1232 = vmatmul.mubr.bf16.gmra.mrb[0].mxu0 %v430
      %v1233 = vpop.f32.mrb[0].mxu0
      %v1234 = vadd.f32 0.0, %v1233
      %v1235 = vpop.f32.mrb[0].mxu0
      %v1236 = vpop.f32.mrb[0].mxu0
      %v1237 = vadd.f32 0.0, %v1236
      %v1238 = vpop.f32.mrb[0].mxu0
      %1239 = vmatprep.mubr.bf16.mxu0 %v720
      %1240 = vmatmul.mubr.bf16.gmra.mrb[0].mxu0 %v431
      %v1241 = vpop.f32.mrb[0].mxu0
      %v1242 = vadd.f32 0.0, %v1241
      %v1243 = vpop.f32.mrb[0].mxu0
      %v1244 = vpop.f32.mrb[0].mxu0
      %v1245 = vadd.f32 0.0, %v1244
      %v1246 = vpop.f32.mrb[0].mxu0
      %1247 = vmatprep.mubr.bf16.mxu0 %v880
      %1248 = vmatmul.mubr.bf16.gmra.mrb[0].mxu0 %v864
      %v1249 = vpop.f32.mrb[0].mxu0
      %v1250 = vadd.f32 0.0, %v1249
      %v1251 = vpop.f32.mrb[0].mxu0
      %v1252 = vpop.f32.mrb[0].mxu0
      %v1253 = vadd.f32 0.0, %v1252
      %v1254 = vpop.f32.mrb[0].mxu0
      %1255 = vdwg.mxu0
      %1256 = vmatprep.subr.bf16.mxu0 0
      %1257 = vmatpush1.bf16.msra.mxu0 %v1047
      %1258 = vmatprep.subr.bf16.mxu0 0
      %1259 = vmatpush1.bf16.msra.mxu0 %v1048
      %1260 = vmatprep.subr.bf16.mxu0 0
      %1261 = vmatpush1.bf16.msra.mxu0 %v1049
      %1262 = vmatprep.subr.bf16.mxu0 0
      %1263 = vmatpush1.bf16.msra.mxu0 %v1050
      %1264 = vmatprep.subr.bf16.mxu0 0
      %1265 = vmatpush1.bf16.msra.mxu0 %v1051
      %1266 = vmatprep.subr.bf16.mxu0 0
      %1267 = vmatpush1.bf16.msra.mxu0 %v1052
      %1268 = vmatprep.subr.bf16.mxu0 0
      %1269 = vmatpush1.bf16.msra.mxu0 %v1053
      %1270 = vmatprep.subr.bf16.mxu0 0
      %1271 = vmatpush1.bf16.msra.mxu0 %v1054
      %1272 = vmatprep.subr.bf16.mxu0 0
      %1273 = vmatpush1.bf16.msra.mxu0 0
      %1274 = vmatprep.subr.bf16.mxu0 0
      %1275 = vmatpush1.bf16.msra.mxu0 0
      %1276 = vmatprep.subr.bf16.mxu0 0
      %1277 = vmatpush1.bf16.msra.mxu0 0
      %1278 = vmatprep.subr.bf16.mxu0 0
      %1279 = vmatpush1.bf16.msra.mxu0 0
      %1280 = vmatprep.subr.bf16.mxu0 0
      %1281 = vmatpush1.bf16.msra.mxu0 0
      %1282 = vmatprep.subr.bf16.mxu0 0
      %1283 = vmatpush1.bf16.msra.mxu0 0
      %1284 = vmatprep.subr.bf16.mxu0 0
      %1285 = vmatpush1.bf16.msra.mxu0 0
      %1286 = vmatprep.subr.bf16.mxu0 0
      %1287 = vmatpush1.bf16.msra.mxu0 0
      %1288 = vmatprep.mubr.bf16.mxu0 0
      %1289 = vmatmul.mubr.bf16.gmra.mrb[0].mxu0 %v745
      %v1290 = vpop.f32.mrb[0].mxu0
      %v1291 = vadd.f32 %v1114, %v1290
      %v1292 = vpop.f32.mrb[0].mxu0
      %v1293 = vpop.f32.mrb[0].mxu0
      %v1294 = vadd.f32 %v1117, %v1293
      %v1295 = vpop.f32.mrb[0].mxu0
      %1296 = vmatprep.mubr.bf16.mxu0 0
      %1297 = vmatmul.mubr.bf16.gmra.mrb[0].mxu0 %v748
      %v1298 = vpop.f32.mrb[0].mxu0
      %v1299 = vadd.f32 %v1122, %v1298
      %v1300 = vpop.f32.mrb[0].mxu0
      %v1301 = vpop.f32.mrb[0].mxu0
      %v1302 = vadd.f32 %v1125, %v1301
      %v1303 = vpop.f32.mrb[0].mxu0
      %1304 = vmatprep.mubr.bf16.mxu0 0
      %1305 = vmatmul.mubr.bf16.gmra.mrb[0].mxu0 %v751
      %v1306 = vpop.f32.mrb[0].mxu0
      %v1307 = vadd.f32 %v1130, %v1306
      %v1308 = vpop.f32.mrb[0].mxu0
      %v1309 = vpop.f32.mrb[0].mxu0
      %v1310 = vadd.f32 %v1133, %v1309
      %v1311 = vpop.f32.mrb[0].mxu0
      %1312 = vmatprep.mubr.bf16.mxu0 0
      %1313 = vmatmul.mubr.bf16.gmra.mrb[0].mxu0 %v754
      %v1314 = vpop.f32.mrb[0].mxu0
      %v1315 = vadd.f32 %v1138, %v1314
      %v1316 = vpop.f32.mrb[0].mxu0
      %v1317 = vpop.f32.mrb[0].mxu0
      %v1318 = vadd.f32 %v1141, %v1317
      %v1319 = vpop.f32.mrb[0].mxu0
      %1320 = vmatprep.mubr.bf16.mxu0 0
      %1321 = vmatmul.mubr.bf16.gmra.mrb[0].mxu0 %v757
      %v1322 = vpop.f32.mrb[0].mxu0
      %v1323 = vadd.f32 %v1146, %v1322
      %v1324 = vpop.f32.mrb[0].mxu0
      %v1325 = vpop.f32.mrb[0].mxu0
      %v1326 = vadd.f32 %v1149, %v1325
      %v1327 = vpop.f32.mrb[0].mxu0
      %1328 = vmatprep.mubr.bf16.mxu0 0
      %1329 = vmatmul.mubr.bf16.gmra.mrb[0].mxu0 %v760
      %v1330 = vpop.f32.mrb[0].mxu0
      %v1331 = vadd.f32 %v1154, %v1330
      %v1332 = vpop.f32.mrb[0].mxu0
      %v1333 = vpop.f32.mrb[0].mxu0
      %v1334 = vadd.f32 %v1157, %v1333
      %v1335 = vpop.f32.mrb[0].mxu0
      %1336 = vmatprep.mubr.bf16.mxu0 0
      %1337 = vmatmul.mubr.bf16.gmra.mrb[0].mxu0 %v763
      %v1338 = vpop.f32.mrb[0].mxu0
      %v1339 = vadd.f32 %v1162, %v1338
      %v1340 = vpop.f32.mrb[0].mxu0
      %v1341 = vpop.f32.mrb[0].mxu0
      %v1342 = vadd.f32 %v1165, %v1341
      %v1343 = vpop.f32.mrb[0].mxu0
      %1344 = vmatprep.mubr.bf16.mxu0 0
      %1345 = vmatmul.mubr.bf16.gmra.mrb[0].mxu0 %v766
      %v1346 = vpop.f32.mrb[0].mxu0
      %v1347 = vadd.f32 %v1170, %v1346
      %v1348 = vpop.f32.mrb[0].mxu0
      %v1349 = vpop.f32.mrb[0].mxu0
      %v1350 = vadd.f32 %v1173, %v1349
      %v1351 = vpop.f32.mrb[0].mxu0
      %1352 = vmatprep.mubr.bf16.mxu0 0
      %1353 = vmatmul.mubr.bf16.gmra.mrb[0].mxu0 %v769
      %v1354 = vpop.f32.mrb[0].mxu0
      %v1355 = vadd.f32 %v1178, %v1354
      %v1356 = vpop.f32.mrb[0].mxu0
      %v1357 = vpop.f32.mrb[0].mxu0
      %v1358 = vadd.f32 %v1181, %v1357
      %v1359 = vpop.f32.mrb[0].mxu0
      %1360 = vmatprep.mubr.bf16.mxu0 0
      %1361 = vmatmul.mubr.bf16.gmra.mrb[0].mxu0 %v772
      %v1362 = vpop.f32.mrb[0].mxu0
      %v1363 = vadd.f32 %v1186, %v1362
      %v1364 = vpop.f32.mrb[0].mxu0
      %v1365 = vpop.f32.mrb[0].mxu0
      %v1366 = vadd.f32 %v1189, %v1365
      %v1367 = vpop.f32.mrb[0].mxu0
      %1368 = vmatprep.mubr.bf16.mxu0 0
      %1369 = vmatmul.mubr.bf16.gmra.mrb[0].mxu0 %v775
      %v1370 = vpop.f32.mrb[0].mxu0
      %v1371 = vadd.f32 %v1194, %v1370
      %v1372 = vpop.f32.mrb[0].mxu0
      %v1373 = vpop.f32.mrb[0].mxu0
      %v1374 = vadd.f32 %v1197, %v1373
      %v1375 = vpop.f32.mrb[0].mxu0
      %1376 = vmatprep.mubr.bf16.mxu0 0
      %1377 = vmatmul.mubr.bf16.gmra.mrb[0].mxu0 %v778
      %v1378 = vpop.f32.mrb[0].mxu0
      %v1379 = vadd.f32 %v1202, %v1378
      %v1380 = vpop.f32.mrb[0].mxu0
      %v1381 = vpop.f32.mrb[0].mxu0
      %v1382 = vadd.f32 %v1205, %v1381
      %v1383 = vpop.f32.mrb[0].mxu0
      %1384 = vmatprep.mubr.bf16.mxu0 0
      %1385 = vmatmul.mubr.bf16.gmra.mrb[0].mxu0 %v781
      %v1386 = vpop.f32.mrb[0].mxu0
      %v1387 = vadd.f32 %v1210, %v1386
      %v1388 = vpop.f32.mrb[0].mxu0
      %v1389 = vpop.f32.mrb[0].mxu0
      %v1390 = vadd.f32 %v1213, %v1389
      %v1391 = vpop.f32.mrb[0].mxu0
      %1392 = vmatprep.mubr.bf16.mxu0 0
      %1393 = vmatmul.mubr.bf16.gmra.mrb[0].mxu0 %v784
      %v1394 = vpop.f32.mrb[0].mxu0
      %v1395 = vadd.f32 %v1218, %v1394
      %v1396 = vpop.f32.mrb[0].mxu0
      %v1397 = vpop.f32.mrb[0].mxu0
      %v1398 = vadd.f32 %v1221, %v1397
      %v1399 = vpop.f32.mrb[0].mxu0
      %1400 = vmatprep.mubr.bf16.mxu0 0
      %1401 = vmatmul.mubr.bf16.gmra.mrb[0].mxu0 %v787
      %v1402 = vpop.f32.mrb[0].mxu0
      %v1403 = vadd.f32 %v1226, %v1402
      %v1404 = vpop.f32.mrb[0].mxu0
      %v1405 = vpop.f32.mrb[0].mxu0
      %v1406 = vadd.f32 %v1229, %v1405
      %v1407 = vpop.f32.mrb[0].mxu0
      %1408 = vmatprep.mubr.bf16.mxu0 0
      %1409 = vmatmul.mubr.bf16.gmra.mrb[0].mxu0 %v790
      %v1410 = vpop.f32.mrb[0].mxu0
      %v1411 = vadd.f32 %v1234, %v1410
      %v1412 = vpop.f32.mrb[0].mxu0
      %v1413 = vpop.f32.mrb[0].mxu0
      %v1414 = vadd.f32 %v1237, %v1413
      %v1415 = vpop.f32.mrb[0].mxu0
      %1416 = vmatprep.mubr.bf16.mxu0 0
      %1417 = vmatmul.mubr.bf16.gmra.mrb[0].mxu0 %v793
      %v1418 = vpop.f32.mrb[0].mxu0
      %v1419 = vadd.f32 %v1242, %v1418
      %v1420 = vpop.f32.mrb[0].mxu0
      %v1421 = vpop.f32.mrb[0].mxu0
      %v1422 = vadd.f32 %v1245, %v1421
      %v1423 = vpop.f32.mrb[0].mxu0
      %1424 = vmatprep.mubr.bf16.mxu0 0
      %1425 = vmatmul.mubr.bf16.gmra.mrb[0].mxu0 %v884
      %v1426 = vpop.f32.mrb[0].mxu0
      %v1427 = vadd.f32 %v1250, %v1426
      %v1428 = vpop.f32.mrb[0].mxu0
      %v1429 = vpop.f32.mrb[0].mxu0
      %v1430 = vadd.f32 %v1253, %v1429
      %v1431 = vpop.f32.mrb[0].mxu0
      %1432 = vdwg.mxu0
      %v1481 = vunpack.c.l.b16 %v812
      %v1482 = vunpack.c.l.b16 %v813
      %v1483 = vunpack.c.l.b16 %v814
      %v1484 = vunpack.c.l.b16 %v815
      %v1485 = vunpack.c.l.b16 %v816
      %v1486 = vunpack.c.l.b16 %v817
      %v1487 = vunpack.c.l.b16 %v818
      %v1488 = vunpack.c.l.b16 %v819
      %v1489 = vunpack.c.l.b16 %v820
      %v1490 = vunpack.c.l.b16 %v821
      %v1491 = vunpack.c.l.b16 %v822
      %v1492 = vunpack.c.l.b16 %v823
      %v1493 = vunpack.c.l.b16 %v824
      %v1494 = vunpack.c.l.b16 %v825
      %v1495 = vunpack.c.l.b16 %v826
      %v1496 = vunpack.c.l.b16 %v827
      %v1497 = vunpack.c.l.b16 %v828
      %v1498 = vunpack.c.l.b16 %v829
      %v1499 = vunpack.c.l.b16 %v830
      %v1500 = vunpack.c.l.b16 %v831
      %v1501 = vunpack.c.l.b16 %v832
      %v1502 = vunpack.c.l.b16 %v833
      %v1503 = vunpack.c.l.b16 %v834
      %v1504 = vunpack.c.l.b16 %v835
      %v1505 = vunpack.c.l.b16 %v836
      %v1506 = vunpack.c.l.b16 %v837
      %v1507 = vunpack.c.l.b16 %v838
      %v1508 = vunpack.c.l.b16 %v839
      %v1509 = vunpack.c.l.b16 %v840
      %v1510 = vunpack.c.l.b16 %v841
      %v1511 = vunpack.c.l.b16 %v842
      %v1512 = vunpack.c.l.b16 %v843
      %v1513 = vunpack.c.l.b16 %v844
      %v1514 = vunpack.c.l.b16 %v845
      %v1515 = vunpack.c.l.b16 %v846
      %v1516 = vunpack.c.l.b16 %v847
      %v1517 = vunpack.c.l.b16 %v848
      %v1518 = vunpack.c.l.b16 %v849
      %v1519 = vunpack.c.l.b16 %v850
      %v1520 = vunpack.c.l.b16 %v851
      %v1521 = vunpack.c.l.b16 %v852
      %v1522 = vunpack.c.l.b16 %v853
      %v1523 = vunpack.c.l.b16 %v854
      %v1524 = vunpack.c.l.b16 %v855
      %v1525 = vunpack.c.l.b16 %v856
      %v1526 = vunpack.c.l.b16 %v857
      %v1527 = vunpack.c.l.b16 %v858
      %v1528 = vunpack.c.l.b16 %v859
      %v1529 = vpack.c.b16 %v1482, %v1481
      %v1530 = vpack.c.b16 %v1484, %v1483
      %v1531 = vpack.c.b16 %v1486, %v1485
      %v1532 = vpack.c.b16 %v1488, %v1487
      %v1533 = vpack.c.b16 %v1490, %v1489
      %v1534 = vpack.c.b16 %v1492, %v1491
      %v1535 = vpack.c.b16 %v1494, %v1493
      %v1536 = vpack.c.b16 %v1496, %v1495
      %v1537 = vpack.c.b16 %v1498, %v1497
      %v1538 = vpack.c.b16 %v1500, %v1499
      %v1539 = vpack.c.b16 %v1502, %v1501
      %v1540 = vpack.c.b16 %v1504, %v1503
      %v1541 = vpack.c.b16 %v1506, %v1505
      %v1542 = vpack.c.b16 %v1508, %v1507
      %v1543 = vpack.c.b16 %v1510, %v1509
      %v1544 = vpack.c.b16 %v1512, %v1511
      %v1545 = vpack.c.b16 %v1514, %v1513
      %v1546 = vpack.c.b16 %v1516, %v1515
      %v1547 = vpack.c.b16 %v1518, %v1517
      %v1548 = vpack.c.b16 %v1520, %v1519
      %v1549 = vpack.c.b16 %v1522, %v1521
      %v1550 = vpack.c.b16 %v1524, %v1523
      %v1551 = vpack.c.b16 %v1526, %v1525
      %v1552 = vpack.c.b16 %v1528, %v1527
      %1577 = vmatprep.subr.bf16.mxu0 0
      %1578 = vmatpush1.bf16.msra.mxu0 %v1529
      %1579 = vmatprep.subr.bf16.mxu0 0
      %1580 = vmatpush1.bf16.msra.mxu0 %v1530
      %1581 = vmatprep.subr.bf16.mxu0 0
      %1582 = vmatpush1.bf16.msra.mxu0 %v1531
      %1583 = vmatprep.subr.bf16.mxu0 0
      %1584 = vmatpush1.bf16.msra.mxu0 %v1532
      %1585 = vmatprep.subr.bf16.mxu0 0
      %1586 = vmatpush1.bf16.msra.mxu0 %v1533
      %1587 = vmatprep.subr.bf16.mxu0 0
      %1588 = vmatpush1.bf16.msra.mxu0 %v1534
      %1589 = vmatprep.subr.bf16.mxu0 0
      %1590 = vmatpush1.bf16.msra.mxu0 %v1535
      %1591 = vmatprep.subr.bf16.mxu0 0
      %1592 = vmatpush1.bf16.msra.mxu0 %v1536
      %1593 = vmatprep.subr.bf16.mxu0 0
      %1594 = vmatpush1.bf16.msra.mxu0 %v1537
      %1595 = vmatprep.subr.bf16.mxu0 0
      %1596 = vmatpush1.bf16.msra.mxu0 %v1538
      %1597 = vmatprep.subr.bf16.mxu0 0
      %1598 = vmatpush1.bf16.msra.mxu0 %v1539
      %1599 = vmatprep.subr.bf16.mxu0 0
      %1600 = vmatpush1.bf16.msra.mxu0 %v1540
      %1601 = vmatprep.subr.bf16.mxu0 0
      %1602 = vmatpush1.bf16.msra.mxu0 %v1541
      %1603 = vmatprep.subr.bf16.mxu0 0
      %1604 = vmatpush1.bf16.msra.mxu0 %v1542
      %1605 = vmatprep.subr.bf16.mxu0 0
      %1606 = vmatpush1.bf16.msra.mxu0 %v1543
      %1607 = vmatprep.subr.bf16.mxu0 0
      %1608 = vmatpush1.bf16.msra.mxu0 %v1544
      %1609 = vmatprep.mubr.bf16.mxu0 %v516
      %1610 = vmatmul.mubr.bf16.gmra.mrb[0].mxu0 %v414
      %v1611 = vpop.f32.mrb[0].mxu0
      %v1612 = vadd.f32 %v1291, %v1611
      %v1613 = vpop.f32.mrb[0].mxu0
      %v1614 = vpop.f32.mrb[0].mxu0
      %v1615 = vadd.f32 %v1294, %v1614
      %v1616 = vpop.f32.mrb[0].mxu0
      %1617 = vmatprep.mubr.bf16.mxu0 %v528
      %1618 = vmatmul.mubr.bf16.gmra.mrb[0].mxu0 %v415
      %v1619 = vpop.f32.mrb[0].mxu0
      %v1620 = vadd.f32 %v1299, %v1619
      %v1621 = vpop.f32.mrb[0].mxu0
      %v1622 = vpop.f32.mrb[0].mxu0
      %v1623 = vadd.f32 %v1302, %v1622
      %v1624 = vpop.f32.mrb[0].mxu0
      %1625 = vmatprep.mubr.bf16.mxu0 %v540
      %1626 = vmatmul.mubr.bf16.gmra.mrb[0].mxu0 %v416
      %v1627 = vpop.f32.mrb[0].mxu0
      %v1628 = vadd.f32 %v1307, %v1627
      %v1629 = vpop.f32.mrb[0].mxu0
      %v1630 = vpop.f32.mrb[0].mxu0
      %v1631 = vadd.f32 %v1310, %v1630
      %v1632 = vpop.f32.mrb[0].mxu0
      %1633 = vmatprep.mubr.bf16.mxu0 %v552
      %1634 = vmatmul.mubr.bf16.gmra.mrb[0].mxu0 %v417
      %v1635 = vpop.f32.mrb[0].mxu0
      %v1636 = vadd.f32 %v1315, %v1635
      %v1637 = vpop.f32.mrb[0].mxu0
      %v1638 = vpop.f32.mrb[0].mxu0
      %v1639 = vadd.f32 %v1318, %v1638
      %v1640 = vpop.f32.mrb[0].mxu0
      %1641 = vmatprep.mubr.bf16.mxu0 %v564
      %1642 = vmatmul.mubr.bf16.gmra.mrb[0].mxu0 %v418
      %v1643 = vpop.f32.mrb[0].mxu0
      %v1644 = vadd.f32 %v1323, %v1643
      %v1645 = vpop.f32.mrb[0].mxu0
      %v1646 = vpop.f32.mrb[0].mxu0
      %v1647 = vadd.f32 %v1326, %v1646
      %v1648 = vpop.f32.mrb[0].mxu0
      %1649 = vmatprep.mubr.bf16.mxu0 %v576
      %1650 = vmatmul.mubr.bf16.gmra.mrb[0].mxu0 %v419
      %v1651 = vpop.f32.mrb[0].mxu0
      %v1652 = vadd.f32 %v1331, %v1651
      %v1653 = vpop.f32.mrb[0].mxu0
      %v1654 = vpop.f32.mrb[0].mxu0
      %v1655 = vadd.f32 %v1334, %v1654
      %v1656 = vpop.f32.mrb[0].mxu0
      %1657 = vmatprep.mubr.bf16.mxu0 %v588
      %1658 = vmatmul.mubr.bf16.gmra.mrb[0].mxu0 %v420
      %v1659 = vpop.f32.mrb[0].mxu0
      %v1660 = vadd.f32 %v1339, %v1659
      %v1661 = vpop.f32.mrb[0].mxu0
      %v1662 = vpop.f32.mrb[0].mxu0
      %v1663 = vadd.f32 %v1342, %v1662
      %v1664 = vpop.f32.mrb[0].mxu0
      %1665 = vmatprep.mubr.bf16.mxu0 %v600
      %1666 = vmatmul.mubr.bf16.gmra.mrb[0].mxu0 %v421
      %v1667 = vpop.f32.mrb[0].mxu0
      %v1668 = vadd.f32 %v1347, %v1667
      %v1669 = vpop.f32.mrb[0].mxu0
      %v1670 = vpop.f32.mrb[0].mxu0
      %v1671 = vadd.f32 %v1350, %v1670
      %v1672 = vpop.f32.mrb[0].mxu0
      %1673 = vmatprep.mubr.bf16.mxu0 %v612
      %1674 = vmatmul.mubr.bf16.gmra.mrb[0].mxu0 %v422
      %v1675 = vpop.f32.mrb[0].mxu0
      %v1676 = vadd.f32 %v1355, %v1675
      %v1677 = vpop.f32.mrb[0].mxu0
      %v1678 = vpop.f32.mrb[0].mxu0
      %v1679 = vadd.f32 %v1358, %v1678
      %v1680 = vpop.f32.mrb[0].mxu0
      %1681 = vmatprep.mubr.bf16.mxu0 %v624
      %1682 = vmatmul.mubr.bf16.gmra.mrb[0].mxu0 %v423
      %v1683 = vpop.f32.mrb[0].mxu0
      %v1684 = vadd.f32 %v1363, %v1683
      %v1685 = vpop.f32.mrb[0].mxu0
      %v1686 = vpop.f32.mrb[0].mxu0
      %v1687 = vadd.f32 %v1366, %v1686
      %v1688 = vpop.f32.mrb[0].mxu0
      %1689 = vmatprep.mubr.bf16.mxu0 %v636
      %1690 = vmatmul.mubr.bf16.gmra.mrb[0].mxu0 %v424
      %v1691 = vpop.f32.mrb[0].mxu0
      %v1692 = vadd.f32 %v1371, %v1691
      %v1693 = vpop.f32.mrb[0].mxu0
      %v1694 = vpop.f32.mrb[0].mxu0
      %v1695 = vadd.f32 %v1374, %v1694
      %v1696 = vpop.f32.mrb[0].mxu0
      %1697 = vmatprep.mubr.bf16.mxu0 %v648
      %1698 = vmatmul.mubr.bf16.gmra.mrb[0].mxu0 %v425
      %v1699 = vpop.f32.mrb[0].mxu0
      %v1700 = vadd.f32 %v1379, %v1699
      %v1701 = vpop.f32.mrb[0].mxu0
      %v1702 = vpop.f32.mrb[0].mxu0
      %v1703 = vadd.f32 %v1382, %v1702
      %v1704 = vpop.f32.mrb[0].mxu0
      %1705 = vmatprep.mubr.bf16.mxu0 %v660
      %1706 = vmatmul.mubr.bf16.gmra.mrb[0].mxu0 %v426
      %v1707 = vpop.f32.mrb[0].mxu0
      %v1708 = vadd.f32 %v1387, %v1707
      %v1709 = vpop.f32.mrb[0].mxu0
      %v1710 = vpop.f32.mrb[0].mxu0
      %v1711 = vadd.f32 %v1390, %v1710
      %v1712 = vpop.f32.mrb[0].mxu0
      %1713 = vmatprep.mubr.bf16.mxu0 %v672
      %1714 = vmatmul.mubr.bf16.gmra.mrb[0].mxu0 %v427
      %v1715 = vpop.f32.mrb[0].mxu0
      %v1716 = vadd.f32 %v1395, %v1715
      %v1717 = vpop.f32.mrb[0].mxu0
      %v1718 = vpop.f32.mrb[0].mxu0
      %v1719 = vadd.f32 %v1398, %v1718
      %v1720 = vpop.f32.mrb[0].mxu0
      %1721 = vmatprep.mubr.bf16.mxu0 %v684
      %1722 = vmatmul.mubr.bf16.gmra.mrb[0].mxu0 %v428
      %v1723 = vpop.f32.mrb[0].mxu0
      %v1724 = vadd.f32 %v1403, %v1723
      %v1725 = vpop.f32.mrb[0].mxu0
      %v1726 = vpop.f32.mrb[0].mxu0
      %v1727 = vadd.f32 %v1406, %v1726
      %v1728 = vpop.f32.mrb[0].mxu0
      %1729 = vmatprep.mubr.bf16.mxu0 %v696
      %1730 = vmatmul.mubr.bf16.gmra.mrb[0].mxu0 %v429
      %v1731 = vpop.f32.mrb[0].mxu0
      %v1732 = vadd.f32 %v1411, %v1731
      %v1733 = vpop.f32.mrb[0].mxu0
      %v1734 = vpop.f32.mrb[0].mxu0
      %v1735 = vadd.f32 %v1414, %v1734
      %v1736 = vpop.f32.mrb[0].mxu0
      %1737 = vmatprep.mubr.bf16.mxu0 %v708
      %1738 = vmatmul.mubr.bf16.gmra.mrb[0].mxu0 %v430
      %v1739 = vpop.f32.mrb[0].mxu0
      %v1740 = vadd.f32 %v1419, %v1739
      %v1741 = vpop.f32.mrb[0].mxu0
      %v1742 = vpop.f32.mrb[0].mxu0
      %v1743 = vadd.f32 %v1422, %v1742
      %v1744 = vpop.f32.mrb[0].mxu0
      %1745 = vmatprep.mubr.bf16.mxu0 %v720
      %1746 = vmatmul.mubr.bf16.gmra.mrb[0].mxu0 %v431
      %v1747 = vpop.f32.mrb[0].mxu0
      %v1748 = vadd.f32 %v1427, %v1747
      %v1749 = vpop.f32.mrb[0].mxu0
      %v1750 = vpop.f32.mrb[0].mxu0
      %v1751 = vadd.f32 %v1430, %v1750
      %v1752 = vpop.f32.mrb[0].mxu0
      %1753 = vdwg.mxu0
      %1754 = vmatprep.subr.bf16.mxu0 0
      %1755 = vmatpush1.bf16.msra.mxu0 %v1545
      %1756 = vmatprep.subr.bf16.mxu0 0
      %1757 = vmatpush1.bf16.msra.mxu0 %v1546
      %1758 = vmatprep.subr.bf16.mxu0 0
      %1759 = vmatpush1.bf16.msra.mxu0 %v1547
      %1760 = vmatprep.subr.bf16.mxu0 0
      %1761 = vmatpush1.bf16.msra.mxu0 %v1548
      %1762 = vmatprep.subr.bf16.mxu0 0
      %1763 = vmatpush1.bf16.msra.mxu0 %v1549
      %1764 = vmatprep.subr.bf16.mxu0 0
      %1765 = vmatpush1.bf16.msra.mxu0 %v1550
      %1766 = vmatprep.subr.bf16.mxu0 0
      %1767 = vmatpush1.bf16.msra.mxu0 %v1551
      %1768 = vmatprep.subr.bf16.mxu0 0
      %1769 = vmatpush1.bf16.msra.mxu0 %v1552
      %1770 = vmatprep.subr.bf16.mxu0 0
      %1771 = vmatpush1.bf16.msra.mxu0 0
      %1772 = vmatprep.subr.bf16.mxu0 0
      %1773 = vmatpush1.bf16.msra.mxu0 0
      %1774 = vmatprep.subr.bf16.mxu0 0
      %1775 = vmatpush1.bf16.msra.mxu0 0
      %1776 = vmatprep.subr.bf16.mxu0 0
      %1777 = vmatpush1.bf16.msra.mxu0 0
      %1778 = vmatprep.subr.bf16.mxu0 0
      %1779 = vmatpush1.bf16.msra.mxu0 0
      %1780 = vmatprep.subr.bf16.mxu0 0
      %1781 = vmatpush1.bf16.msra.mxu0 0
      %1782 = vmatprep.subr.bf16.mxu0 0
      %1783 = vmatpush1.bf16.msra.mxu0 0
      %1784 = vmatprep.subr.bf16.mxu0 0
      %1785 = vmatpush1.bf16.msra.mxu0 0
      %1786 = vmatprep.mubr.bf16.mxu0 0
      %1787 = vmatmul.mubr.bf16.gmra.mrb[0].mxu0 %v742
      %v1788 = vpop.f32.mrb[0].mxu0
      %v1789 = vadd.f32 %v1612, %v1788
      %v1790 = vpop.f32.mrb[0].mxu0
      %v1791 = vpop.f32.mrb[0].mxu0
      %v1792 = vadd.f32 %v1615, %v1791
      %v1793 = vpop.f32.mrb[0].mxu0
      %1794 = vmatprep.mubr.bf16.mxu0 0
      %1795 = vmatmul.mubr.bf16.gmra.mrb[0].mxu0 %v745
      %v1796 = vpop.f32.mrb[0].mxu0
      %v1797 = vadd.f32 %v1620, %v1796
      %v1798 = vpop.f32.mrb[0].mxu0
      %v1799 = vpop.f32.mrb[0].mxu0
      %v1800 = vadd.f32 %v1623, %v1799
      %v1801 = vpop.f32.mrb[0].mxu0
      %1802 = vmatprep.mubr.bf16.mxu0 0
      %1803 = vmatmul.mubr.bf16.gmra.mrb[0].mxu0 %v748
      %v1804 = vpop.f32.mrb[0].mxu0
      %v1805 = vadd.f32 %v1628, %v1804
      %v1806 = vpop.f32.mrb[0].mxu0
      %v1807 = vpop.f32.mrb[0].mxu0
      %v1808 = vadd.f32 %v1631, %v1807
      %v1809 = vpop.f32.mrb[0].mxu0
      %1810 = vmatprep.mubr.bf16.mxu0 0
      %1811 = vmatmul.mubr.bf16.gmra.mrb[0].mxu0 %v751
      %v1812 = vpop.f32.mrb[0].mxu0
      %v1813 = vadd.f32 %v1636, %v1812
      %v1814 = vpop.f32.mrb[0].mxu0
      %v1815 = vpop.f32.mrb[0].mxu0
      %v1816 = vadd.f32 %v1639, %v1815
      %v1817 = vpop.f32.mrb[0].mxu0
      %1818 = vmatprep.mubr.bf16.mxu0 0
      %1819 = vmatmul.mubr.bf16.gmra.mrb[0].mxu0 %v754
      %v1820 = vpop.f32.mrb[0].mxu0
      %v1821 = vadd.f32 %v1644, %v1820
      %v1822 = vpop.f32.mrb[0].mxu0
      %v1823 = vpop.f32.mrb[0].mxu0
      %v1824 = vadd.f32 %v1647, %v1823
      %v1825 = vpop.f32.mrb[0].mxu0
      %1826 = vmatprep.mubr.bf16.mxu0 0
      %1827 = vmatmul.mubr.bf16.gmra.mrb[0].mxu0 %v757
      %v1828 = vpop.f32.mrb[0].mxu0
      %v1829 = vadd.f32 %v1652, %v1828
      %v1830 = vpop.f32.mrb[0].mxu0
      %v1831 = vpop.f32.mrb[0].mxu0
      %v1832 = vadd.f32 %v1655, %v1831
      %v1833 = vpop.f32.mrb[0].mxu0
      %1834 = vmatprep.mubr.bf16.mxu0 0
      %1835 = vmatmul.mubr.bf16.gmra.mrb[0].mxu0 %v760
      %v1836 = vpop.f32.mrb[0].mxu0
      %v1837 = vadd.f32 %v1660, %v1836
      %v1838 = vpop.f32.mrb[0].mxu0
      %v1839 = vpop.f32.mrb[0].mxu0
      %v1840 = vadd.f32 %v1663, %v1839
      %v1841 = vpop.f32.mrb[0].mxu0
      %1842 = vmatprep.mubr.bf16.mxu0 0
      %1843 = vmatmul.mubr.bf16.gmra.mrb[0].mxu0 %v763
      %v1844 = vpop.f32.mrb[0].mxu0
      %v1845 = vadd.f32 %v1668, %v1844
      %v1846 = vpop.f32.mrb[0].mxu0
      %v1847 = vpop.f32.mrb[0].mxu0
      %v1848 = vadd.f32 %v1671, %v1847
      %v1849 = vpop.f32.mrb[0].mxu0
      %1850 = vmatprep.mubr.bf16.mxu0 0
      %1851 = vmatmul.mubr.bf16.gmra.mrb[0].mxu0 %v766
      %v1852 = vpop.f32.mrb[0].mxu0
      %v1853 = vadd.f32 %v1676, %v1852
      %v1854 = vpop.f32.mrb[0].mxu0
      %v1855 = vpop.f32.mrb[0].mxu0
      %v1856 = vadd.f32 %v1679, %v1855
      %v1857 = vpop.f32.mrb[0].mxu0
      %1858 = vmatprep.mubr.bf16.mxu0 0
      %1859 = vmatmul.mubr.bf16.gmra.mrb[0].mxu0 %v769
      %v1860 = vpop.f32.mrb[0].mxu0
      %v1861 = vadd.f32 %v1684, %v1860
      %v1862 = vpop.f32.mrb[0].mxu0
      %v1863 = vpop.f32.mrb[0].mxu0
      %v1864 = vadd.f32 %v1687, %v1863
      %v1865 = vpop.f32.mrb[0].mxu0
      %1866 = vmatprep.mubr.bf16.mxu0 0
      %1867 = vmatmul.mubr.bf16.gmra.mrb[0].mxu0 %v772
      %v1868 = vpop.f32.mrb[0].mxu0
      %v1869 = vadd.f32 %v1692, %v1868
      %v1870 = vpop.f32.mrb[0].mxu0
      %v1871 = vpop.f32.mrb[0].mxu0
      %v1872 = vadd.f32 %v1695, %v1871
      %v1873 = vpop.f32.mrb[0].mxu0
      %1874 = vmatprep.mubr.bf16.mxu0 0
      %1875 = vmatmul.mubr.bf16.gmra.mrb[0].mxu0 %v775
      %v1876 = vpop.f32.mrb[0].mxu0
      %v1877 = vadd.f32 %v1700, %v1876
      %v1878 = vpop.f32.mrb[0].mxu0
      %v1879 = vpop.f32.mrb[0].mxu0
      %v1880 = vadd.f32 %v1703, %v1879
      %v1881 = vpop.f32.mrb[0].mxu0
      %1882 = vmatprep.mubr.bf16.mxu0 0
      %1883 = vmatmul.mubr.bf16.gmra.mrb[0].mxu0 %v778
      %v1884 = vpop.f32.mrb[0].mxu0
      %v1885 = vadd.f32 %v1708, %v1884
      %v1886 = vpop.f32.mrb[0].mxu0
      %v1887 = vpop.f32.mrb[0].mxu0
      %v1888 = vadd.f32 %v1711, %v1887
      %v1889 = vpop.f32.mrb[0].mxu0
      %1890 = vmatprep.mubr.bf16.mxu0 0
      %1891 = vmatmul.mubr.bf16.gmra.mrb[0].mxu0 %v781
      %v1892 = vpop.f32.mrb[0].mxu0
      %v1893 = vadd.f32 %v1716, %v1892
      %v1894 = vpop.f32.mrb[0].mxu0
      %v1895 = vpop.f32.mrb[0].mxu0
      %v1896 = vadd.f32 %v1719, %v1895
      %v1897 = vpop.f32.mrb[0].mxu0
      %1898 = vmatprep.mubr.bf16.mxu0 0
      %1899 = vmatmul.mubr.bf16.gmra.mrb[0].mxu0 %v784
      %v1900 = vpop.f32.mrb[0].mxu0
      %v1901 = vadd.f32 %v1724, %v1900
      %v1902 = vpop.f32.mrb[0].mxu0
      %v1903 = vpop.f32.mrb[0].mxu0
      %v1904 = vadd.f32 %v1727, %v1903
      %v1905 = vpop.f32.mrb[0].mxu0
      %1906 = vmatprep.mubr.bf16.mxu0 0
      %1907 = vmatmul.mubr.bf16.gmra.mrb[0].mxu0 %v787
      %v1908 = vpop.f32.mrb[0].mxu0
      %v1909 = vadd.f32 %v1732, %v1908
      %v1910 = vpop.f32.mrb[0].mxu0
      %v1911 = vpop.f32.mrb[0].mxu0
      %v1912 = vadd.f32 %v1735, %v1911
      %v1913 = vpop.f32.mrb[0].mxu0
      %1914 = vmatprep.mubr.bf16.mxu0 0
      %1915 = vmatmul.mubr.bf16.gmra.mrb[0].mxu0 %v790
      %v1916 = vpop.f32.mrb[0].mxu0
      %v1917 = vadd.f32 %v1740, %v1916
      %v1918 = vpop.f32.mrb[0].mxu0
      %v1919 = vpop.f32.mrb[0].mxu0
      %v1920 = vadd.f32 %v1743, %v1919
      %v1921 = vpop.f32.mrb[0].mxu0
      %1922 = vmatprep.mubr.bf16.mxu0 0
      %1923 = vmatmul.mubr.bf16.gmra.mrb[0].mxu0 %v793
      %v1924 = vpop.f32.mrb[0].mxu0
      %v1925 = vadd.f32 %v1748, %v1924
      %v1926 = vpop.f32.mrb[0].mxu0
      %v1927 = vpop.f32.mrb[0].mxu0
      %v1928 = vadd.f32 %v1751, %v1927
      %v1929 = vpop.f32.mrb[0].mxu0
      %1930 = vdwg.mxu0
      %v1933 = vunpack.c.l.b16 %v339
      %v1934 = vunpack.c.l.b16 %v340
      %v1935 = vpack.c.b16 %v1934, %v1933
      %v1938 = vunpack.c.l.b16 %v341
      %v1939 = vpack.c.b16 %v1938, %v1938
      %v1941 = vshrl.u32 %v1935, 16
      %v1943 = vshll.u32 %v1935, 16
      %v1945 = vrot.slane %v1943, 1
      %v1946 = vor.u32 %v1941, %v1945
      %v1948 = vshll.u32 %v1939, 16
      %v1950 = vrot.slane %v1948, 1
      %v1951 = vsel %vm504, %v1946, %v1950
      %v1953 = vrot.slane %v1935, 1
      %v1954 = vrot.slane %v1939, 1
      %v1955 = vsel %vm739, %v1953, %v1954
      %s1957 = scalar_lea.vmem %s1, 384
      %v1958 = vld [vmem:[%s1957] sm:$0xf]
      %v1959 = vld [vmem:[%s1957 + $0x4] sm:$0xf]
      %v1960 = vld [vmem:[%s1957 + $0x8] sm:$0xf]
      %v1961 = vld [vmem:[%s1957 + $0xc] sm:$0xf]
      %v1962 = vld [vmem:[%s1957 + $0x10] sm:$0xf]
      %v1963 = vld [vmem:[%s1957 + $0x14] sm:$0xf]
      %v1964 = vld [vmem:[%s1957 + $0x18] sm:$0xf]
      %v1965 = vld [vmem:[%s1957 + $0x1c] sm:$0xf]
      %v1966 = vld [vmem:[%s1957 + $0x20] sm:$0xf]
      %v1967 = vld [vmem:[%s1957 + $0x24] sm:$0xf]
      %v1968 = vld [vmem:[%s1957 + $0x28] sm:$0xf]
      %v1969 = vld [vmem:[%s1957 + $0x2c] sm:$0xf]
      %v1970 = vld [vmem:[%s1957 + $0x30] sm:$0xf]
      %v1971 = vld [vmem:[%s1957 + $0x34] sm:$0xf]
      %v1972 = vld [vmem:[%s1957 + $0x38] sm:$0xf]
      %v1973 = vld [vmem:[%s1957 + $0x3c] sm:$0xf]
      %v1974 = vld [vmem:[%s1957 + $0x40] sm:$0xf]
      %v1975 = vld [vmem:[%s1957 + $0x44] sm:$0xf]
      %v1976 = vld [vmem:[%s1957 + $0x48] sm:$0xf]
      %v1977 = vld [vmem:[%s1957 + $0x4c] sm:$0xf]
      %v1978 = vld [vmem:[%s1957 + $0x50] sm:$0xf]
      %v1979 = vld [vmem:[%s1957 + $0x54] sm:$0xf]
      %v1980 = vld [vmem:[%s1957 + $0x58] sm:$0xf]
      %v1981 = vld [vmem:[%s1957 + $0x5c] sm:$0xf]
      %v1982 = vld [vmem:[%s1957 + $0x60] sm:$0xf]
      %v1983 = vld [vmem:[%s1957 + $0x64] sm:$0xf]
      %v1984 = vld [vmem:[%s1957 + $0x68] sm:$0xf]
      %v1985 = vld [vmem:[%s1957 + $0x6c] sm:$0xf]
      %v1986 = vld [vmem:[%s1957 + $0x70] sm:$0xf]
      %v1987 = vld [vmem:[%s1957 + $0x74] sm:$0xf]
      %v1988 = vld [vmem:[%s1957 + $0x78] sm:$0xf]
      %v1989 = vld [vmem:[%s1957 + $0x7c] sm:$0xf]
      %v1990 = vld [vmem:[%s1957 + $0x80] sm:$0xf]
      %v1991 = vld [vmem:[%s1957 + $0x84] sm:$0xf]
      %v1992 = vld [vmem:[%s1957 + $0x88] sm:$0xf]
      %v1993 = vld [vmem:[%s1957 + $0x8c] sm:$0xf]
      %v1994 = vld [vmem:[%s1957 + $0x90] sm:$0xf]
      %v1995 = vld [vmem:[%s1957 + $0x94] sm:$0xf]
      %v1996 = vld [vmem:[%s1957 + $0x98] sm:$0xf]
      %v1997 = vld [vmem:[%s1957 + $0x9c] sm:$0xf]
      %v1998 = vld [vmem:[%s1957 + $0xa0] sm:$0xf]
      %v1999 = vld [vmem:[%s1957 + $0xa4] sm:$0xf]
      %v2000 = vld [vmem:[%s1957 + $0xa8] sm:$0xf]
      %v2001 = vld [vmem:[%s1957 + $0xac] sm:$0xf]
      %v2002 = vld [vmem:[%s1957 + $0xb0] sm:$0xf]
      %v2003 = vld [vmem:[%s1957 + $0xb4] sm:$0xf]
      %v2004 = vld [vmem:[%s1957 + $0xb8] sm:$0xf]
      %v2005 = vld [vmem:[%s1957 + $0xbc] sm:$0xf]
      %v2054 = vunpack.c.l.b16 %v1958
      %v2055 = vunpack.c.l.b16 %v1959
      %v2056 = vunpack.c.l.b16 %v1960
      %v2057 = vunpack.c.l.b16 %v1961
      %v2058 = vunpack.c.l.b16 %v1962
      %v2059 = vunpack.c.l.b16 %v1963
      %v2060 = vunpack.c.l.b16 %v1964
      %v2061 = vunpack.c.l.b16 %v1965
      %v2062 = vunpack.c.l.b16 %v1966
      %v2063 = vunpack.c.l.b16 %v1967
      %v2064 = vunpack.c.l.b16 %v1968
      %v2065 = vunpack.c.l.b16 %v1969
      %v2066 = vunpack.c.l.b16 %v1970
      %v2067 = vunpack.c.l.b16 %v1971
      %v2068 = vunpack.c.l.b16 %v1972
      %v2069 = vunpack.c.l.b16 %v1973
      %v2070 = vunpack.c.l.b16 %v1974
      %v2071 = vunpack.c.l.b16 %v1975
      %v2072 = vunpack.c.l.b16 %v1976
      %v2073 = vunpack.c.l.b16 %v1977
      %v2074 = vunpack.c.l.b16 %v1978
      %v2075 = vunpack.c.l.b16 %v1979
      %v2076 = vunpack.c.l.b16 %v1980
      %v2077 = vunpack.c.l.b16 %v1981
      %v2078 = vunpack.c.l.b16 %v1982
      %v2079 = vunpack.c.l.b16 %v1983
      %v2080 = vunpack.c.l.b16 %v1984
      %v2081 = vunpack.c.l.b16 %v1985
      %v2082 = vunpack.c.l.b16 %v1986
      %v2083 = vunpack.c.l.b16 %v1987
      %v2084 = vunpack.c.l.b16 %v1988
      %v2085 = vunpack.c.l.b16 %v1989
      %v2086 = vunpack.c.l.b16 %v1990
      %v2087 = vunpack.c.l.b16 %v1991
      %v2088 = vunpack.c.l.b16 %v1992
      %v2089 = vunpack.c.l.b16 %v1993
      %v2090 = vunpack.c.l.b16 %v1994
      %v2091 = vunpack.c.l.b16 %v1995
      %v2092 = vunpack.c.l.b16 %v1996
      %v2093 = vunpack.c.l.b16 %v1997
      %v2094 = vunpack.c.l.b16 %v1998
      %v2095 = vunpack.c.l.b16 %v1999
      %v2096 = vunpack.c.l.b16 %v2000
      %v2097 = vunpack.c.l.b16 %v2001
      %v2098 = vunpack.c.l.b16 %v2002
      %v2099 = vunpack.c.l.b16 %v2003
      %v2100 = vunpack.c.l.b16 %v2004
      %v2101 = vunpack.c.l.b16 %v2005
      %v2102 = vpack.c.b16 %v2055, %v2054
      %v2103 = vpack.c.b16 %v2057, %v2056
      %v2104 = vpack.c.b16 %v2059, %v2058
      %v2105 = vpack.c.b16 %v2061, %v2060
      %v2106 = vpack.c.b16 %v2063, %v2062
      %v2107 = vpack.c.b16 %v2065, %v2064
      %v2108 = vpack.c.b16 %v2067, %v2066
      %v2109 = vpack.c.b16 %v2069, %v2068
      %v2110 = vpack.c.b16 %v2071, %v2070
      %v2111 = vpack.c.b16 %v2073, %v2072
      %v2112 = vpack.c.b16 %v2075, %v2074
      %v2113 = vpack.c.b16 %v2077, %v2076
      %v2114 = vpack.c.b16 %v2079, %v2078
      %v2115 = vpack.c.b16 %v2081, %v2080
      %v2116 = vpack.c.b16 %v2083, %v2082
      %v2117 = vpack.c.b16 %v2085, %v2084
      %v2118 = vpack.c.b16 %v2087, %v2086
      %v2119 = vpack.c.b16 %v2089, %v2088
      %v2120 = vpack.c.b16 %v2091, %v2090
      %v2121 = vpack.c.b16 %v2093, %v2092
      %v2122 = vpack.c.b16 %v2095, %v2094
      %v2123 = vpack.c.b16 %v2097, %v2096
      %v2124 = vpack.c.b16 %v2099, %v2098
      %v2125 = vpack.c.b16 %v2101, %v2100
      %2150 = vmatprep.subr.bf16.mxu0 0
      %2151 = vmatpush1.bf16.msra.mxu0 %v2102
      %2152 = vmatprep.subr.bf16.mxu0 0
      %2153 = vmatpush1.bf16.msra.mxu0 %v2103
      %2154 = vmatprep.subr.bf16.mxu0 0
      %2155 = vmatpush1.bf16.msra.mxu0 %v2104
      %2156 = vmatprep.subr.bf16.mxu0 0
      %2157 = vmatpush1.bf16.msra.mxu0 %v2105
      %2158 = vmatprep.subr.bf16.mxu0 0
      %2159 = vmatpush1.bf16.msra.mxu0 %v2106
      %2160 = vmatprep.subr.bf16.mxu0 0
      %2161 = vmatpush1.bf16.msra.mxu0 %v2107
      %2162 = vmatprep.subr.bf16.mxu0 0
      %2163 = vmatpush1.bf16.msra.mxu0 %v2108
      %2164 = vmatprep.subr.bf16.mxu0 0
      %2165 = vmatpush1.bf16.msra.mxu0 %v2109
      %2166 = vmatprep.subr.bf16.mxu0 0
      %2167 = vmatpush1.bf16.msra.mxu0 %v2110
      %2168 = vmatprep.subr.bf16.mxu0 0
      %2169 = vmatpush1.bf16.msra.mxu0 %v2111
      %2170 = vmatprep.subr.bf16.mxu0 0
      %2171 = vmatpush1.bf16.msra.mxu0 %v2112
      %2172 = vmatprep.subr.bf16.mxu0 0
      %2173 = vmatpush1.bf16.msra.mxu0 %v2113
      %2174 = vmatprep.subr.bf16.mxu0 0
      %2175 = vmatpush1.bf16.msra.mxu0 %v2114
      %2176 = vmatprep.subr.bf16.mxu0 0
      %2177 = vmatpush1.bf16.msra.mxu0 %v2115
      %2178 = vmatprep.subr.bf16.mxu0 0
      %2179 = vmatpush1.bf16.msra.mxu0 %v2116
      %2180 = vmatprep.subr.bf16.mxu0 0
      %2181 = vmatpush1.bf16.msra.mxu0 %v2117
      %2182 = vmatprep.mubr.bf16.mxu0 %v540
      %2183 = vmatmul.mubr.bf16.gmra.mrb[0].mxu0 %v416
      %v2184 = vpop.f32.mrb[0].mxu0
      %v2185 = vadd.f32 0.0, %v2184
      %v2186 = vpop.f32.mrb[0].mxu0
      %v2187 = vpop.f32.mrb[0].mxu0
      %v2188 = vadd.f32 0.0, %v2187
      %v2189 = vpop.f32.mrb[0].mxu0
      %2190 = vmatprep.mubr.bf16.mxu0 %v552
      %2191 = vmatmul.mubr.bf16.gmra.mrb[0].mxu0 %v417
      %v2192 = vpop.f32.mrb[0].mxu0
      %v2193 = vadd.f32 0.0, %v2192
      %v2194 = vpop.f32.mrb[0].mxu0
      %v2195 = vpop.f32.mrb[0].mxu0
      %v2196 = vadd.f32 0.0, %v2195
      %v2197 = vpop.f32.mrb[0].mxu0
      %2198 = vmatprep.mubr.bf16.mxu0 %v564
      %2199 = vmatmul.mubr.bf16.gmra.mrb[0].mxu0 %v418
      %v2200 = vpop.f32.mrb[0].mxu0
      %v2201 = vadd.f32 0.0, %v2200
      %v2202 = vpop.f32.mrb[0].mxu0
      %v2203 = vpop.f32.mrb[0].mxu0
      %v2204 = vadd.f32 0.0, %v2203
      %v2205 = vpop.f32.mrb[0].mxu0
      %2206 = vmatprep.mubr.bf16.mxu0 %v576
      %2207 = vmatmul.mubr.bf16.gmra.mrb[0].mxu0 %v419
      %v2208 = vpop.f32.mrb[0].mxu0
      %v2209 = vadd.f32 0.0, %v2208
      %v2210 = vpop.f32.mrb[0].mxu0
      %v2211 = vpop.f32.mrb[0].mxu0
      %v2212 = vadd.f32 0.0, %v2211
      %v2213 = vpop.f32.mrb[0].mxu0
      %2214 = vmatprep.mubr.bf16.mxu0 %v588
      %2215 = vmatmul.mubr.bf16.gmra.mrb[0].mxu0 %v420
      %v2216 = vpop.f32.mrb[0].mxu0
      %v2217 = vadd.f32 0.0, %v2216
      %v2218 = vpop.f32.mrb[0].mxu0
      %v2219 = vpop.f32.mrb[0].mxu0
      %v2220 = vadd.f32 0.0, %v2219
      %v2221 = vpop.f32.mrb[0].mxu0
      %2222 = vmatprep.mubr.bf16.mxu0 %v600
      %2223 = vmatmul.mubr.bf16.gmra.mrb[0].mxu0 %v421
      %v2224 = vpop.f32.mrb[0].mxu0
      %v2225 = vadd.f32 0.0, %v2224
      %v2226 = vpop.f32.mrb[0].mxu0
      %v2227 = vpop.f32.mrb[0].mxu0
      %v2228 = vadd.f32 0.0, %v2227
      %v2229 = vpop.f32.mrb[0].mxu0
      %2230 = vmatprep.mubr.bf16.mxu0 %v612
      %2231 = vmatmul.mubr.bf16.gmra.mrb[0].mxu0 %v422
      %v2232 = vpop.f32.mrb[0].mxu0
      %v2233 = vadd.f32 0.0, %v2232
      %v2234 = vpop.f32.mrb[0].mxu0
      %v2235 = vpop.f32.mrb[0].mxu0
      %v2236 = vadd.f32 0.0, %v2235
      %v2237 = vpop.f32.mrb[0].mxu0
      %2238 = vmatprep.mubr.bf16.mxu0 %v624
      %2239 = vmatmul.mubr.bf16.gmra.mrb[0].mxu0 %v423
      %v2240 = vpop.f32.mrb[0].mxu0
      %v2241 = vadd.f32 0.0, %v2240
      %v2242 = vpop.f32.mrb[0].mxu0
      %v2243 = vpop.f32.mrb[0].mxu0
      %v2244 = vadd.f32 0.0, %v2243
      %v2245 = vpop.f32.mrb[0].mxu0
      %2246 = vmatprep.mubr.bf16.mxu0 %v636
      %2247 = vmatmul.mubr.bf16.gmra.mrb[0].mxu0 %v424
      %v2248 = vpop.f32.mrb[0].mxu0
      %v2249 = vadd.f32 0.0, %v2248
      %v2250 = vpop.f32.mrb[0].mxu0
      %v2251 = vpop.f32.mrb[0].mxu0
      %v2252 = vadd.f32 0.0, %v2251
      %v2253 = vpop.f32.mrb[0].mxu0
      %2254 = vmatprep.mubr.bf16.mxu0 %v648
      %2255 = vmatmul.mubr.bf16.gmra.mrb[0].mxu0 %v425
      %v2256 = vpop.f32.mrb[0].mxu0
      %v2257 = vadd.f32 0.0, %v2256
      %v2258 = vpop.f32.mrb[0].mxu0
      %v2259 = vpop.f32.mrb[0].mxu0
      %v2260 = vadd.f32 0.0, %v2259
      %v2261 = vpop.f32.mrb[0].mxu0
      %2262 = vmatprep.mubr.bf16.mxu0 %v660
      %2263 = vmatmul.mubr.bf16.gmra.mrb[0].mxu0 %v426
      %v2264 = vpop.f32.mrb[0].mxu0
      %v2265 = vadd.f32 0.0, %v2264
      %v2266 = vpop.f32.mrb[0].mxu0
      %v2267 = vpop.f32.mrb[0].mxu0
      %v2268 = vadd.f32 0.0, %v2267
      %v2269 = vpop.f32.mrb[0].mxu0
      %2270 = vmatprep.mubr.bf16.mxu0 %v672
      %2271 = vmatmul.mubr.bf16.gmra.mrb[0].mxu0 %v427
      %v2272 = vpop.f32.mrb[0].mxu0
      %v2273 = vadd.f32 0.0, %v2272
      %v2274 = vpop.f32.mrb[0].mxu0
      %v2275 = vpop.f32.mrb[0].mxu0
      %v2276 = vadd.f32 0.0, %v2275
      %v2277 = vpop.f32.mrb[0].mxu0
      %2278 = vmatprep.mubr.bf16.mxu0 %v684
      %2279 = vmatmul.mubr.bf16.gmra.mrb[0].mxu0 %v428
      %v2280 = vpop.f32.mrb[0].mxu0
      %v2281 = vadd.f32 0.0, %v2280
      %v2282 = vpop.f32.mrb[0].mxu0
      %v2283 = vpop.f32.mrb[0].mxu0
      %v2284 = vadd.f32 0.0, %v2283
      %v2285 = vpop.f32.mrb[0].mxu0
      %2286 = vmatprep.mubr.bf16.mxu0 %v696
      %2287 = vmatmul.mubr.bf16.gmra.mrb[0].mxu0 %v429
      %v2288 = vpop.f32.mrb[0].mxu0
      %v2289 = vadd.f32 0.0, %v2288
      %v2290 = vpop.f32.mrb[0].mxu0
      %v2291 = vpop.f32.mrb[0].mxu0
      %v2292 = vadd.f32 0.0, %v2291
      %v2293 = vpop.f32.mrb[0].mxu0
      %2294 = vmatprep.mubr.bf16.mxu0 %v708
      %2295 = vmatmul.mubr.bf16.gmra.mrb[0].mxu0 %v430
      %v2296 = vpop.f32.mrb[0].mxu0
      %v2297 = vadd.f32 0.0, %v2296
      %v2298 = vpop.f32.mrb[0].mxu0
      %v2299 = vpop.f32.mrb[0].mxu0
      %v2300 = vadd.f32 0.0, %v2299
      %v2301 = vpop.f32.mrb[0].mxu0
      %2302 = vmatprep.mubr.bf16.mxu0 %v720
      %2303 = vmatmul.mubr.bf16.gmra.mrb[0].mxu0 %v431
      %v2304 = vpop.f32.mrb[0].mxu0
      %v2305 = vadd.f32 0.0, %v2304
      %v2306 = vpop.f32.mrb[0].mxu0
      %v2307 = vpop.f32.mrb[0].mxu0
      %v2308 = vadd.f32 0.0, %v2307
      %v2309 = vpop.f32.mrb[0].mxu0
      %2310 = vmatprep.mubr.bf16.mxu0 %v880
      %2311 = vmatmul.mubr.bf16.gmra.mrb[0].mxu0 %v864
      %v2312 = vpop.f32.mrb[0].mxu0
      %v2313 = vadd.f32 0.0, %v2312
      %v2314 = vpop.f32.mrb[0].mxu0
      %v2315 = vpop.f32.mrb[0].mxu0
      %v2316 = vadd.f32 0.0, %v2315
      %v2317 = vpop.f32.mrb[0].mxu0
      %2318 = vmatprep.mubr.bf16.mxu0 %v1951
      %2319 = vmatmul.mubr.bf16.gmra.mrb[0].mxu0 %v1935
      %v2320 = vpop.f32.mrb[0].mxu0
      %v2321 = vadd.f32 0.0, %v2320
      %v2322 = vpop.f32.mrb[0].mxu0
      %v2323 = vpop.f32.mrb[0].mxu0
      %v2324 = vadd.f32 0.0, %v2323
      %v2325 = vpop.f32.mrb[0].mxu0
      %2326 = vdwg.mxu0
      %2327 = vmatprep.subr.bf16.mxu0 0
      %2328 = vmatpush1.bf16.msra.mxu0 %v2118
      %2329 = vmatprep.subr.bf16.mxu0 0
      %2330 = vmatpush1.bf16.msra.mxu0 %v2119
      %2331 = vmatprep.subr.bf16.mxu0 0
      %2332 = vmatpush1.bf16.msra.mxu0 %v2120
      %2333 = vmatprep.subr.bf16.mxu0 0
      %2334 = vmatpush1.bf16.msra.mxu0 %v2121
      %2335 = vmatprep.subr.bf16.mxu0 0
      %2336 = vmatpush1.bf16.msra.mxu0 %v2122
      %2337 = vmatprep.subr.bf16.mxu0 0
      %2338 = vmatpush1.bf16.msra.mxu0 %v2123
      %2339 = vmatprep.subr.bf16.mxu0 0
      %2340 = vmatpush1.bf16.msra.mxu0 %v2124
      %2341 = vmatprep.subr.bf16.mxu0 0
      %2342 = vmatpush1.bf16.msra.mxu0 %v2125
      %2343 = vmatprep.subr.bf16.mxu0 0
      %2344 = vmatpush1.bf16.msra.mxu0 0
      %2345 = vmatprep.subr.bf16.mxu0 0
      %2346 = vmatpush1.bf16.msra.mxu0 0
      %2347 = vmatprep.subr.bf16.mxu0 0
      %2348 = vmatpush1.bf16.msra.mxu0 0
      %2349 = vmatprep.subr.bf16.mxu0 0
      %2350 = vmatpush1.bf16.msra.mxu0 0
      %2351 = vmatprep.subr.bf16.mxu0 0
      %2352 = vmatpush1.bf16.msra.mxu0 0
      %2353 = vmatprep.subr.bf16.mxu0 0
      %2354 = vmatpush1.bf16.msra.mxu0 0
      %2355 = vmatprep.subr.bf16.mxu0 0
      %2356 = vmatpush1.bf16.msra.mxu0 0
      %2357 = vmatprep.subr.bf16.mxu0 0
      %2358 = vmatpush1.bf16.msra.mxu0 0
      %2359 = vmatprep.mubr.bf16.mxu0 0
      %2360 = vmatmul.mubr.bf16.gmra.mrb[0].mxu0 %v748
      %v2361 = vpop.f32.mrb[0].mxu0
      %v2362 = vadd.f32 %v2185, %v2361
      %v2363 = vpop.f32.mrb[0].mxu0
      %v2364 = vpop.f32.mrb[0].mxu0
      %v2365 = vadd.f32 %v2188, %v2364
      %v2366 = vpop.f32.mrb[0].mxu0
      %2367 = vmatprep.mubr.bf16.mxu0 0
      %2368 = vmatmul.mubr.bf16.gmra.mrb[0].mxu0 %v751
      %v2369 = vpop.f32.mrb[0].mxu0
      %v2370 = vadd.f32 %v2193, %v2369
      %v2371 = vpop.f32.mrb[0].mxu0
      %v2372 = vpop.f32.mrb[0].mxu0
      %v2373 = vadd.f32 %v2196, %v2372
      %v2374 = vpop.f32.mrb[0].mxu0
      %2375 = vmatprep.mubr.bf16.mxu0 0
      %2376 = vmatmul.mubr.bf16.gmra.mrb[0].mxu0 %v754
      %v2377 = vpop.f32.mrb[0].mxu0
      %v2378 = vadd.f32 %v2201, %v2377
      %v2379 = vpop.f32.mrb[0].mxu0
      %v2380 = vpop.f32.mrb[0].mxu0
      %v2381 = vadd.f32 %v2204, %v2380
      %v2382 = vpop.f32.mrb[0].mxu0
      %2383 = vmatprep.mubr.bf16.mxu0 0
      %2384 = vmatmul.mubr.bf16.gmra.mrb[0].mxu0 %v757
      %v2385 = vpop.f32.mrb[0].mxu0
      %v2386 = vadd.f32 %v2209, %v2385
      %v2387 = vpop.f32.mrb[0].mxu0
      %v2388 = vpop.f32.mrb[0].mxu0
      %v2389 = vadd.f32 %v2212, %v2388
      %v2390 = vpop.f32.mrb[0].mxu0
      %2391 = vmatprep.mubr.bf16.mxu0 0
      %2392 = vmatmul.mubr.bf16.gmra.mrb[0].mxu0 %v760
      %v2393 = vpop.f32.mrb[0].mxu0
      %v2394 = vadd.f32 %v2217, %v2393
      %v2395 = vpop.f32.mrb[0].mxu0
      %v2396 = vpop.f32.mrb[0].mxu0
      %v2397 = vadd.f32 %v2220, %v2396
      %v2398 = vpop.f32.mrb[0].mxu0
      %2399 = vmatprep.mubr.bf16.mxu0 0
      %2400 = vmatmul.mubr.bf16.gmra.mrb[0].mxu0 %v763
      %v2401 = vpop.f32.mrb[0].mxu0
      %v2402 = vadd.f32 %v2225, %v2401
      %v2403 = vpop.f32.mrb[0].mxu0
      %v2404 = vpop.f32.mrb[0].mxu0
      %v2405 = vadd.f32 %v2228, %v2404
      %v2406 = vpop.f32.mrb[0].mxu0
      %2407 = vmatprep.mubr.bf16.mxu0 0
      %2408 = vmatmul.mubr.bf16.gmra.mrb[0].mxu0 %v766
      %v2409 = vpop.f32.mrb[0].mxu0
      %v2410 = vadd.f32 %v2233, %v2409
      %v2411 = vpop.f32.mrb[0].mxu0
      %v2412 = vpop.f32.mrb[0].mxu0
      %v2413 = vadd.f32 %v2236, %v2412
      %v2414 = vpop.f32.mrb[0].mxu0
      %2415 = vmatprep.mubr.bf16.mxu0 0
      %2416 = vmatmul.mubr.bf16.gmra.mrb[0].mxu0 %v769
      %v2417 = vpop.f32.mrb[0].mxu0
      %v2418 = vadd.f32 %v2241, %v2417
      %v2419 = vpop.f32.mrb[0].mxu0
      %v2420 = vpop.f32.mrb[0].mxu0
      %v2421 = vadd.f32 %v2244, %v2420
      %v2422 = vpop.f32.mrb[0].mxu0
      %2423 = vmatprep.mubr.bf16.mxu0 0
      %2424 = vmatmul.mubr.bf16.gmra.mrb[0].mxu0 %v772
      %v2425 = vpop.f32.mrb[0].mxu0
      %v2426 = vadd.f32 %v2249, %v2425
      %v2427 = vpop.f32.mrb[0].mxu0
      %v2428 = vpop.f32.mrb[0].mxu0
      %v2429 = vadd.f32 %v2252, %v2428
      %v2430 = vpop.f32.mrb[0].mxu0
      %2431 = vmatprep.mubr.bf16.mxu0 0
      %2432 = vmatmul.mubr.bf16.gmra.mrb[0].mxu0 %v775
      %v2433 = vpop.f32.mrb[0].mxu0
      %v2434 = vadd.f32 %v2257, %v2433
      %v2435 = vpop.f32.mrb[0].mxu0
      %v2436 = vpop.f32.mrb[0].mxu0
      %v2437 = vadd.f32 %v2260, %v2436
      %v2438 = vpop.f32.mrb[0].mxu0
      %2439 = vmatprep.mubr.bf16.mxu0 0
      %2440 = vmatmul.mubr.bf16.gmra.mrb[0].mxu0 %v778
      %v2441 = vpop.f32.mrb[0].mxu0
      %v2442 = vadd.f32 %v2265, %v2441
      %v2443 = vpop.f32.mrb[0].mxu0
      %v2444 = vpop.f32.mrb[0].mxu0
      %v2445 = vadd.f32 %v2268, %v2444
      %v2446 = vpop.f32.mrb[0].mxu0
      %2447 = vmatprep.mubr.bf16.mxu0 0
      %2448 = vmatmul.mubr.bf16.gmra.mrb[0].mxu0 %v781
      %v2449 = vpop.f32.mrb[0].mxu0
      %v2450 = vadd.f32 %v2273, %v2449
      %v2451 = vpop.f32.mrb[0].mxu0
      %v2452 = vpop.f32.mrb[0].mxu0
      %v2453 = vadd.f32 %v2276, %v2452
      %v2454 = vpop.f32.mrb[0].mxu0
      %2455 = vmatprep.mubr.bf16.mxu0 0
      %2456 = vmatmul.mubr.bf16.gmra.mrb[0].mxu0 %v784
      %v2457 = vpop.f32.mrb[0].mxu0
      %v2458 = vadd.f32 %v2281, %v2457
      %v2459 = vpop.f32.mrb[0].mxu0
      %v2460 = vpop.f32.mrb[0].mxu0
      %v2461 = vadd.f32 %v2284, %v2460
      %v2462 = vpop.f32.mrb[0].mxu0
      %2463 = vmatprep.mubr.bf16.mxu0 0
      %2464 = vmatmul.mubr.bf16.gmra.mrb[0].mxu0 %v787
      %v2465 = vpop.f32.mrb[0].mxu0
      %v2466 = vadd.f32 %v2289, %v2465
      %v2467 = vpop.f32.mrb[0].mxu0
      %v2468 = vpop.f32.mrb[0].mxu0
      %v2469 = vadd.f32 %v2292, %v2468
      %v2470 = vpop.f32.mrb[0].mxu0
      %2471 = vmatprep.mubr.bf16.mxu0 0
      %2472 = vmatmul.mubr.bf16.gmra.mrb[0].mxu0 %v790
      %v2473 = vpop.f32.mrb[0].mxu0
      %v2474 = vadd.f32 %v2297, %v2473
      %v2475 = vpop.f32.mrb[0].mxu0
      %v2476 = vpop.f32.mrb[0].mxu0
      %v2477 = vadd.f32 %v2300, %v2476
      %v2478 = vpop.f32.mrb[0].mxu0
      %2479 = vmatprep.mubr.bf16.mxu0 0
      %2480 = vmatmul.mubr.bf16.gmra.mrb[0].mxu0 %v793
      %v2481 = vpop.f32.mrb[0].mxu0
      %v2482 = vadd.f32 %v2305, %v2481
      %v2483 = vpop.f32.mrb[0].mxu0
      %v2484 = vpop.f32.mrb[0].mxu0
      %v2485 = vadd.f32 %v2308, %v2484
      %v2486 = vpop.f32.mrb[0].mxu0
      %2487 = vmatprep.mubr.bf16.mxu0 0
      %2488 = vmatmul.mubr.bf16.gmra.mrb[0].mxu0 %v884
      %v2489 = vpop.f32.mrb[0].mxu0
      %v2490 = vadd.f32 %v2313, %v2489
      %v2491 = vpop.f32.mrb[0].mxu0
      %v2492 = vpop.f32.mrb[0].mxu0
      %v2493 = vadd.f32 %v2316, %v2492
      %v2494 = vpop.f32.mrb[0].mxu0
      %2495 = vmatprep.mubr.bf16.mxu0 0
      %2496 = vmatmul.mubr.bf16.gmra.mrb[0].mxu0 %v1955
      %v2497 = vpop.f32.mrb[0].mxu0
      %v2498 = vadd.f32 %v2321, %v2497
      %v2499 = vpop.f32.mrb[0].mxu0
      %v2500 = vpop.f32.mrb[0].mxu0
      %v2501 = vadd.f32 %v2324, %v2500
      %v2502 = vpop.f32.mrb[0].mxu0
      %2503 = vdwg.mxu0
      %v2504 = vadd.f32 %v1789, %v2362
      %v2505 = vadd.f32 %v1792, %v2365
      %v2506 = vadd.f32 %v1797, %v2370
      %v2507 = vadd.f32 %v1800, %v2373
      %v2508 = vadd.f32 %v1805, %v2378
      %v2509 = vadd.f32 %v1808, %v2381
      %v2510 = vadd.f32 %v1813, %v2386
      %v2511 = vadd.f32 %v1816, %v2389
      %v2512 = vadd.f32 %v1821, %v2394
      %v2513 = vadd.f32 %v1824, %v2397
      %v2514 = vadd.f32 %v1829, %v2402
      %v2515 = vadd.f32 %v1832, %v2405
      %v2516 = vadd.f32 %v1837, %v2410
      %v2517 = vadd.f32 %v1840, %v2413
      %v2518 = vadd.f32 %v1845, %v2418
      %v2519 = vadd.f32 %v1848, %v2421
      %v2520 = vadd.f32 %v1853, %v2426
      %v2521 = vadd.f32 %v1856, %v2429
      %v2522 = vadd.f32 %v1861, %v2434
      %v2523 = vadd.f32 %v1864, %v2437
      %v2524 = vadd.f32 %v1869, %v2442
      %v2525 = vadd.f32 %v1872, %v2445
      %v2526 = vadd.f32 %v1877, %v2450
      %v2527 = vadd.f32 %v1880, %v2453
      %v2528 = vadd.f32 %v1885, %v2458
      %v2529 = vadd.f32 %v1888, %v2461
      %v2530 = vadd.f32 %v1893, %v2466
      %v2531 = vadd.f32 %v1896, %v2469
      %v2532 = vadd.f32 %v1901, %v2474
      %v2533 = vadd.f32 %v1904, %v2477
      %v2534 = vadd.f32 %v1909, %v2482
      %v2535 = vadd.f32 %v1912, %v2485
      %v2536 = vadd.f32 %v1917, %v2490
      %v2537 = vadd.f32 %v1920, %v2493
      %v2538 = vadd.f32 %v1925, %v2498
      %v2539 = vadd.f32 %v1928, %v2501
      %v2540 = vld [vmem:[%s2] sm:$0x1]
      %v2542 = vlaneseq
      %v2543 = vshrl.u32 %v2542, 7
      %v2544 = vsub.s32 0, %v2543
      %v2545 = vrot.slane %v2540, %v2544
      %v2547 = vadd.f32 %v2504, %v2545
      %v2548 = vadd.f32 %v2505, %v2545
      %v2549 = vadd.f32 %v2506, %v2545
      %v2550 = vadd.f32 %v2507, %v2545
      %v2551 = vadd.f32 %v2508, %v2545
      %v2552 = vadd.f32 %v2509, %v2545
      %v2553 = vadd.f32 %v2510, %v2545
      %v2554 = vadd.f32 %v2511, %v2545
      %v2555 = vadd.f32 %v2512, %v2545
      %v2556 = vadd.f32 %v2513, %v2545
      %v2557 = vadd.f32 %v2514, %v2545
      %v2558 = vadd.f32 %v2515, %v2545
      %v2559 = vadd.f32 %v2516, %v2545
      %v2560 = vadd.f32 %v2517, %v2545
      %v2561 = vadd.f32 %v2518, %v2545
      %v2562 = vadd.f32 %v2519, %v2545
      %v2563 = vadd.f32 %v2520, %v2545
      %v2564 = vadd.f32 %v2521, %v2545
      %v2565 = vadd.f32 %v2522, %v2545
      %v2566 = vadd.f32 %v2523, %v2545
      %v2567 = vadd.f32 %v2524, %v2545
      %v2568 = vadd.f32 %v2525, %v2545
      %v2569 = vadd.f32 %v2526, %v2545
      %v2570 = vadd.f32 %v2527, %v2545
      %v2571 = vadd.f32 %v2528, %v2545
      %v2572 = vadd.f32 %v2529, %v2545
      %v2573 = vadd.f32 %v2530, %v2545
      %v2574 = vadd.f32 %v2531, %v2545
      %v2575 = vadd.f32 %v2532, %v2545
      %v2576 = vadd.f32 %v2533, %v2545
      %v2577 = vadd.f32 %v2534, %v2545
      %v2578 = vadd.f32 %v2535, %v2545
      %v2579 = vadd.f32 %v2536, %v2545
      %v2580 = vadd.f32 %v2537, %v2545
      %v2581 = vadd.f32 %v2538, %v2545
      %v2582 = vadd.f32 %v2539, %v2545
      %vm2583 = vcmp.ge.f32.partialorder %v2547, 0.0
      %vm2584 = vcmp.ge.f32.partialorder %v2548, 0.0
      %vm2585 = vcmp.ge.f32.partialorder %v2549, 0.0
      %vm2586 = vcmp.ge.f32.partialorder %v2550, 0.0
      %vm2587 = vcmp.ge.f32.partialorder %v2551, 0.0
      %vm2588 = vcmp.ge.f32.partialorder %v2552, 0.0
      %vm2589 = vcmp.ge.f32.partialorder %v2553, 0.0
      %vm2590 = vcmp.ge.f32.partialorder %v2554, 0.0
      %vm2591 = vcmp.ge.f32.partialorder %v2555, 0.0
      %vm2592 = vcmp.ge.f32.partialorder %v2556, 0.0
      %vm2593 = vcmp.ge.f32.partialorder %v2557, 0.0
      %vm2594 = vcmp.ge.f32.partialorder %v2558, 0.0
      %vm2595 = vcmp.ge.f32.partialorder %v2559, 0.0
      %vm2596 = vcmp.ge.f32.partialorder %v2560, 0.0
      %vm2597 = vcmp.ge.f32.partialorder %v2561, 0.0
      %vm2598 = vcmp.ge.f32.partialorder %v2562, 0.0
      %vm2599 = vcmp.ge.f32.partialorder %v2563, 0.0
      %vm2600 = vcmp.ge.f32.partialorder %v2564, 0.0
      %vm2601 = vcmp.ge.f32.partialorder %v2565, 0.0
      %vm2602 = vcmp.ge.f32.partialorder %v2566, 0.0
      %vm2603 = vcmp.ge.f32.partialorder %v2567, 0.0
      %vm2604 = vcmp.ge.f32.partialorder %v2568, 0.0
      %vm2605 = vcmp.ge.f32.partialorder %v2569, 0.0
      %vm2606 = vcmp.ge.f32.partialorder %v2570, 0.0
      %vm2607 = vcmp.ge.f32.partialorder %v2571, 0.0
      %vm2608 = vcmp.ge.f32.partialorder %v2572, 0.0
      %vm2609 = vcmp.ge.f32.partialorder %v2573, 0.0
      %vm2610 = vcmp.ge.f32.partialorder %v2574, 0.0
      %vm2611 = vcmp.ge.f32.partialorder %v2575, 0.0
      %vm2612 = vcmp.ge.f32.partialorder %v2576, 0.0
      %vm2613 = vcmp.ge.f32.partialorder %v2577, 0.0
      %vm2614 = vcmp.ge.f32.partialorder %v2578, 0.0
      %vm2615 = vcmp.ge.f32.partialorder %v2579, 0.0
      %vm2616 = vcmp.ge.f32.partialorder %v2580, 0.0
      %vm2617 = vcmp.ge.f32.partialorder %v2581, 0.0
      %vm2618 = vcmp.ge.f32.partialorder %v2582, 0.0
      %v2619 = vld [vmem:[%s3] sm:$0x1]
      %v2621 = vlaneseq
      %v2622 = vshrl.u32 %v2621, 7
      %v2623 = vsub.s32 0, %v2622
      %v2624 = vrot.slane %v2619, %v2623
      %v2626 = vmul.f32 %v2624, %v2547
      %v2627 = vmul.f32 %v2624, %v2548
      %v2628 = vmul.f32 %v2624, %v2549
      %v2629 = vmul.f32 %v2624, %v2550
      %v2630 = vmul.f32 %v2624, %v2551
      %v2631 = vmul.f32 %v2624, %v2552
      %v2632 = vmul.f32 %v2624, %v2553
      %v2633 = vmul.f32 %v2624, %v2554
      %v2634 = vmul.f32 %v2624, %v2555
      %v2635 = vmul.f32 %v2624, %v2556
      %v2636 = vmul.f32 %v2624, %v2557
      %v2637 = vmul.f32 %v2624, %v2558
      %v2638 = vmul.f32 %v2624, %v2559
      %v2639 = vmul.f32 %v2624, %v2560
      %v2640 = vmul.f32 %v2624, %v2561
      %v2641 = vmul.f32 %v2624, %v2562
      %v2642 = vmul.f32 %v2624, %v2563
      %v2643 = vmul.f32 %v2624, %v2564
      %v2644 = vmul.f32 %v2624, %v2565
      %v2645 = vmul.f32 %v2624, %v2566
      %v2646 = vmul.f32 %v2624, %v2567
      %v2647 = vmul.f32 %v2624, %v2568
      %v2648 = vmul.f32 %v2624, %v2569
      %v2649 = vmul.f32 %v2624, %v2570
      %v2650 = vmul.f32 %v2624, %v2571
      %v2651 = vmul.f32 %v2624, %v2572
      %v2652 = vmul.f32 %v2624, %v2573
      %v2653 = vmul.f32 %v2624, %v2574
      %v2654 = vmul.f32 %v2624, %v2575
      %v2655 = vmul.f32 %v2624, %v2576
      %v2656 = vmul.f32 %v2624, %v2577
      %v2657 = vmul.f32 %v2624, %v2578
      %v2658 = vmul.f32 %v2624, %v2579
      %v2659 = vmul.f32 %v2624, %v2580
      %v2660 = vmul.f32 %v2624, %v2581
      %v2661 = vmul.f32 %v2624, %v2582
      %v2662 = vsel %vm2583, %v2547, %v2626
      %v2663 = vsel %vm2584, %v2548, %v2627
      %v2664 = vsel %vm2585, %v2549, %v2628
      %v2665 = vsel %vm2586, %v2550, %v2629
      %v2666 = vsel %vm2587, %v2551, %v2630
      %v2667 = vsel %vm2588, %v2552, %v2631
      %v2668 = vsel %vm2589, %v2553, %v2632
      %v2669 = vsel %vm2590, %v2554, %v2633
      %v2670 = vsel %vm2591, %v2555, %v2634
      %v2671 = vsel %vm2592, %v2556, %v2635
      %v2672 = vsel %vm2593, %v2557, %v2636
      %v2673 = vsel %vm2594, %v2558, %v2637
      %v2674 = vsel %vm2595, %v2559, %v2638
      %v2675 = vsel %vm2596, %v2560, %v2639
      %v2676 = vsel %vm2597, %v2561, %v2640
      %v2677 = vsel %vm2598, %v2562, %v2641
      %v2678 = vsel %vm2599, %v2563, %v2642
      %v2679 = vsel %vm2600, %v2564, %v2643
      %v2680 = vsel %vm2601, %v2565, %v2644
      %v2681 = vsel %vm2602, %v2566, %v2645
      %v2682 = vsel %vm2603, %v2567, %v2646
      %v2683 = vsel %vm2604, %v2568, %v2647
      %v2684 = vsel %vm2605, %v2569, %v2648
      %v2685 = vsel %vm2606, %v2570, %v2649
      %v2686 = vsel %vm2607, %v2571, %v2650
      %v2687 = vsel %vm2608, %v2572, %v2651
      %v2688 = vsel %vm2609, %v2573, %v2652
      %v2689 = vsel %vm2610, %v2574, %v2653
      %v2690 = vsel %vm2611, %v2575, %v2654
      %v2691 = vsel %vm2612, %v2576, %v2655
      %v2692 = vsel %vm2613, %v2577, %v2656
      %v2693 = vsel %vm2614, %v2578, %v2657
      %v2694 = vsel %vm2615, %v2579, %v2658
      %v2695 = vsel %vm2616, %v2580, %v2659
      %v2696 = vsel %vm2617, %v2581, %v2660
      %v2697 = vsel %vm2618, %v2582, %v2661
      %v2698 = vpack.c.bf16 %v2663, %v2662
      %v2699 = vpack.c.bf16 %v2665, %v2664
      %v2700 = vpack.c.bf16 %v2667, %v2666
      %v2701 = vpack.c.bf16 %v2669, %v2668
      %v2702 = vpack.c.bf16 %v2671, %v2670
      %v2703 = vpack.c.bf16 %v2673, %v2672
      %v2704 = vpack.c.bf16 %v2675, %v2674
      %v2705 = vpack.c.bf16 %v2677, %v2676
      %v2706 = vpack.c.bf16 %v2679, %v2678
      %v2707 = vpack.c.bf16 %v2681, %v2680
      %v2708 = vpack.c.bf16 %v2683, %v2682
      %v2709 = vpack.c.bf16 %v2685, %v2684
      %v2710 = vpack.c.bf16 %v2687, %v2686
      %v2711 = vpack.c.bf16 %v2689, %v2688
      %v2712 = vpack.c.bf16 %v2691, %v2690
      %v2713 = vpack.c.bf16 %v2693, %v2692
      %v2714 = vpack.c.bf16 %v2695, %v2694
      %v2715 = vpack.c.bf16 %v2697, %v2696
      %v2734 = vunpack.c.l.b16 %v2698
      %v2735 = vunpack.c.h.b16 %v2698
      %v2736 = vunpack.c.l.b16 %v2699
      %v2737 = vunpack.c.h.b16 %v2699
      %v2738 = vunpack.c.l.b16 %v2700
      %v2739 = vunpack.c.h.b16 %v2700
      %v2740 = vunpack.c.l.b16 %v2701
      %v2741 = vunpack.c.h.b16 %v2701
      %v2742 = vunpack.c.l.b16 %v2702
      %v2743 = vunpack.c.h.b16 %v2702
      %v2744 = vunpack.c.l.b16 %v2703
      %v2745 = vunpack.c.h.b16 %v2703
      %v2746 = vunpack.c.l.b16 %v2704
      %v2747 = vunpack.c.h.b16 %v2704
      %v2748 = vunpack.c.l.b16 %v2705
      %v2749 = vunpack.c.h.b16 %v2705
      %v2750 = vunpack.c.l.b16 %v2706
      %v2751 = vunpack.c.h.b16 %v2706
      %v2752 = vunpack.c.l.b16 %v2707
      %v2753 = vunpack.c.h.b16 %v2707
      %v2754 = vunpack.c.l.b16 %v2708
      %v2755 = vunpack.c.h.b16 %v2708
      %v2756 = vunpack.c.l.b16 %v2709
      %v2757 = vunpack.c.h.b16 %v2709
      %v2758 = vunpack.c.l.b16 %v2710
      %v2759 = vunpack.c.h.b16 %v2710
      %v2760 = vunpack.c.l.b16 %v2711
      %v2761 = vunpack.c.h.b16 %v2711
      %v2762 = vunpack.c.l.b16 %v2712
      %v2763 = vunpack.c.h.b16 %v2712
      %v2764 = vunpack.c.l.b16 %v2713
      %v2765 = vunpack.c.h.b16 %v2713
      %v2766 = vunpack.c.l.b16 %v2714
      %v2767 = vunpack.c.h.b16 %v2714
      %v2768 = vunpack.c.l.b16 %v2715
      %v2769 = vunpack.c.h.b16 %v2715
      %v2770 = vpack.c.b16 %v2734, %v2734
      %v2771 = vpack.c.b16 %v2735, %v2735
      %v2772 = vpack.c.b16 %v2736, %v2736
      %v2773 = vpack.c.b16 %v2737, %v2737
      %v2774 = vpack.c.b16 %v2738, %v2738
      %v2775 = vpack.c.b16 %v2739, %v2739
      %v2776 = vpack.c.b16 %v2740, %v2740
      %v2777 = vpack.c.b16 %v2741, %v2741
      %v2778 = vpack.c.b16 %v2742, %v2742
      %v2779 = vpack.c.b16 %v2743, %v2743
      %v2780 = vpack.c.b16 %v2744, %v2744
      %v2781 = vpack.c.b16 %v2745, %v2745
      %v2782 = vpack.c.b16 %v2746, %v2746
      %v2783 = vpack.c.b16 %v2747, %v2747
      %v2784 = vpack.c.b16 %v2748, %v2748
      %v2785 = vpack.c.b16 %v2749, %v2749
      %v2786 = vpack.c.b16 %v2750, %v2750
      %v2787 = vpack.c.b16 %v2751, %v2751
      %v2788 = vpack.c.b16 %v2752, %v2752
      %v2789 = vpack.c.b16 %v2753, %v2753
      %v2790 = vpack.c.b16 %v2754, %v2754
      %v2791 = vpack.c.b16 %v2755, %v2755
      %v2792 = vpack.c.b16 %v2756, %v2756
      %v2793 = vpack.c.b16 %v2757, %v2757
      %v2794 = vpack.c.b16 %v2758, %v2758
      %v2795 = vpack.c.b16 %v2759, %v2759
      %v2796 = vpack.c.b16 %v2760, %v2760
      %v2797 = vpack.c.b16 %v2761, %v2761
      %v2798 = vpack.c.b16 %v2762, %v2762
      %v2799 = vpack.c.b16 %v2763, %v2763
      %v2800 = vpack.c.b16 %v2764, %v2764
      %v2801 = vpack.c.b16 %v2765, %v2765
      %v2802 = vpack.c.b16 %v2766, %v2766
      %v2803 = vpack.c.b16 %v2767, %v2767
      %v2804 = vpack.c.b16 %v2768, %v2768
      %v2805 = vpack.c.b16 %v2769, %v2769
      %vm2806 = vsmask.f32 256
      %vm2807 = vsmask.f32 4368
      %vm2808 = vmor %vm2806, %vm2807
      %v2810 = vshrl.u32 %v2770, 16
      %v2812 = vrot.slane %v2810, 7
      %v2813 = vshll.u32 %v2770, 16
      %v2815 = vor.u32 %v2812, %v2813
      %v2816 = vrot.slane %v2812, 4
      %v2818 = vshrl.u32 %v2771, 16
      %v2820 = vrot.slane %v2818, 7
      %v2821 = vshll.u32 %v2771, 16
      %v2823 = vor.u32 %v2820, %v2821
      %v2824 = vsel %vm2808, %v2816, %v2823
      %v2825 = vrot.slane %v2820, 4
      %v2827 = vshrl.u32 %v2772, 16
      %v2829 = vrot.slane %v2827, 7
      %v2830 = vshll.u32 %v2772, 16
      %v2832 = vor.u32 %v2829, %v2830
      %v2833 = vrot.slane %v2829, 4
      %v2835 = vshrl.u32 %v2773, 16
      %v2837 = vrot.slane %v2835, 7
      %v2838 = vshll.u32 %v2773, 16
      %v2840 = vor.u32 %v2837, %v2838
      %v2841 = vsel %vm2808, %v2833, %v2840
      %v2842 = vrot.slane %v2837, 4
      %v2844 = vshrl.u32 %v2774, 16
      %v2846 = vrot.slane %v2844, 7
      %v2847 = vshll.u32 %v2774, 16
      %v2849 = vor.u32 %v2846, %v2847
      %v2850 = vrot.slane %v2846, 4
      %v2852 = vshrl.u32 %v2775, 16
      %v2854 = vrot.slane %v2852, 7
      %v2855 = vshll.u32 %v2775, 16
      %v2857 = vor.u32 %v2854, %v2855
      %v2858 = vsel %vm2808, %v2850, %v2857
      %v2859 = vrot.slane %v2854, 4
      %v2861 = vshrl.u32 %v2776, 16
      %v2863 = vrot.slane %v2861, 7
      %v2864 = vshll.u32 %v2776, 16
      %v2866 = vor.u32 %v2863, %v2864
      %v2867 = vrot.slane %v2863, 4
      %v2869 = vshrl.u32 %v2777, 16
      %v2871 = vrot.slane %v2869, 7
      %v2872 = vshll.u32 %v2777, 16
      %v2874 = vor.u32 %v2871, %v2872
      %v2875 = vsel %vm2808, %v2867, %v2874
      %v2876 = vrot.slane %v2871, 4
      %v2878 = vshrl.u32 %v2778, 16
      %v2880 = vrot.slane %v2878, 7
      %v2881 = vshll.u32 %v2778, 16
      %v2883 = vor.u32 %v2880, %v2881
      %v2884 = vrot.slane %v2880, 4
      %v2886 = vshrl.u32 %v2779, 16
      %v2888 = vrot.slane %v2886, 7
      %v2889 = vshll.u32 %v2779, 16
      %v2891 = vor.u32 %v2888, %v2889
      %v2892 = vsel %vm2808, %v2884, %v2891
      %v2893 = vrot.slane %v2888, 4
      %v2895 = vshrl.u32 %v2780, 16
      %v2897 = vrot.slane %v2895, 7
      %v2898 = vshll.u32 %v2780, 16
      %v2900 = vor.u32 %v2897, %v2898
      %v2901 = vrot.slane %v2897, 4
      %v2903 = vshrl.u32 %v2781, 16
      %v2905 = vrot.slane %v2903, 7
      %v2906 = vshll.u32 %v2781, 16
      %v2908 = vor.u32 %v2905, %v2906
      %v2909 = vsel %vm2808, %v2901, %v2908
      %v2910 = vrot.slane %v2905, 4
      %v2912 = vshrl.u32 %v2782, 16
      %v2914 = vrot.slane %v2912, 7
      %v2915 = vshll.u32 %v2782, 16
      %v2917 = vor.u32 %v2914, %v2915
      %v2918 = vrot.slane %v2914, 4
      %v2920 = vshrl.u32 %v2783, 16
      %v2922 = vrot.slane %v2920, 7
      %v2923 = vshll.u32 %v2783, 16
      %v2925 = vor.u32 %v2922, %v2923
      %v2926 = vsel %vm2808, %v2918, %v2925
      %v2927 = vrot.slane %v2922, 4
      %v2929 = vshrl.u32 %v2784, 16
      %v2931 = vrot.slane %v2929, 7
      %v2932 = vshll.u32 %v2784, 16
      %v2934 = vor.u32 %v2931, %v2932
      %v2935 = vrot.slane %v2931, 4
      %v2937 = vshrl.u32 %v2785, 16
      %v2939 = vrot.slane %v2937, 7
      %v2940 = vshll.u32 %v2785, 16
      %v2942 = vor.u32 %v2939, %v2940
      %v2943 = vsel %vm2808, %v2935, %v2942
      %v2944 = vrot.slane %v2939, 4
      %v2946 = vshrl.u32 %v2786, 16
      %v2948 = vrot.slane %v2946, 7
      %v2949 = vshll.u32 %v2786, 16
      %v2951 = vor.u32 %v2948, %v2949
      %v2952 = vrot.slane %v2948, 4
      %v2954 = vshrl.u32 %v2787, 16
      %v2956 = vrot.slane %v2954, 7
      %v2957 = vshll.u32 %v2787, 16
      %v2959 = vor.u32 %v2956, %v2957
      %v2960 = vsel %vm2808, %v2952, %v2959
      %v2961 = vrot.slane %v2956, 4
      %v2963 = vshrl.u32 %v2788, 16
      %v2965 = vrot.slane %v2963, 7
      %v2966 = vshll.u32 %v2788, 16
      %v2968 = vor.u32 %v2965, %v2966
      %v2969 = vrot.slane %v2965, 4
      %v2971 = vshrl.u32 %v2789, 16
      %v2973 = vrot.slane %v2971, 7
      %v2974 = vshll.u32 %v2789, 16
      %v2976 = vor.u32 %v2973, %v2974
      %v2977 = vsel %vm2808, %v2969, %v2976
      %v2978 = vrot.slane %v2973, 4
      %v2980 = vshrl.u32 %v2790, 16
      %v2982 = vrot.slane %v2980, 7
      %v2983 = vshll.u32 %v2790, 16
      %v2985 = vor.u32 %v2982, %v2983
      %v2986 = vrot.slane %v2982, 4
      %v2988 = vshrl.u32 %v2791, 16
      %v2990 = vrot.slane %v2988, 7
      %v2991 = vshll.u32 %v2791, 16
      %v2993 = vor.u32 %v2990, %v2991
      %v2994 = vsel %vm2808, %v2986, %v2993
      %v2995 = vrot.slane %v2990, 4
      %v2997 = vshrl.u32 %v2792, 16
      %v2999 = vrot.slane %v2997, 7
      %v3000 = vshll.u32 %v2792, 16
      %v3002 = vor.u32 %v2999, %v3000
      %v3003 = vrot.slane %v2999, 4
      %v3005 = vshrl.u32 %v2793, 16
      %v3007 = vrot.slane %v3005, 7
      %v3008 = vshll.u32 %v2793, 16
      %v3010 = vor.u32 %v3007, %v3008
      %v3011 = vsel %vm2808, %v3003, %v3010
      %v3012 = vrot.slane %v3007, 4
      %v3014 = vshrl.u32 %v2794, 16
      %v3016 = vrot.slane %v3014, 7
      %v3017 = vshll.u32 %v2794, 16
      %v3019 = vor.u32 %v3016, %v3017
      %v3020 = vrot.slane %v3016, 4
      %v3022 = vshrl.u32 %v2795, 16
      %v3024 = vrot.slane %v3022, 7
      %v3025 = vshll.u32 %v2795, 16
      %v3027 = vor.u32 %v3024, %v3025
      %v3028 = vsel %vm2808, %v3020, %v3027
      %v3029 = vrot.slane %v3024, 4
      %v3031 = vshrl.u32 %v2796, 16
      %v3033 = vrot.slane %v3031, 7
      %v3034 = vshll.u32 %v2796, 16
      %v3036 = vor.u32 %v3033, %v3034
      %v3037 = vrot.slane %v3033, 4
      %v3039 = vshrl.u32 %v2797, 16
      %v3041 = vrot.slane %v3039, 7
      %v3042 = vshll.u32 %v2797, 16
      %v3044 = vor.u32 %v3041, %v3042
      %v3045 = vsel %vm2808, %v3037, %v3044
      %v3046 = vrot.slane %v3041, 4
      %v3048 = vshrl.u32 %v2798, 16
      %v3050 = vrot.slane %v3048, 7
      %v3051 = vshll.u32 %v2798, 16
      %v3053 = vor.u32 %v3050, %v3051
      %v3054 = vrot.slane %v3050, 4
      %v3056 = vshrl.u32 %v2799, 16
      %v3058 = vrot.slane %v3056, 7
      %v3059 = vshll.u32 %v2799, 16
      %v3061 = vor.u32 %v3058, %v3059
      %v3062 = vsel %vm2808, %v3054, %v3061
      %v3063 = vrot.slane %v3058, 4
      %v3065 = vshrl.u32 %v2800, 16
      %v3067 = vrot.slane %v3065, 7
      %v3068 = vshll.u32 %v2800, 16
      %v3070 = vor.u32 %v3067, %v3068
      %v3071 = vrot.slane %v3067, 4
      %v3073 = vshrl.u32 %v2801, 16
      %v3075 = vrot.slane %v3073, 7
      %v3076 = vshll.u32 %v2801, 16
      %v3078 = vor.u32 %v3075, %v3076
      %v3079 = vsel %vm2808, %v3071, %v3078
      %v3080 = vrot.slane %v3075, 4
      %v3082 = vshrl.u32 %v2802, 16
      %v3084 = vrot.slane %v3082, 7
      %v3085 = vshll.u32 %v2802, 16
      %v3087 = vor.u32 %v3084, %v3085
      %v3088 = vrot.slane %v3084, 4
      %v3090 = vshrl.u32 %v2803, 16
      %v3092 = vrot.slane %v3090, 7
      %v3093 = vshll.u32 %v2803, 16
      %v3095 = vor.u32 %v3092, %v3093
      %v3096 = vsel %vm2808, %v3088, %v3095
      %v3097 = vrot.slane %v3092, 4
      %v3099 = vshrl.u32 %v2804, 16
      %v3101 = vrot.slane %v3099, 7
      %v3102 = vshll.u32 %v2804, 16
      %v3104 = vor.u32 %v3101, %v3102
      %v3105 = vrot.slane %v3101, 4
      %v3107 = vshrl.u32 %v2805, 16
      %v3109 = vrot.slane %v3107, 7
      %v3110 = vshll.u32 %v2805, 16
      %v3112 = vor.u32 %v3109, %v3110
      %v3113 = vsel %vm2808, %v3105, %v3112
      %v3114 = vrot.slane %v3109, 4
      %vm3169 = vcmask 1043456
      %vm3170 = vsmask.f32 7938
      %vm3171 = vmand %vm3169, %vm3170
      %v3172 = vld [vmem:[#allocation2] sm:$0xf]
      %v3173 = vsel %vm3171, %v2815, %v3172
      %3174 = vst [vmem:[#allocation2] sm:$0xf] %v3173
      %3175 = vst [vmem:[#allocation2 + $0x4] sm:$0xf] %v2824
      %vm3176 = vcmask 1040384
      %vm3177 = vmand %vm3176, %vm2806
      %v3178 = vld [vmem:[#allocation2 + $0x8] sm:$0x1]
      %v3179 = vsel %vm3177, %v2825, %v3178
      %3180 = vst [vmem:[#allocation2 + $0x8] sm:$0x1] %v3179
      %v3181 = vld [vmem:[#allocation2 + $0xc] sm:$0xf]
      %v3182 = vsel %vm3171, %v2832, %v3181
      %3183 = vst [vmem:[#allocation2 + $0xc] sm:$0xf] %v3182
      %3184 = vst [vmem:[#allocation2 + $0x10] sm:$0xf] %v2841
      %v3185 = vld [vmem:[#allocation2 + $0x14] sm:$0x1]
      %v3186 = vsel %vm3177, %v2842, %v3185
      %3187 = vst [vmem:[#allocation2 + $0x14] sm:$0x1] %v3186
      %v3188 = vld [vmem:[#allocation2 + $0x18] sm:$0xf]
      %v3189 = vsel %vm3171, %v2849, %v3188
      %3190 = vst [vmem:[#allocation2 + $0x18] sm:$0xf] %v3189
      %3191 = vst [vmem:[#allocation2 + $0x1c] sm:$0xf] %v2858
      %v3192 = vld [vmem:[#allocation2 + $0x20] sm:$0x1]
      %v3193 = vsel %vm3177, %v2859, %v3192
      %3194 = vst [vmem:[#allocation2 + $0x20] sm:$0x1] %v3193
      %v3195 = vld [vmem:[#allocation2 + $0x24] sm:$0xf]
      %v3196 = vsel %vm3171, %v2866, %v3195
      %3197 = vst [vmem:[#allocation2 + $0x24] sm:$0xf] %v3196
      %3198 = vst [vmem:[#allocation2 + $0x28] sm:$0xf] %v2875
      %v3199 = vld [vmem:[#allocation2 + $0x2c] sm:$0x1]
      %v3200 = vsel %vm3177, %v2876, %v3199
      %3201 = vst [vmem:[#allocation2 + $0x2c] sm:$0x1] %v3200
      %v3202 = vld [vmem:[#allocation2 + $0x30] sm:$0xf]
      %v3203 = vsel %vm3171, %v2883, %v3202
      %3204 = vst [vmem:[#allocation2 + $0x30] sm:$0xf] %v3203
      %3205 = vst [vmem:[#allocation2 + $0x34] sm:$0xf] %v2892
      %v3206 = vld [vmem:[#allocation2 + $0x38] sm:$0x1]
      %v3207 = vsel %vm3177, %v2893, %v3206
      %3208 = vst [vmem:[#allocation2 + $0x38] sm:$0x1] %v3207
      %v3209 = vld [vmem:[#allocation2 + $0x3c] sm:$0xf]
      %v3210 = vsel %vm3171, %v2900, %v3209
      %3211 = vst [vmem:[#allocation2 + $0x3c] sm:$0xf] %v3210
      %3212 = vst [vmem:[#allocation2 + $0x40] sm:$0xf] %v2909
      %v3213 = vld [vmem:[#allocation2 + $0x44] sm:$0x1]
      %v3214 = vsel %vm3177, %v2910, %v3213
      %3215 = vst [vmem:[#allocation2 + $0x44] sm:$0x1] %v3214
      %v3216 = vld [vmem:[#allocation2 + $0x48] sm:$0xf]
      %v3217 = vsel %vm3171, %v2917, %v3216
      %3218 = vst [vmem:[#allocation2 + $0x48] sm:$0xf] %v3217
      %3219 = vst [vmem:[#allocation2 + $0x4c] sm:$0xf] %v2926
      %v3220 = vld [vmem:[#allocation2 + $0x50] sm:$0x1]
      %v3221 = vsel %vm3177, %v2927, %v3220
      %3222 = vst [vmem:[#allocation2 + $0x50] sm:$0x1] %v3221
      %v3223 = vld [vmem:[#allocation2 + $0x54] sm:$0xf]
      %v3224 = vsel %vm3171, %v2934, %v3223
      %3225 = vst [vmem:[#allocation2 + $0x54] sm:$0xf] %v3224
      %3226 = vst [vmem:[#allocation2 + $0x58] sm:$0xf] %v2943
      %v3227 = vld [vmem:[#allocation2 + $0x5c] sm:$0x1]
      %v3228 = vsel %vm3177, %v2944, %v3227
      %3229 = vst [vmem:[#allocation2 + $0x5c] sm:$0x1] %v3228
      %v3230 = vld [vmem:[#allocation2 + $0x60] sm:$0xf]
      %v3231 = vsel %vm3171, %v2951, %v3230
      %3232 = vst [vmem:[#allocation2 + $0x60] sm:$0xf] %v3231
      %3233 = vst [vmem:[#allocation2 + $0x64] sm:$0xf] %v2960
      %v3234 = vld [vmem:[#allocation2 + $0x68] sm:$0x1]
      %v3235 = vsel %vm3177, %v2961, %v3234
      %3236 = vst [vmem:[#allocation2 + $0x68] sm:$0x1] %v3235
      %v3237 = vld [vmem:[#allocation2 + $0x6c] sm:$0xf]
      %v3238 = vsel %vm3171, %v2968, %v3237
      %3239 = vst [vmem:[#allocation2 + $0x6c] sm:$0xf] %v3238
      %3240 = vst [vmem:[#allocation2 + $0x70] sm:$0xf] %v2977
      %v3241 = vld [vmem:[#allocation2 + $0x74] sm:$0x1]
      %v3242 = vsel %vm3177, %v2978, %v3241
      %3243 = vst [vmem:[#allocation2 + $0x74] sm:$0x1] %v3242
      %v3244 = vld [vmem:[#allocation2 + $0x78] sm:$0xf]
      %v3245 = vsel %vm3171, %v2985, %v3244
      %3246 = vst [vmem:[#allocation2 + $0x78] sm:$0xf] %v3245
      %3247 = vst [vmem:[#allocation2 + $0x7c] sm:$0xf] %v2994
      %v3248 = vld [vmem:[#allocation2 + $0x80] sm:$0x1]
      %v3249 = vsel %vm3177, %v2995, %v3248
      %3250 = vst [vmem:[#allocation2 + $0x80] sm:$0x1] %v3249
      %v3251 = vld [vmem:[#allocation2 + $0x84] sm:$0xf]
      %v3252 = vsel %vm3171, %v3002, %v3251
      %3253 = vst [vmem:[#allocation2 + $0x84] sm:$0xf] %v3252
      %3254 = vst [vmem:[#allocation2 + $0x88] sm:$0xf] %v3011
      %v3255 = vld [vmem:[#allocation2 + $0x8c] sm:$0x1]
      %v3256 = vsel %vm3177, %v3012, %v3255
      %3257 = vst [vmem:[#allocation2 + $0x8c] sm:$0x1] %v3256
      %v3258 = vld [vmem:[#allocation2 + $0x90] sm:$0xf]
      %v3259 = vsel %vm3171, %v3019, %v3258
      %3260 = vst [vmem:[#allocation2 + $0x90] sm:$0xf] %v3259
      %3261 = vst [vmem:[#allocation2 + $0x94] sm:$0xf] %v3028
      %v3262 = vld [vmem:[#allocation2 + $0x98] sm:$0x1]
      %v3263 = vsel %vm3177, %v3029, %v3262
      %3264 = vst [vmem:[#allocation2 + $0x98] sm:$0x1] %v3263
      %v3265 = vld [vmem:[#allocation2 + $0x9c] sm:$0xf]
      %v3266 = vsel %vm3171, %v3036, %v3265
      %3267 = vst [vmem:[#allocation2 + $0x9c] sm:$0xf] %v3266
      %3268 = vst [vmem:[#allocation2 + $0xa0] sm:$0xf] %v3045
      %v3269 = vld [vmem:[#allocation2 + $0xa4] sm:$0x1]
      %v3270 = vsel %vm3177, %v3046, %v3269
      %3271 = vst [vmem:[#allocation2 + $0xa4] sm:$0x1] %v3270
      %v3272 = vld [vmem:[#allocation2 + $0xa8] sm:$0xf]
      %v3273 = vsel %vm3171, %v3053, %v3272
      %3274 = vst [vmem:[#allocation2 + $0xa8] sm:$0xf] %v3273
      %3275 = vst [vmem:[#allocation2 + $0xac] sm:$0xf] %v3062
      %v3276 = vld [vmem:[#allocation2 + $0xb0] sm:$0x1]
      %v3277 = vsel %vm3177, %v3063, %v3276
      %3278 = vst [vmem:[#allocation2 + $0xb0] sm:$0x1] %v3277
      %v3279 = vld [vmem:[#allocation2 + $0xb4] sm:$0xf]
      %v3280 = vsel %vm3171, %v3070, %v3279
      %3281 = vst [vmem:[#allocation2 + $0xb4] sm:$0xf] %v3280
      %3282 = vst [vmem:[#allocation2 + $0xb8] sm:$0xf] %v3079
      %v3283 = vld [vmem:[#allocation2 + $0xbc] sm:$0x1]
      %v3284 = vsel %vm3177, %v3080, %v3283
      %3285 = vst [vmem:[#allocation2 + $0xbc] sm:$0x1] %v3284
      %v3286 = vld [vmem:[#allocation2 + $0xc0] sm:$0xf]
      %v3287 = vsel %vm3171, %v3087, %v3286
      %3288 = vst [vmem:[#allocation2 + $0xc0] sm:$0xf] %v3287
      %3289 = vst [vmem:[#allocation2 + $0xc4] sm:$0xf] %v3096
      %v3290 = vld [vmem:[#allocation2 + $0xc8] sm:$0x1]
      %v3291 = vsel %vm3177, %v3097, %v3290
      %3292 = vst [vmem:[#allocation2 + $0xc8] sm:$0x1] %v3291
      %v3293 = vld [vmem:[#allocation2 + $0xcc] sm:$0xf]
      %v3294 = vsel %vm3171, %v3104, %v3293
      %3295 = vst [vmem:[#allocation2 + $0xcc] sm:$0xf] %v3294
      %3296 = vst [vmem:[#allocation2 + $0xd0] sm:$0xf] %v3113
      %v3297 = vld [vmem:[#allocation2 + $0xd4] sm:$0x1]
      %v3298 = vsel %vm3177, %v3114, %v3297
      %3299 = vst [vmem:[#allocation2 + $0xd4] sm:$0x1] %v3298
      %v3300 = vrot.slane %v2810, 4
      %v3301 = vrot.slane %v3300, 4
      %v3302 = vrot.slane %v2827, 4
      %v3303 = vrot.slane %v3302, 4
      %v3304 = vrot.slane %v2844, 4
      %v3305 = vrot.slane %v3304, 4
      %v3306 = vrot.slane %v2861, 4
      %v3307 = vrot.slane %v3306, 4
      %v3308 = vrot.slane %v2878, 4
      %v3309 = vrot.slane %v3308, 4
      %v3310 = vrot.slane %v2895, 4
      %v3311 = vrot.slane %v3310, 4
      %v3312 = vrot.slane %v2912, 4
      %v3313 = vrot.slane %v3312, 4
      %v3314 = vrot.slane %v2929, 4
      %v3315 = vrot.slane %v3314, 4
      %v3316 = vrot.slane %v2946, 4
      %v3317 = vrot.slane %v3316, 4
      %v3318 = vrot.slane %v2963, 4
      %v3319 = vrot.slane %v3318, 4
      %v3320 = vrot.slane %v2980, 4
      %v3321 = vrot.slane %v3320, 4
      %v3322 = vrot.slane %v2997, 4
      %v3323 = vrot.slane %v3322, 4
      %v3324 = vrot.slane %v3014, 4
      %v3325 = vrot.slane %v3324, 4
      %v3326 = vrot.slane %v3031, 4
      %v3327 = vrot.slane %v3326, 4
      %v3328 = vrot.slane %v3048, 4
      %v3329 = vrot.slane %v3328, 4
      %v3330 = vrot.slane %v3065, 4
      %v3331 = vrot.slane %v3330, 4
      %v3332 = vrot.slane %v3082, 4
      %v3333 = vrot.slane %v3332, 4
      %v3334 = vrot.slane %v3099, 4
      %v3335 = vrot.slane %v3334, 4
      %v3354 = vld [vmem:[#allocation2] sm:$0x1]
      %v3355 = vsel %vm3177, %v3301, %v3354
      %3356 = vst [vmem:[#allocation2] sm:$0x1] %v3355
      %v3357 = vld [vmem:[#allocation2 + $0xc] sm:$0x1]
      %v3358 = vsel %vm3177, %v3303, %v3357
      %3359 = vst [vmem:[#allocation2 + $0xc] sm:$0x1] %v3358
      %v3360 = vld [vmem:[#allocation2 + $0x18] sm:$0x1]
      %v3361 = vsel %vm3177, %v3305, %v3360
      %3362 = vst [vmem:[#allocation2 + $0x18] sm:$0x1] %v3361
      %v3363 = vld [vmem:[#allocation2 + $0x24] sm:$0x1]
      %v3364 = vsel %vm3177, %v3307, %v3363
      %3365 = vst [vmem:[#allocation2 + $0x24] sm:$0x1] %v3364
      %v3366 = vld [vmem:[#allocation2 + $0x30] sm:$0x1]
      %v3367 = vsel %vm3177, %v3309, %v3366
      %3368 = vst [vmem:[#allocation2 + $0x30] sm:$0x1] %v3367
      %v3369 = vld [vmem:[#allocation2 + $0x3c] sm:$0x1]
      %v3370 = vsel %vm3177, %v3311, %v3369
      %3371 = vst [vmem:[#allocation2 + $0x3c] sm:$0x1] %v3370
      %v3372 = vld [vmem:[#allocation2 + $0x48] sm:$0x1]
      %v3373 = vsel %vm3177, %v3313, %v3372
      %3374 = vst [vmem:[#allocation2 + $0x48] sm:$0x1] %v3373
      %v3375 = vld [vmem:[#allocation2 + $0x54] sm:$0x1]
      %v3376 = vsel %vm3177, %v3315, %v3375
      %3377 = vst [vmem:[#allocation2 + $0x54] sm:$0x1] %v3376
      %v3378 = vld [vmem:[#allocation2 + $0x60] sm:$0x1]
      %v3379 = vsel %vm3177, %v3317, %v3378
      %3380 = vst [vmem:[#allocation2 + $0x60] sm:$0x1] %v3379
      %v3381 = vld [vmem:[#allocation2 + $0x6c] sm:$0x1]
      %v3382 = vsel %vm3177, %v3319, %v3381
      %3383 = vst [vmem:[#allocation2 + $0x6c] sm:$0x1] %v3382
      %v3384 = vld [vmem:[#allocation2 + $0x78] sm:$0x1]
      %v3385 = vsel %vm3177, %v3321, %v3384
      %3386 = vst [vmem:[#allocation2 + $0x78] sm:$0x1] %v3385
      %v3387 = vld [vmem:[#allocation2 + $0x84] sm:$0x1]
      %v3388 = vsel %vm3177, %v3323, %v3387
      %3389 = vst [vmem:[#allocation2 + $0x84] sm:$0x1] %v3388
      %v3390 = vld [vmem:[#allocation2 + $0x90] sm:$0x1]
      %v3391 = vsel %vm3177, %v3325, %v3390
      %3392 = vst [vmem:[#allocation2 + $0x90] sm:$0x1] %v3391
      %v3393 = vld [vmem:[#allocation2 + $0x9c] sm:$0x1]
      %v3394 = vsel %vm3177, %v3327, %v3393
      %3395 = vst [vmem:[#allocation2 + $0x9c] sm:$0x1] %v3394
      %v3396 = vld [vmem:[#allocation2 + $0xa8] sm:$0x1]
      %v3397 = vsel %vm3177, %v3329, %v3396
      %3398 = vst [vmem:[#allocation2 + $0xa8] sm:$0x1] %v3397
      %v3399 = vld [vmem:[#allocation2 + $0xb4] sm:$0x1]
      %v3400 = vsel %vm3177, %v3331, %v3399
      %3401 = vst [vmem:[#allocation2 + $0xb4] sm:$0x1] %v3400
      %v3402 = vld [vmem:[#allocation2 + $0xc0] sm:$0x1]
      %v3403 = vsel %vm3177, %v3333, %v3402
      %3404 = vst [vmem:[#allocation2 + $0xc0] sm:$0x1] %v3403
      %v3405 = vld [vmem:[#allocation2 + $0xcc] sm:$0x1]
      %v3406 = vsel %vm3177, %v3335, %v3405
      %3407 = vst [vmem:[#allocation2 + $0xcc] sm:$0x1] %v3406
      %v3408 = vrot.slane %v2821, 7
      %v3409 = vrot.slane %v3408, 4
      %v3410 = vrot.slane %v2838, 7
      %v3411 = vrot.slane %v3410, 4
      %v3412 = vrot.slane %v2855, 7
      %v3413 = vrot.slane %v3412, 4
      %v3414 = vrot.slane %v2872, 7
      %v3415 = vrot.slane %v3414, 4
      %v3416 = vrot.slane %v2889, 7
      %v3417 = vrot.slane %v3416, 4
      %v3418 = vrot.slane %v2906, 7
      %v3419 = vrot.slane %v3418, 4
      %v3420 = vrot.slane %v2923, 7
      %v3421 = vrot.slane %v3420, 4
      %v3422 = vrot.slane %v2940, 7
      %v3423 = vrot.slane %v3422, 4
      %v3424 = vrot.slane %v2957, 7
      %v3425 = vrot.slane %v3424, 4
      %v3426 = vrot.slane %v2974, 7
      %v3427 = vrot.slane %v3426, 4
      %v3428 = vrot.slane %v2991, 7
      %v3429 = vrot.slane %v3428, 4
      %v3430 = vrot.slane %v3008, 7
      %v3431 = vrot.slane %v3430, 4
      %v3432 = vrot.slane %v3025, 7
      %v3433 = vrot.slane %v3432, 4
      %v3434 = vrot.slane %v3042, 7
      %v3435 = vrot.slane %v3434, 4
      %v3436 = vrot.slane %v3059, 7
      %v3437 = vrot.slane %v3436, 4
      %v3438 = vrot.slane %v3076, 7
      %v3439 = vrot.slane %v3438, 4
      %v3440 = vrot.slane %v3093, 7
      %v3441 = vrot.slane %v3440, 4
      %v3442 = vrot.slane %v3110, 7
      %v3443 = vrot.slane %v3442, 4
      %vm3462 = vmand %vm3176, %vm3170
      %v3463 = vld [vmem:[#allocation2 + $0x8] sm:$0x1]
      %v3464 = vsel %vm3462, %v3409, %v3463
      %3465 = vst [vmem:[#allocation2 + $0x8] sm:$0x1] %v3464
      %v3466 = vld [vmem:[#allocation2 + $0x14] sm:$0x1]
      %v3467 = vsel %vm3462, %v3411, %v3466
      %3468 = vst [vmem:[#allocation2 + $0x14] sm:$0x1] %v3467
      %v3469 = vld [vmem:[#allocation2 + $0x20] sm:$0x1]
      %v3470 = vsel %vm3462, %v3413, %v3469
      %3471 = vst [vmem:[#allocation2 + $0x20] sm:$0x1] %v3470
      %v3472 = vld [vmem:[#allocation2 + $0x2c] sm:$0x1]
      %v3473 = vsel %vm3462, %v3415, %v3472
      %3474 = vst [vmem:[#allocation2 + $0x2c] sm:$0x1] %v3473
      %v3475 = vld [vmem:[#allocation2 + $0x38] sm:$0x1]
      %v3476 = vsel %vm3462, %v3417, %v3475
      %3477 = vst [vmem:[#allocation2 + $0x38] sm:$0x1] %v3476
      %v3478 = vld [vmem:[#allocation2 + $0x44] sm:$0x1]
      %v3479 = vsel %vm3462, %v3419, %v3478
      %3480 = vst [vmem:[#allocation2 + $0x44] sm:$0x1] %v3479
      %v3481 = vld [vmem:[#allocation2 + $0x50] sm:$0x1]
      %v3482 = vsel %vm3462, %v3421, %v3481
      %3483 = vst [vmem:[#allocation2 + $0x50] sm:$0x1] %v3482
      %v3484 = vld [vmem:[#allocation2 + $0x5c] sm:$0x1]
      %v3485 = vsel %vm3462, %v3423, %v3484
      %3486 = vst [vmem:[#allocation2 + $0x5c] sm:$0x1] %v3485
      %v3487 = vld [vmem:[#allocation2 + $0x68] sm:$0x1]
      %v3488 = vsel %vm3462, %v3425, %v3487
      %3489 = vst [vmem:[#allocation2 + $0x68] sm:$0x1] %v3488
      %v3490 = vld [vmem:[#allocation2 + $0x74] sm:$0x1]
      %v3491 = vsel %vm3462, %v3427, %v3490
      %3492 = vst [vmem:[#allocation2 + $0x74] sm:$0x1] %v3491
      %v3493 = vld [vmem:[#allocation2 + $0x80] sm:$0x1]
      %v3494 = vsel %vm3462, %v3429, %v3493
      %3495 = vst [vmem:[#allocation2 + $0x80] sm:$0x1] %v3494
      %v3496 = vld [vmem:[#allocation2 + $0x8c] sm:$0x1]
      %v3497 = vsel %vm3462, %v3431, %v3496
      %3498 = vst [vmem:[#allocation2 + $0x8c] sm:$0x1] %v3497
      %v3499 = vld [vmem:[#allocation2 + $0x98] sm:$0x1]
      %v3500 = vsel %vm3462, %v3433, %v3499
      %3501 = vst [vmem:[#allocation2 + $0x98] sm:$0x1] %v3500
      %v3502 = vld [vmem:[#allocation2 + $0xa4] sm:$0x1]
      %v3503 = vsel %vm3462, %v3435, %v3502
      %3504 = vst [vmem:[#allocation2 + $0xa4] sm:$0x1] %v3503
      %v3505 = vld [vmem:[#allocation2 + $0xb0] sm:$0x1]
      %v3506 = vsel %vm3462, %v3437, %v3505
      %3507 = vst [vmem:[#allocation2 + $0xb0] sm:$0x1] %v3506
      %v3508 = vld [vmem:[#allocation2 + $0xbc] sm:$0x1]
      %v3509 = vsel %vm3462, %v3439, %v3508
      %3510 = vst [vmem:[#allocation2 + $0xbc] sm:$0x1] %v3509
      %v3511 = vld [vmem:[#allocation2 + $0xc8] sm:$0x1]
      %v3512 = vsel %vm3462, %v3441, %v3511
      %3513 = vst [vmem:[#allocation2 + $0xc8] sm:$0x1] %v3512
      %v3514 = vld [vmem:[#allocation2 + $0xd4] sm:$0x1]
      %v3515 = vsel %vm3462, %v3443, %v3514
      %3516 = vst [vmem:[#allocation2 + $0xd4] sm:$0x1] %v3515
      %p3517 = scmp.eq.s32.totalorder %s22, 0
      // Predicated region
      $region45: #{residual_block_forward.1} parent=43 // pred_check
        %p3518 = pneg %p3517
      $region46: #{residual_block_forward.1} parent=43 // pred_check_branch
        %3520 = sbr.rel (%p3518) target = $region48
      $region47: #{residual_block_forward.1} parent=43 // pred_region
        %s3521 = scalar_lea.vmem [#allocation2], 24
        %v3522 = vld [vmem:[%s3521] sm:$0xf]
        %v3523 = vld [vmem:[%s3521 + $0x4] sm:$0xf]
        %v3524 = vld [vmem:[%s3521 + $0x8] sm:$0x1]
        %3525 = vst [vmem:[#allocation2] sm:$0xf] %v3522
        %3526 = vst [vmem:[#allocation2 + $0x4] sm:$0xf] %v3523
        %3527 = vst [vmem:[#allocation2 + $0x8] sm:$0x1] %v3524
        %s3528 = scalar_lea.vmem [#allocation2], 180
        %v3529 = vld [vmem:[%s3528] sm:$0xf]
        %v3530 = vld [vmem:[%s3528 + $0x4] sm:$0xf]
        %v3531 = vld [vmem:[%s3528 + $0x8] sm:$0x1]
        %s3532 = scalar_lea.vmem [#allocation2], 204
        %3533 = vst [vmem:[%s3532] sm:$0xf] %v3529
        %3534 = vst [vmem:[%s3532 + $0x4] sm:$0xf] %v3530
        %3535 = vst [vmem:[%s3532 + $0x8] sm:$0x1] %v3531
      $region48: #{residual_block_forward.1} parent=43 // pred_fallthru
        _
      %v3536 = vld [vmem:[#allocation2] sm:$0xf]
      %v3537 = vld [vmem:[#allocation2 + $0x4] sm:$0xf]
      %v3538 = vld [vmem:[#allocation2 + $0x8] sm:$0x1]
      %v3539 = vld [vmem:[#allocation2 + $0xc] sm:$0xf]
      %v3540 = vld [vmem:[#allocation2 + $0x10] sm:$0xf]
      %v3541 = vld [vmem:[#allocation2 + $0x14] sm:$0x1]
      %v3542 = vld [vmem:[#allocation2 + $0x18] sm:$0xf]
      %v3543 = vld [vmem:[#allocation2 + $0x1c] sm:$0xf]
      %v3544 = vld [vmem:[#allocation2 + $0x20] sm:$0x1]
      %v3545 = vld [vmem:[#allocation2 + $0x24] sm:$0xf]
      %v3546 = vld [vmem:[#allocation2 + $0x28] sm:$0xf]
      %v3547 = vld [vmem:[#allocation2 + $0x2c] sm:$0x1]
      %v3548 = vld [vmem:[#allocation2 + $0x30] sm:$0xf]
      %v3549 = vld [vmem:[#allocation2 + $0x34] sm:$0xf]
      %v3550 = vld [vmem:[#allocation2 + $0x38] sm:$0x1]
      %v3551 = vld [vmem:[#allocation2 + $0x3c] sm:$0xf]
      %v3552 = vld [vmem:[#allocation2 + $0x40] sm:$0xf]
      %v3553 = vld [vmem:[#allocation2 + $0x44] sm:$0x1]
      %v3554 = vld [vmem:[#allocation2 + $0x48] sm:$0xf]
      %v3555 = vld [vmem:[#allocation2 + $0x4c] sm:$0xf]
      %v3556 = vld [vmem:[#allocation2 + $0x50] sm:$0x1]
      %v3557 = vld [vmem:[#allocation2 + $0x54] sm:$0xf]
      %v3558 = vld [vmem:[#allocation2 + $0x58] sm:$0xf]
      %v3559 = vld [vmem:[#allocation2 + $0x5c] sm:$0x1]
      %v3560 = vld [vmem:[#allocation2 + $0x60] sm:$0xf]
      %v3561 = vld [vmem:[#allocation2 + $0x64] sm:$0xf]
      %v3562 = vld [vmem:[#allocation2 + $0x68] sm:$0x1]
      %v3563 = vld [vmem:[#allocation2 + $0x6c] sm:$0xf]
      %v3564 = vld [vmem:[#allocation2 + $0x70] sm:$0xf]
      %v3565 = vld [vmem:[#allocation2 + $0x74] sm:$0x1]
      %v3566 = vld [vmem:[#allocation2 + $0x78] sm:$0xf]
      %v3567 = vld [vmem:[#allocation2 + $0x7c] sm:$0xf]
      %v3568 = vld [vmem:[#allocation2 + $0x80] sm:$0x1]
      %v3569 = vld [vmem:[#allocation2 + $0x84] sm:$0xf]
      %v3570 = vld [vmem:[#allocation2 + $0x88] sm:$0xf]
      %v3571 = vld [vmem:[#allocation2 + $0x8c] sm:$0x1]
      %v3572 = vld [vmem:[#allocation2 + $0x90] sm:$0xf]
      %v3573 = vld [vmem:[#allocation2 + $0x94] sm:$0xf]
      %v3574 = vld [vmem:[#allocation2 + $0x98] sm:$0x1]
      %v3575 = vld [vmem:[#allocation2 + $0x9c] sm:$0xf]
      %v3576 = vld [vmem:[#allocation2 + $0xa0] sm:$0xf]
      %v3577 = vld [vmem:[#allocation2 + $0xa4] sm:$0x1]
      %v3578 = vld [vmem:[#allocation2 + $0xa8] sm:$0xf]
      %v3579 = vld [vmem:[#allocation2 + $0xac] sm:$0xf]
      %v3580 = vld [vmem:[#allocation2 + $0xb0] sm:$0x1]
      %v3581 = vld [vmem:[#allocation2 + $0xb4] sm:$0xf]
      %v3582 = vld [vmem:[#allocation2 + $0xb8] sm:$0xf]
      %v3583 = vld [vmem:[#allocation2 + $0xbc] sm:$0x1]
      %v3584 = vld [vmem:[#allocation2 + $0xc0] sm:$0xf]
      %v3585 = vld [vmem:[#allocation2 + $0xc4] sm:$0xf]
      %v3586 = vld [vmem:[#allocation2 + $0xc8] sm:$0x1]
      %v3587 = vld [vmem:[#allocation2 + $0xcc] sm:$0xf]
      %v3588 = vld [vmem:[#allocation2 + $0xd0] sm:$0xf]
      %v3589 = vld [vmem:[#allocation2 + $0xd4] sm:$0x1]
      %v3622 = vunpack.c.l.b16 %v3536
      %v3623 = vunpack.c.l.b16 %v3537
      %v3624 = vunpack.c.l.b16 %v3539
      %v3625 = vunpack.c.l.b16 %v3540
      %v3626 = vunpack.c.l.b16 %v3542
      %v3627 = vunpack.c.l.b16 %v3543
      %v3628 = vunpack.c.l.b16 %v3545
      %v3629 = vunpack.c.l.b16 %v3546
      %v3630 = vunpack.c.l.b16 %v3548
      %v3631 = vunpack.c.l.b16 %v3549
      %v3632 = vunpack.c.l.b16 %v3551
      %v3633 = vunpack.c.l.b16 %v3552
      %v3634 = vunpack.c.l.b16 %v3554
      %v3635 = vunpack.c.l.b16 %v3555
      %v3636 = vunpack.c.l.b16 %v3557
      %v3637 = vunpack.c.l.b16 %v3558
      %v3638 = vunpack.c.l.b16 %v3560
      %v3639 = vunpack.c.l.b16 %v3561
      %v3640 = vunpack.c.l.b16 %v3563
      %v3641 = vunpack.c.l.b16 %v3564
      %v3642 = vunpack.c.l.b16 %v3566
      %v3643 = vunpack.c.l.b16 %v3567
      %v3644 = vunpack.c.l.b16 %v3569
      %v3645 = vunpack.c.l.b16 %v3570
      %v3646 = vunpack.c.l.b16 %v3572
      %v3647 = vunpack.c.l.b16 %v3573
      %v3648 = vunpack.c.l.b16 %v3575
      %v3649 = vunpack.c.l.b16 %v3576
      %v3650 = vunpack.c.l.b16 %v3578
      %v3651 = vunpack.c.l.b16 %v3579
      %v3652 = vunpack.c.l.b16 %v3581
      %v3653 = vunpack.c.l.b16 %v3582
      %v3654 = vpack.c.b16 %v3623, %v3622
      %v3655 = vpack.c.b16 %v3625, %v3624
      %v3656 = vpack.c.b16 %v3627, %v3626
      %v3657 = vpack.c.b16 %v3629, %v3628
      %v3658 = vpack.c.b16 %v3631, %v3630
      %v3659 = vpack.c.b16 %v3633, %v3632
      %v3660 = vpack.c.b16 %v3635, %v3634
      %v3661 = vpack.c.b16 %v3637, %v3636
      %v3662 = vpack.c.b16 %v3639, %v3638
      %v3663 = vpack.c.b16 %v3641, %v3640
      %v3664 = vpack.c.b16 %v3643, %v3642
      %v3665 = vpack.c.b16 %v3645, %v3644
      %v3666 = vpack.c.b16 %v3647, %v3646
      %v3667 = vpack.c.b16 %v3649, %v3648
      %v3668 = vpack.c.b16 %v3651, %v3650
      %v3669 = vpack.c.b16 %v3653, %v3652
      %v3702 = vunpack.c.l.b16 %v3538
      %v3703 = vunpack.c.l.b16 %v3541
      %v3704 = vunpack.c.l.b16 %v3544
      %v3705 = vunpack.c.l.b16 %v3547
      %v3706 = vunpack.c.l.b16 %v3550
      %v3707 = vunpack.c.l.b16 %v3553
      %v3708 = vunpack.c.l.b16 %v3556
      %v3709 = vunpack.c.l.b16 %v3559
      %v3710 = vunpack.c.l.b16 %v3562
      %v3711 = vunpack.c.l.b16 %v3565
      %v3712 = vunpack.c.l.b16 %v3568
      %v3713 = vunpack.c.l.b16 %v3571
      %v3714 = vunpack.c.l.b16 %v3574
      %v3715 = vunpack.c.l.b16 %v3577
      %v3716 = vunpack.c.l.b16 %v3580
      %v3717 = vunpack.c.l.b16 %v3583
      %v3718 = vpack.c.b16 %v3702, %v3702
      %v3719 = vpack.c.b16 %v3703, %v3703
      %v3720 = vpack.c.b16 %v3704, %v3704
      %v3721 = vpack.c.b16 %v3705, %v3705
      %v3722 = vpack.c.b16 %v3706, %v3706
      %v3723 = vpack.c.b16 %v3707, %v3707
      %v3724 = vpack.c.b16 %v3708, %v3708
      %v3725 = vpack.c.b16 %v3709, %v3709
      %v3726 = vpack.c.b16 %v3710, %v3710
      %v3727 = vpack.c.b16 %v3711, %v3711
      %v3728 = vpack.c.b16 %v3712, %v3712
      %v3729 = vpack.c.b16 %v3713, %v3713
      %v3730 = vpack.c.b16 %v3714, %v3714
      %v3731 = vpack.c.b16 %v3715, %v3715
      %v3732 = vpack.c.b16 %v3716, %v3716
      %v3733 = vpack.c.b16 %v3717, %v3717
      %v3735 = vshrl.u32 %v3654, 16
      %v3737 = vshll.u32 %v3654, 16
      %v3739 = vrot.slane %v3737, 1
      %v3740 = vor.u32 %v3735, %v3739
      %v3742 = vshll.u32 %v3718, 16
      %v3744 = vrot.slane %v3742, 1
      %v3745 = vsel %vm504, %v3740, %v3744
      %v3747 = vshrl.u32 %v3655, 16
      %v3749 = vshll.u32 %v3655, 16
      %v3751 = vrot.slane %v3749, 1
      %v3752 = vor.u32 %v3747, %v3751
      %v3754 = vshll.u32 %v3719, 16
      %v3756 = vrot.slane %v3754, 1
      %v3757 = vsel %vm504, %v3752, %v3756
      %v3759 = vshrl.u32 %v3656, 16
      %v3761 = vshll.u32 %v3656, 16
      %v3763 = vrot.slane %v3761, 1
      %v3764 = vor.u32 %v3759, %v3763
      %v3766 = vshll.u32 %v3720, 16
      %v3768 = vrot.slane %v3766, 1
      %v3769 = vsel %vm504, %v3764, %v3768
      %v3771 = vshrl.u32 %v3657, 16
      %v3773 = vshll.u32 %v3657, 16
      %v3775 = vrot.slane %v3773, 1
      %v3776 = vor.u32 %v3771, %v3775
      %v3778 = vshll.u32 %v3721, 16
      %v3780 = vrot.slane %v3778, 1
      %v3781 = vsel %vm504, %v3776, %v3780
      %v3783 = vshrl.u32 %v3658, 16
      %v3785 = vshll.u32 %v3658, 16
      %v3787 = vrot.slane %v3785, 1
      %v3788 = vor.u32 %v3783, %v3787
      %v3790 = vshll.u32 %v3722, 16
      %v3792 = vrot.slane %v3790, 1
      %v3793 = vsel %vm504, %v3788, %v3792
      %v3795 = vshrl.u32 %v3659, 16
      %v3797 = vshll.u32 %v3659, 16
      %v3799 = vrot.slane %v3797, 1
      %v3800 = vor.u32 %v3795, %v3799
      %v3802 = vshll.u32 %v3723, 16
      %v3804 = vrot.slane %v3802, 1
      %v3805 = vsel %vm504, %v3800, %v3804
      %v3807 = vshrl.u32 %v3660, 16
      %v3809 = vshll.u32 %v3660, 16
      %v3811 = vrot.slane %v3809, 1
      %v3812 = vor.u32 %v3807, %v3811
      %v3814 = vshll.u32 %v3724, 16
      %v3816 = vrot.slane %v3814, 1
      %v3817 = vsel %vm504, %v3812, %v3816
      %v3819 = vshrl.u32 %v3661, 16
      %v3821 = vshll.u32 %v3661, 16
      %v3823 = vrot.slane %v3821, 1
      %v3824 = vor.u32 %v3819, %v3823
      %v3826 = vshll.u32 %v3725, 16
      %v3828 = vrot.slane %v3826, 1
      %v3829 = vsel %vm504, %v3824, %v3828
      %v3831 = vshrl.u32 %v3662, 16
      %v3833 = vshll.u32 %v3662, 16
      %v3835 = vrot.slane %v3833, 1
      %v3836 = vor.u32 %v3831, %v3835
      %v3838 = vshll.u32 %v3726, 16
      %v3840 = vrot.slane %v3838, 1
      %v3841 = vsel %vm504, %v3836, %v3840
      %v3843 = vshrl.u32 %v3663, 16
      %v3845 = vshll.u32 %v3663, 16
      %v3847 = vrot.slane %v3845, 1
      %v3848 = vor.u32 %v3843, %v3847
      %v3850 = vshll.u32 %v3727, 16
      %v3852 = vrot.slane %v3850, 1
      %v3853 = vsel %vm504, %v3848, %v3852
      %v3855 = vshrl.u32 %v3664, 16
      %v3857 = vshll.u32 %v3664, 16
      %v3859 = vrot.slane %v3857, 1
      %v3860 = vor.u32 %v3855, %v3859
      %v3862 = vshll.u32 %v3728, 16
      %v3864 = vrot.slane %v3862, 1
      %v3865 = vsel %vm504, %v3860, %v3864
      %v3867 = vshrl.u32 %v3665, 16
      %v3869 = vshll.u32 %v3665, 16
      %v3871 = vrot.slane %v3869, 1
      %v3872 = vor.u32 %v3867, %v3871
      %v3874 = vshll.u32 %v3729, 16
      %v3876 = vrot.slane %v3874, 1
      %v3877 = vsel %vm504, %v3872, %v3876
      %v3879 = vshrl.u32 %v3666, 16
      %v3881 = vshll.u32 %v3666, 16
      %v3883 = vrot.slane %v3881, 1
      %v3884 = vor.u32 %v3879, %v3883
      %v3886 = vshll.u32 %v3730, 16
      %v3888 = vrot.slane %v3886, 1
      %v3889 = vsel %vm504, %v3884, %v3888
      %v3891 = vshrl.u32 %v3667, 16
      %v3893 = vshll.u32 %v3667, 16
      %v3895 = vrot.slane %v3893, 1
      %v3896 = vor.u32 %v3891, %v3895
      %v3898 = vshll.u32 %v3731, 16
      %v3900 = vrot.slane %v3898, 1
      %v3901 = vsel %vm504, %v3896, %v3900
      %v3903 = vshrl.u32 %v3668, 16
      %v3905 = vshll.u32 %v3668, 16
      %v3907 = vrot.slane %v3905, 1
      %v3908 = vor.u32 %v3903, %v3907
      %v3910 = vshll.u32 %v3732, 16
      %v3912 = vrot.slane %v3910, 1
      %v3913 = vsel %vm504, %v3908, %v3912
      %v3915 = vshrl.u32 %v3669, 16
      %v3917 = vshll.u32 %v3669, 16
      %v3919 = vrot.slane %v3917, 1
      %v3920 = vor.u32 %v3915, %v3919
      %v3922 = vshll.u32 %v3733, 16
      %v3924 = vrot.slane %v3922, 1
      %v3925 = vsel %vm504, %v3920, %v3924
      %v3942 = vrot.slane %v3654, 1
      %v3943 = vrot.slane %v3718, 1
      %v3944 = vsel %vm739, %v3942, %v3943
      %v3945 = vrot.slane %v3655, 1
      %v3946 = vrot.slane %v3719, 1
      %v3947 = vsel %vm739, %v3945, %v3946
      %v3948 = vrot.slane %v3656, 1
      %v3949 = vrot.slane %v3720, 1
      %v3950 = vsel %vm739, %v3948, %v3949
      %v3951 = vrot.slane %v3657, 1
      %v3952 = vrot.slane %v3721, 1
      %v3953 = vsel %vm739, %v3951, %v3952
      %v3954 = vrot.slane %v3658, 1
      %v3955 = vrot.slane %v3722, 1
      %v3956 = vsel %vm739, %v3954, %v3955
      %v3957 = vrot.slane %v3659, 1
      %v3958 = vrot.slane %v3723, 1
      %v3959 = vsel %vm739, %v3957, %v3958
      %v3960 = vrot.slane %v3660, 1
      %v3961 = vrot.slane %v3724, 1
      %v3962 = vsel %vm739, %v3960, %v3961
      %v3963 = vrot.slane %v3661, 1
      %v3964 = vrot.slane %v3725, 1
      %v3965 = vsel %vm739, %v3963, %v3964
      %v3966 = vrot.slane %v3662, 1
      %v3967 = vrot.slane %v3726, 1
      %v3968 = vsel %vm739, %v3966, %v3967
      %v3969 = vrot.slane %v3663, 1
      %v3970 = vrot.slane %v3727, 1
      %v3971 = vsel %vm739, %v3969, %v3970
      %v3972 = vrot.slane %v3664, 1
      %v3973 = vrot.slane %v3728, 1
      %v3974 = vsel %vm739, %v3972, %v3973
      %v3975 = vrot.slane %v3665, 1
      %v3976 = vrot.slane %v3729, 1
      %v3977 = vsel %vm739, %v3975, %v3976
      %v3978 = vrot.slane %v3666, 1
      %v3979 = vrot.slane %v3730, 1
      %v3980 = vsel %vm739, %v3978, %v3979
      %v3981 = vrot.slane %v3667, 1
      %v3982 = vrot.slane %v3731, 1
      %v3983 = vsel %vm739, %v3981, %v3982
      %v3984 = vrot.slane %v3668, 1
      %v3985 = vrot.slane %v3732, 1
      %v3986 = vsel %vm739, %v3984, %v3985
      %v3987 = vrot.slane %v3669, 1
      %v3988 = vrot.slane %v3733, 1
      %v3989 = vsel %vm739, %v3987, %v3988
      %v4006 = vld [vmem:[%s4] sm:$0xf]
      %v4007 = vld [vmem:[%s4 + $0x4] sm:$0xf]
      %v4008 = vld [vmem:[%s4 + $0x8] sm:$0xf]
      %v4009 = vld [vmem:[%s4 + $0xc] sm:$0xf]
      %v4010 = vld [vmem:[%s4 + $0x10] sm:$0xf]
      %v4011 = vld [vmem:[%s4 + $0x14] sm:$0xf]
      %v4012 = vld [vmem:[%s4 + $0x18] sm:$0xf]
      %v4013 = vld [vmem:[%s4 + $0x1c] sm:$0xf]
      %v4014 = vld [vmem:[%s4 + $0x20] sm:$0xf]
      %v4015 = vld [vmem:[%s4 + $0x24] sm:$0xf]
      %v4016 = vld [vmem:[%s4 + $0x28] sm:$0xf]
      %v4017 = vld [vmem:[%s4 + $0x2c] sm:$0xf]
      %v4018 = vld [vmem:[%s4 + $0x30] sm:$0xf]
      %v4019 = vld [vmem:[%s4 + $0x34] sm:$0xf]
      %v4020 = vld [vmem:[%s4 + $0x38] sm:$0xf]
      %v4021 = vld [vmem:[%s4 + $0x3c] sm:$0xf]
      %v4022 = vld [vmem:[%s4 + $0x40] sm:$0xf]
      %v4023 = vld [vmem:[%s4 + $0x44] sm:$0xf]
      %v4024 = vld [vmem:[%s4 + $0x48] sm:$0xf]
      %v4025 = vld [vmem:[%s4 + $0x4c] sm:$0xf]
      %v4026 = vld [vmem:[%s4 + $0x50] sm:$0xf]
      %v4027 = vld [vmem:[%s4 + $0x54] sm:$0xf]
      %v4028 = vld [vmem:[%s4 + $0x58] sm:$0xf]
      %v4029 = vld [vmem:[%s4 + $0x5c] sm:$0xf]
      %v4030 = vld [vmem:[%s4 + $0x60] sm:$0xf]
      %v4031 = vld [vmem:[%s4 + $0x64] sm:$0xf]
      %v4032 = vld [vmem:[%s4 + $0x68] sm:$0xf]
      %v4033 = vld [vmem:[%s4 + $0x6c] sm:$0xf]
      %v4034 = vld [vmem:[%s4 + $0x70] sm:$0xf]
      %v4035 = vld [vmem:[%s4 + $0x74] sm:$0xf]
      %v4036 = vld [vmem:[%s4 + $0x78] sm:$0xf]
      %v4037 = vld [vmem:[%s4 + $0x7c] sm:$0xf]
      %v4038 = vld [vmem:[%s4 + $0x80] sm:$0xf]
      %v4039 = vld [vmem:[%s4 + $0x84] sm:$0xf]
      %v4040 = vld [vmem:[%s4 + $0x88] sm:$0xf]
      %v4041 = vld [vmem:[%s4 + $0x8c] sm:$0xf]
      %v4042 = vld [vmem:[%s4 + $0x90] sm:$0xf]
      %v4043 = vld [vmem:[%s4 + $0x94] sm:$0xf]
      %v4044 = vld [vmem:[%s4 + $0x98] sm:$0xf]
      %v4045 = vld [vmem:[%s4 + $0x9c] sm:$0xf]
      %v4046 = vld [vmem:[%s4 + $0xa0] sm:$0xf]
      %v4047 = vld [vmem:[%s4 + $0xa4] sm:$0xf]
      %v4048 = vld [vmem:[%s4 + $0xa8] sm:$0xf]
      %v4049 = vld [vmem:[%s4 + $0xac] sm:$0xf]
      %v4050 = vld [vmem:[%s4 + $0xb0] sm:$0xf]
      %v4051 = vld [vmem:[%s4 + $0xb4] sm:$0xf]
      %v4052 = vld [vmem:[%s4 + $0xb8] sm:$0xf]
      %v4053 = vld [vmem:[%s4 + $0xbc] sm:$0xf]
      %v4056 = vunpack.c.l.b16 %v3584
      %v4057 = vunpack.c.l.b16 %v3585
      %v4058 = vpack.c.b16 %v4057, %v4056
      %v4061 = vunpack.c.l.b16 %v3586
      %v4062 = vpack.c.b16 %v4061, %v4061
      %v4064 = vshrl.u32 %v4058, 16
      %v4066 = vshll.u32 %v4058, 16
      %v4068 = vrot.slane %v4066, 1
      %v4069 = vor.u32 %v4064, %v4068
      %v4071 = vshll.u32 %v4062, 16
      %v4073 = vrot.slane %v4071, 1
      %v4074 = vsel %vm504, %v4069, %v4073
      %v4076 = vrot.slane %v4058, 1
      %v4077 = vrot.slane %v4062, 1
      %v4078 = vsel %vm739, %v4076, %v4077
      %s4080 = scalar_lea.vmem %s4, 192
      %v4081 = vld [vmem:[%s4080] sm:$0xf]
      %v4082 = vld [vmem:[%s4080 + $0x4] sm:$0xf]
      %v4083 = vld [vmem:[%s4080 + $0x8] sm:$0xf]
      %v4084 = vld [vmem:[%s4080 + $0xc] sm:$0xf]
      %v4085 = vld [vmem:[%s4080 + $0x10] sm:$0xf]
      %v4086 = vld [vmem:[%s4080 + $0x14] sm:$0xf]
      %v4087 = vld [vmem:[%s4080 + $0x18] sm:$0xf]
      %v4088 = vld [vmem:[%s4080 + $0x1c] sm:$0xf]
      %v4089 = vld [vmem:[%s4080 + $0x20] sm:$0xf]
      %v4090 = vld [vmem:[%s4080 + $0x24] sm:$0xf]
      %v4091 = vld [vmem:[%s4080 + $0x28] sm:$0xf]
      %v4092 = vld [vmem:[%s4080 + $0x2c] sm:$0xf]
      %v4093 = vld [vmem:[%s4080 + $0x30] sm:$0xf]
      %v4094 = vld [vmem:[%s4080 + $0x34] sm:$0xf]
      %v4095 = vld [vmem:[%s4080 + $0x38] sm:$0xf]
      %v4096 = vld [vmem:[%s4080 + $0x3c] sm:$0xf]
      %v4097 = vld [vmem:[%s4080 + $0x40] sm:$0xf]
      %v4098 = vld [vmem:[%s4080 + $0x44] sm:$0xf]
      %v4099 = vld [vmem:[%s4080 + $0x48] sm:$0xf]
      %v4100 = vld [vmem:[%s4080 + $0x4c] sm:$0xf]
      %v4101 = vld [vmem:[%s4080 + $0x50] sm:$0xf]
      %v4102 = vld [vmem:[%s4080 + $0x54] sm:$0xf]
      %v4103 = vld [vmem:[%s4080 + $0x58] sm:$0xf]
      %v4104 = vld [vmem:[%s4080 + $0x5c] sm:$0xf]
      %v4105 = vld [vmem:[%s4080 + $0x60] sm:$0xf]
      %v4106 = vld [vmem:[%s4080 + $0x64] sm:$0xf]
      %v4107 = vld [vmem:[%s4080 + $0x68] sm:$0xf]
      %v4108 = vld [vmem:[%s4080 + $0x6c] sm:$0xf]
      %v4109 = vld [vmem:[%s4080 + $0x70] sm:$0xf]
      %v4110 = vld [vmem:[%s4080 + $0x74] sm:$0xf]
      %v4111 = vld [vmem:[%s4080 + $0x78] sm:$0xf]
      %v4112 = vld [vmem:[%s4080 + $0x7c] sm:$0xf]
      %v4113 = vld [vmem:[%s4080 + $0x80] sm:$0xf]
      %v4114 = vld [vmem:[%s4080 + $0x84] sm:$0xf]
      %v4115 = vld [vmem:[%s4080 + $0x88] sm:$0xf]
      %v4116 = vld [vmem:[%s4080 + $0x8c] sm:$0xf]
      %v4117 = vld [vmem:[%s4080 + $0x90] sm:$0xf]
      %v4118 = vld [vmem:[%s4080 + $0x94] sm:$0xf]
      %v4119 = vld [vmem:[%s4080 + $0x98] sm:$0xf]
      %v4120 = vld [vmem:[%s4080 + $0x9c] sm:$0xf]
      %v4121 = vld [vmem:[%s4080 + $0xa0] sm:$0xf]
      %v4122 = vld [vmem:[%s4080 + $0xa4] sm:$0xf]
      %v4123 = vld [vmem:[%s4080 + $0xa8] sm:$0xf]
      %v4124 = vld [vmem:[%s4080 + $0xac] sm:$0xf]
      %v4125 = vld [vmem:[%s4080 + $0xb0] sm:$0xf]
      %v4126 = vld [vmem:[%s4080 + $0xb4] sm:$0xf]
      %v4127 = vld [vmem:[%s4080 + $0xb8] sm:$0xf]
      %v4128 = vld [vmem:[%s4080 + $0xbc] sm:$0xf]
      %v4177 = vunpack.c.l.b16 %v4081
      %v4178 = vunpack.c.l.b16 %v4082
      %v4179 = vunpack.c.l.b16 %v4083
      %v4180 = vunpack.c.l.b16 %v4084
      %v4181 = vunpack.c.l.b16 %v4085
      %v4182 = vunpack.c.l.b16 %v4086
      %v4183 = vunpack.c.l.b16 %v4087
      %v4184 = vunpack.c.l.b16 %v4088
      %v4185 = vunpack.c.l.b16 %v4089
      %v4186 = vunpack.c.l.b16 %v4090
      %v4187 = vunpack.c.l.b16 %v4091
      %v4188 = vunpack.c.l.b16 %v4092
      %v4189 = vunpack.c.l.b16 %v4093
      %v4190 = vunpack.c.l.b16 %v4094
      %v4191 = vunpack.c.l.b16 %v4095
      %v4192 = vunpack.c.l.b16 %v4096
      %v4193 = vunpack.c.l.b16 %v4097
      %v4194 = vunpack.c.l.b16 %v4098
      %v4195 = vunpack.c.l.b16 %v4099
      %v4196 = vunpack.c.l.b16 %v4100
      %v4197 = vunpack.c.l.b16 %v4101
      %v4198 = vunpack.c.l.b16 %v4102
      %v4199 = vunpack.c.l.b16 %v4103
      %v4200 = vunpack.c.l.b16 %v4104
      %v4201 = vunpack.c.l.b16 %v4105
      %v4202 = vunpack.c.l.b16 %v4106
      %v4203 = vunpack.c.l.b16 %v4107
      %v4204 = vunpack.c.l.b16 %v4108
      %v4205 = vunpack.c.l.b16 %v4109
      %v4206 = vunpack.c.l.b16 %v4110
      %v4207 = vunpack.c.l.b16 %v4111
      %v4208 = vunpack.c.l.b16 %v4112
      %v4209 = vunpack.c.l.b16 %v4113
      %v4210 = vunpack.c.l.b16 %v4114
      %v4211 = vunpack.c.l.b16 %v4115
      %v4212 = vunpack.c.l.b16 %v4116
      %v4213 = vunpack.c.l.b16 %v4117
      %v4214 = vunpack.c.l.b16 %v4118
      %v4215 = vunpack.c.l.b16 %v4119
      %v4216 = vunpack.c.l.b16 %v4120
      %v4217 = vunpack.c.l.b16 %v4121
      %v4218 = vunpack.c.l.b16 %v4122
      %v4219 = vunpack.c.l.b16 %v4123
      %v4220 = vunpack.c.l.b16 %v4124
      %v4221 = vunpack.c.l.b16 %v4125
      %v4222 = vunpack.c.l.b16 %v4126
      %v4223 = vunpack.c.l.b16 %v4127
      %v4224 = vunpack.c.l.b16 %v4128
      %v4225 = vpack.c.b16 %v4178, %v4177
      %v4226 = vpack.c.b16 %v4180, %v4179
      %v4227 = vpack.c.b16 %v4182, %v4181
      %v4228 = vpack.c.b16 %v4184, %v4183
      %v4229 = vpack.c.b16 %v4186, %v4185
      %v4230 = vpack.c.b16 %v4188, %v4187
      %v4231 = vpack.c.b16 %v4190, %v4189
      %v4232 = vpack.c.b16 %v4192, %v4191
      %v4233 = vpack.c.b16 %v4194, %v4193
      %v4234 = vpack.c.b16 %v4196, %v4195
      %v4235 = vpack.c.b16 %v4198, %v4197
      %v4236 = vpack.c.b16 %v4200, %v4199
      %v4237 = vpack.c.b16 %v4202, %v4201
      %v4238 = vpack.c.b16 %v4204, %v4203
      %v4239 = vpack.c.b16 %v4206, %v4205
      %v4240 = vpack.c.b16 %v4208, %v4207
      %v4241 = vpack.c.b16 %v4210, %v4209
      %v4242 = vpack.c.b16 %v4212, %v4211
      %v4243 = vpack.c.b16 %v4214, %v4213
      %v4244 = vpack.c.b16 %v4216, %v4215
      %v4245 = vpack.c.b16 %v4218, %v4217
      %v4246 = vpack.c.b16 %v4220, %v4219
      %v4247 = vpack.c.b16 %v4222, %v4221
      %v4248 = vpack.c.b16 %v4224, %v4223
      %4273 = vmatprep.subr.bf16.mxu0 0
      %4274 = vmatpush1.bf16.msra.mxu0 %v4225
      %4275 = vmatprep.subr.bf16.mxu0 0
      %4276 = vmatpush1.bf16.msra.mxu0 %v4226
      %4277 = vmatprep.subr.bf16.mxu0 0
      %4278 = vmatpush1.bf16.msra.mxu0 %v4227
      %4279 = vmatprep.subr.bf16.mxu0 0
      %4280 = vmatpush1.bf16.msra.mxu0 %v4228
      %4281 = vmatprep.subr.bf16.mxu0 0
      %4282 = vmatpush1.bf16.msra.mxu0 %v4229
      %4283 = vmatprep.subr.bf16.mxu0 0
      %4284 = vmatpush1.bf16.msra.mxu0 %v4230
      %4285 = vmatprep.subr.bf16.mxu0 0
      %4286 = vmatpush1.bf16.msra.mxu0 %v4231
      %4287 = vmatprep.subr.bf16.mxu0 0
      %4288 = vmatpush1.bf16.msra.mxu0 %v4232
      %4289 = vmatprep.subr.bf16.mxu0 0
      %4290 = vmatpush1.bf16.msra.mxu0 %v4233
      %4291 = vmatprep.subr.bf16.mxu0 0
      %4292 = vmatpush1.bf16.msra.mxu0 %v4234
      %4293 = vmatprep.subr.bf16.mxu0 0
      %4294 = vmatpush1.bf16.msra.mxu0 %v4235
      %4295 = vmatprep.subr.bf16.mxu0 0
      %4296 = vmatpush1.bf16.msra.mxu0 %v4236
      %4297 = vmatprep.subr.bf16.mxu0 0
      %4298 = vmatpush1.bf16.msra.mxu0 %v4237
      %4299 = vmatprep.subr.bf16.mxu0 0
      %4300 = vmatpush1.bf16.msra.mxu0 %v4238
      %4301 = vmatprep.subr.bf16.mxu0 0
      %4302 = vmatpush1.bf16.msra.mxu0 %v4239
      %4303 = vmatprep.subr.bf16.mxu0 0
      %4304 = vmatpush1.bf16.msra.mxu0 %v4240
      %4305 = vmatprep.mubr.bf16.mxu0 %v3757
      %4306 = vmatmul.mubr.bf16.gmra.mrb[0].mxu0 %v3655
      %v4307 = vpop.f32.mrb[0].mxu0
      %v4308 = vadd.f32 0.0, %v4307
      %v4309 = vpop.f32.mrb[0].mxu0
      %v4310 = vpop.f32.mrb[0].mxu0
      %v4311 = vadd.f32 0.0, %v4310
      %v4312 = vpop.f32.mrb[0].mxu0
      %4313 = vmatprep.mubr.bf16.mxu0 %v3769
      %4314 = vmatmul.mubr.bf16.gmra.mrb[0].mxu0 %v3656
      %v4315 = vpop.f32.mrb[0].mxu0
      %v4316 = vadd.f32 0.0, %v4315
      %v4317 = vpop.f32.mrb[0].mxu0
      %v4318 = vpop.f32.mrb[0].mxu0
      %v4319 = vadd.f32 0.0, %v4318
      %v4320 = vpop.f32.mrb[0].mxu0
      %4321 = vmatprep.mubr.bf16.mxu0 %v3781
      %4322 = vmatmul.mubr.bf16.gmra.mrb[0].mxu0 %v3657
      %v4323 = vpop.f32.mrb[0].mxu0
      %v4324 = vadd.f32 0.0, %v4323
      %v4325 = vpop.f32.mrb[0].mxu0
      %v4326 = vpop.f32.mrb[0].mxu0
      %v4327 = vadd.f32 0.0, %v4326
      %v4328 = vpop.f32.mrb[0].mxu0
      %4329 = vmatprep.mubr.bf16.mxu0 %v3793
      %4330 = vmatmul.mubr.bf16.gmra.mrb[0].mxu0 %v3658
      %v4331 = vpop.f32.mrb[0].mxu0
      %v4332 = vadd.f32 0.0, %v4331
      %v4333 = vpop.f32.mrb[0].mxu0
      %v4334 = vpop.f32.mrb[0].mxu0
      %v4335 = vadd.f32 0.0, %v4334
      %v4336 = vpop.f32.mrb[0].mxu0
      %4337 = vmatprep.mubr.bf16.mxu0 %v3805
      %4338 = vmatmul.mubr.bf16.gmra.mrb[0].mxu0 %v3659
      %v4339 = vpop.f32.mrb[0].mxu0
      %v4340 = vadd.f32 0.0, %v4339
      %v4341 = vpop.f32.mrb[0].mxu0
      %v4342 = vpop.f32.mrb[0].mxu0
      %v4343 = vadd.f32 0.0, %v4342
      %v4344 = vpop.f32.mrb[0].mxu0
      %4345 = vmatprep.mubr.bf16.mxu0 %v3817
      %4346 = vmatmul.mubr.bf16.gmra.mrb[0].mxu0 %v3660
      %v4347 = vpop.f32.mrb[0].mxu0
      %v4348 = vadd.f32 0.0, %v4347
      %v4349 = vpop.f32.mrb[0].mxu0
      %v4350 = vpop.f32.mrb[0].mxu0
      %v4351 = vadd.f32 0.0, %v4350
      %v4352 = vpop.f32.mrb[0].mxu0
      %4353 = vmatprep.mubr.bf16.mxu0 %v3829
      %4354 = vmatmul.mubr.bf16.gmra.mrb[0].mxu0 %v3661
      %v4355 = vpop.f32.mrb[0].mxu0
      %v4356 = vadd.f32 0.0, %v4355
      %v4357 = vpop.f32.mrb[0].mxu0
      %v4358 = vpop.f32.mrb[0].mxu0
      %v4359 = vadd.f32 0.0, %v4358
      %v4360 = vpop.f32.mrb[0].mxu0
      %4361 = vmatprep.mubr.bf16.mxu0 %v3841
      %4362 = vmatmul.mubr.bf16.gmra.mrb[0].mxu0 %v3662
      %v4363 = vpop.f32.mrb[0].mxu0
      %v4364 = vadd.f32 0.0, %v4363
      %v4365 = vpop.f32.mrb[0].mxu0
      %v4366 = vpop.f32.mrb[0].mxu0
      %v4367 = vadd.f32 0.0, %v4366
      %v4368 = vpop.f32.mrb[0].mxu0
      %4369 = vmatprep.mubr.bf16.mxu0 %v3853
      %4370 = vmatmul.mubr.bf16.gmra.mrb[0].mxu0 %v3663
      %v4371 = vpop.f32.mrb[0].mxu0
      %v4372 = vadd.f32 0.0, %v4371
      %v4373 = vpop.f32.mrb[0].mxu0
      %v4374 = vpop.f32.mrb[0].mxu0
      %v4375 = vadd.f32 0.0, %v4374
      %v4376 = vpop.f32.mrb[0].mxu0
      %4377 = vmatprep.mubr.bf16.mxu0 %v3865
      %4378 = vmatmul.mubr.bf16.gmra.mrb[0].mxu0 %v3664
      %v4379 = vpop.f32.mrb[0].mxu0
      %v4380 = vadd.f32 0.0, %v4379
      %v4381 = vpop.f32.mrb[0].mxu0
      %v4382 = vpop.f32.mrb[0].mxu0
      %v4383 = vadd.f32 0.0, %v4382
      %v4384 = vpop.f32.mrb[0].mxu0
      %4385 = vmatprep.mubr.bf16.mxu0 %v3877
      %4386 = vmatmul.mubr.bf16.gmra.mrb[0].mxu0 %v3665
      %v4387 = vpop.f32.mrb[0].mxu0
      %v4388 = vadd.f32 0.0, %v4387
      %v4389 = vpop.f32.mrb[0].mxu0
      %v4390 = vpop.f32.mrb[0].mxu0
      %v4391 = vadd.f32 0.0, %v4390
      %v4392 = vpop.f32.mrb[0].mxu0
      %4393 = vmatprep.mubr.bf16.mxu0 %v3889
      %4394 = vmatmul.mubr.bf16.gmra.mrb[0].mxu0 %v3666
      %v4395 = vpop.f32.mrb[0].mxu0
      %v4396 = vadd.f32 0.0, %v4395
      %v4397 = vpop.f32.mrb[0].mxu0
      %v4398 = vpop.f32.mrb[0].mxu0
      %v4399 = vadd.f32 0.0, %v4398
      %v4400 = vpop.f32.mrb[0].mxu0
      %4401 = vmatprep.mubr.bf16.mxu0 %v3901
      %4402 = vmatmul.mubr.bf16.gmra.mrb[0].mxu0 %v3667
      %v4403 = vpop.f32.mrb[0].mxu0
      %v4404 = vadd.f32 0.0, %v4403
      %v4405 = vpop.f32.mrb[0].mxu0
      %v4406 = vpop.f32.mrb[0].mxu0
      %v4407 = vadd.f32 0.0, %v4406
      %v4408 = vpop.f32.mrb[0].mxu0
      %4409 = vmatprep.mubr.bf16.mxu0 %v3913
      %4410 = vmatmul.mubr.bf16.gmra.mrb[0].mxu0 %v3668
      %v4411 = vpop.f32.mrb[0].mxu0
      %v4412 = vadd.f32 0.0, %v4411
      %v4413 = vpop.f32.mrb[0].mxu0
      %v4414 = vpop.f32.mrb[0].mxu0
      %v4415 = vadd.f32 0.0, %v4414
      %v4416 = vpop.f32.mrb[0].mxu0
      %4417 = vmatprep.mubr.bf16.mxu0 %v3925
      %4418 = vmatmul.mubr.bf16.gmra.mrb[0].mxu0 %v3669
      %v4419 = vpop.f32.mrb[0].mxu0
      %v4420 = vadd.f32 0.0, %v4419
      %v4421 = vpop.f32.mrb[0].mxu0
      %v4422 = vpop.f32.mrb[0].mxu0
      %v4423 = vadd.f32 0.0, %v4422
      %v4424 = vpop.f32.mrb[0].mxu0
      %4425 = vmatprep.mubr.bf16.mxu0 %v4074
      %4426 = vmatmul.mubr.bf16.gmra.mrb[0].mxu0 %v4058
      %v4427 = vpop.f32.mrb[0].mxu0
      %v4428 = vadd.f32 0.0, %v4427
      %v4429 = vpop.f32.mrb[0].mxu0
      %v4430 = vpop.f32.mrb[0].mxu0
      %v4431 = vadd.f32 0.0, %v4430
      %v4432 = vpop.f32.mrb[0].mxu0
      %4433 = vdwg.mxu0
      %4434 = vmatprep.subr.bf16.mxu0 0
      %4435 = vmatpush1.bf16.msra.mxu0 %v4241
      %4436 = vmatprep.subr.bf16.mxu0 0
      %4437 = vmatpush1.bf16.msra.mxu0 %v4242
      %4438 = vmatprep.subr.bf16.mxu0 0
      %4439 = vmatpush1.bf16.msra.mxu0 %v4243
      %4440 = vmatprep.subr.bf16.mxu0 0
      %4441 = vmatpush1.bf16.msra.mxu0 %v4244
      %4442 = vmatprep.subr.bf16.mxu0 0
      %4443 = vmatpush1.bf16.msra.mxu0 %v4245
      %4444 = vmatprep.subr.bf16.mxu0 0
      %4445 = vmatpush1.bf16.msra.mxu0 %v4246
      %4446 = vmatprep.subr.bf16.mxu0 0
      %4447 = vmatpush1.bf16.msra.mxu0 %v4247
      %4448 = vmatprep.subr.bf16.mxu0 0
      %4449 = vmatpush1.bf16.msra.mxu0 %v4248
      %4450 = vmatprep.subr.bf16.mxu0 0
      %4451 = vmatpush1.bf16.msra.mxu0 0
      %4452 = vmatprep.subr.bf16.mxu0 0
      %4453 = vmatpush1.bf16.msra.mxu0 0
      %4454 = vmatprep.subr.bf16.mxu0 0
      %4455 = vmatpush1.bf16.msra.mxu0 0
      %4456 = vmatprep.subr.bf16.mxu0 0
      %4457 = vmatpush1.bf16.msra.mxu0 0
      %4458 = vmatprep.subr.bf16.mxu0 0
      %4459 = vmatpush1.bf16.msra.mxu0 0
      %4460 = vmatprep.subr.bf16.mxu0 0
      %4461 = vmatpush1.bf16.msra.mxu0 0
      %4462 = vmatprep.subr.bf16.mxu0 0
      %4463 = vmatpush1.bf16.msra.mxu0 0
      %4464 = vmatprep.subr.bf16.mxu0 0
      %4465 = vmatpush1.bf16.msra.mxu0 0
      %4466 = vmatprep.mubr.bf16.mxu0 0
      %4467 = vmatmul.mubr.bf16.gmra.mrb[0].mxu0 %v3947
      %v4468 = vpop.f32.mrb[0].mxu0
      %v4469 = vadd.f32 %v4308, %v4468
      %v4470 = vpop.f32.mrb[0].mxu0
      %v4471 = vpop.f32.mrb[0].mxu0
      %v4472 = vadd.f32 %v4311, %v4471
      %v4473 = vpop.f32.mrb[0].mxu0
      %4474 = vmatprep.mubr.bf16.mxu0 0
      %4475 = vmatmul.mubr.bf16.gmra.mrb[0].mxu0 %v3950
      %v4476 = vpop.f32.mrb[0].mxu0
      %v4477 = vadd.f32 %v4316, %v4476
      %v4478 = vpop.f32.mrb[0].mxu0
      %v4479 = vpop.f32.mrb[0].mxu0
      %v4480 = vadd.f32 %v4319, %v4479
      %v4481 = vpop.f32.mrb[0].mxu0
      %4482 = vmatprep.mubr.bf16.mxu0 0
      %4483 = vmatmul.mubr.bf16.gmra.mrb[0].mxu0 %v3953
      %v4484 = vpop.f32.mrb[0].mxu0
      %v4485 = vadd.f32 %v4324, %v4484
      %v4486 = vpop.f32.mrb[0].mxu0
      %v4487 = vpop.f32.mrb[0].mxu0
      %v4488 = vadd.f32 %v4327, %v4487
      %v4489 = vpop.f32.mrb[0].mxu0
      %4490 = vmatprep.mubr.bf16.mxu0 0
      %4491 = vmatmul.mubr.bf16.gmra.mrb[0].mxu0 %v3956
      %v4492 = vpop.f32.mrb[0].mxu0
      %v4493 = vadd.f32 %v4332, %v4492
      %v4494 = vpop.f32.mrb[0].mxu0
      %v4495 = vpop.f32.mrb[0].mxu0
      %v4496 = vadd.f32 %v4335, %v4495
      %v4497 = vpop.f32.mrb[0].mxu0
      %4498 = vmatprep.mubr.bf16.mxu0 0
      %4499 = vmatmul.mubr.bf16.gmra.mrb[0].mxu0 %v3959
      %v4500 = vpop.f32.mrb[0].mxu0
      %v4501 = vadd.f32 %v4340, %v4500
      %v4502 = vpop.f32.mrb[0].mxu0
      %v4503 = vpop.f32.mrb[0].mxu0
      %v4504 = vadd.f32 %v4343, %v4503
      %v4505 = vpop.f32.mrb[0].mxu0
      %4506 = vmatprep.mubr.bf16.mxu0 0
      %4507 = vmatmul.mubr.bf16.gmra.mrb[0].mxu0 %v3962
      %v4508 = vpop.f32.mrb[0].mxu0
      %v4509 = vadd.f32 %v4348, %v4508
      %v4510 = vpop.f32.mrb[0].mxu0
      %v4511 = vpop.f32.mrb[0].mxu0
      %v4512 = vadd.f32 %v4351, %v4511
      %v4513 = vpop.f32.mrb[0].mxu0
      %4514 = vmatprep.mubr.bf16.mxu0 0
      %4515 = vmatmul.mubr.bf16.gmra.mrb[0].mxu0 %v3965
      %v4516 = vpop.f32.mrb[0].mxu0
      %v4517 = vadd.f32 %v4356, %v4516
      %v4518 = vpop.f32.mrb[0].mxu0
      %v4519 = vpop.f32.mrb[0].mxu0
      %v4520 = vadd.f32 %v4359, %v4519
      %v4521 = vpop.f32.mrb[0].mxu0
      %4522 = vmatprep.mubr.bf16.mxu0 0
      %4523 = vmatmul.mubr.bf16.gmra.mrb[0].mxu0 %v3968
      %v4524 = vpop.f32.mrb[0].mxu0
      %v4525 = vadd.f32 %v4364, %v4524
      %v4526 = vpop.f32.mrb[0].mxu0
      %v4527 = vpop.f32.mrb[0].mxu0
      %v4528 = vadd.f32 %v4367, %v4527
      %v4529 = vpop.f32.mrb[0].mxu0
      %4530 = vmatprep.mubr.bf16.mxu0 0
      %4531 = vmatmul.mubr.bf16.gmra.mrb[0].mxu0 %v3971
      %v4532 = vpop.f32.mrb[0].mxu0
      %v4533 = vadd.f32 %v4372, %v4532
      %v4534 = vpop.f32.mrb[0].mxu0
      %v4535 = vpop.f32.mrb[0].mxu0
      %v4536 = vadd.f32 %v4375, %v4535
      %v4537 = vpop.f32.mrb[0].mxu0
      %4538 = vmatprep.mubr.bf16.mxu0 0
      %4539 = vmatmul.mubr.bf16.gmra.mrb[0].mxu0 %v3974
      %v4540 = vpop.f32.mrb[0].mxu0
      %v4541 = vadd.f32 %v4380, %v4540
      %v4542 = vpop.f32.mrb[0].mxu0
      %v4543 = vpop.f32.mrb[0].mxu0
      %v4544 = vadd.f32 %v4383, %v4543
      %v4545 = vpop.f32.mrb[0].mxu0
      %4546 = vmatprep.mubr.bf16.mxu0 0
      %4547 = vmatmul.mubr.bf16.gmra.mrb[0].mxu0 %v3977
      %v4548 = vpop.f32.mrb[0].mxu0
      %v4549 = vadd.f32 %v4388, %v4548
      %v4550 = vpop.f32.mrb[0].mxu0
      %v4551 = vpop.f32.mrb[0].mxu0
      %v4552 = vadd.f32 %v4391, %v4551
      %v4553 = vpop.f32.mrb[0].mxu0
      %4554 = vmatprep.mubr.bf16.mxu0 0
      %4555 = vmatmul.mubr.bf16.gmra.mrb[0].mxu0 %v3980
      %v4556 = vpop.f32.mrb[0].mxu0
      %v4557 = vadd.f32 %v4396, %v4556
      %v4558 = vpop.f32.mrb[0].mxu0
      %v4559 = vpop.f32.mrb[0].mxu0
      %v4560 = vadd.f32 %v4399, %v4559
      %v4561 = vpop.f32.mrb[0].mxu0
      %4562 = vmatprep.mubr.bf16.mxu0 0
      %4563 = vmatmul.mubr.bf16.gmra.mrb[0].mxu0 %v3983
      %v4564 = vpop.f32.mrb[0].mxu0
      %v4565 = vadd.f32 %v4404, %v4564
      %v4566 = vpop.f32.mrb[0].mxu0
      %v4567 = vpop.f32.mrb[0].mxu0
      %v4568 = vadd.f32 %v4407, %v4567
      %v4569 = vpop.f32.mrb[0].mxu0
      %4570 = vmatprep.mubr.bf16.mxu0 0
      %4571 = vmatmul.mubr.bf16.gmra.mrb[0].mxu0 %v3986
      %v4572 = vpop.f32.mrb[0].mxu0
      %v4573 = vadd.f32 %v4412, %v4572
      %v4574 = vpop.f32.mrb[0].mxu0
      %v4575 = vpop.f32.mrb[0].mxu0
      %v4576 = vadd.f32 %v4415, %v4575
      %v4577 = vpop.f32.mrb[0].mxu0
      %4578 = vmatprep.mubr.bf16.mxu0 0
      %4579 = vmatmul.mubr.bf16.gmra.mrb[0].mxu0 %v3989
      %v4580 = vpop.f32.mrb[0].mxu0
      %v4581 = vadd.f32 %v4420, %v4580
      %v4582 = vpop.f32.mrb[0].mxu0
      %v4583 = vpop.f32.mrb[0].mxu0
      %v4584 = vadd.f32 %v4423, %v4583
      %v4585 = vpop.f32.mrb[0].mxu0
      %4586 = vmatprep.mubr.bf16.mxu0 0
      %4587 = vmatmul.mubr.bf16.gmra.mrb[0].mxu0 %v4078
      %v4588 = vpop.f32.mrb[0].mxu0
      %v4589 = vadd.f32 %v4428, %v4588
      %v4590 = vpop.f32.mrb[0].mxu0
      %v4591 = vpop.f32.mrb[0].mxu0
      %v4592 = vadd.f32 %v4431, %v4591
      %v4593 = vpop.f32.mrb[0].mxu0
      %4594 = vdwg.mxu0
      %v4643 = vunpack.c.l.b16 %v4006
      %v4644 = vunpack.c.l.b16 %v4007
      %v4645 = vunpack.c.l.b16 %v4008
      %v4646 = vunpack.c.l.b16 %v4009
      %v4647 = vunpack.c.l.b16 %v4010
      %v4648 = vunpack.c.l.b16 %v4011
      %v4649 = vunpack.c.l.b16 %v4012
      %v4650 = vunpack.c.l.b16 %v4013
      %v4651 = vunpack.c.l.b16 %v4014
      %v4652 = vunpack.c.l.b16 %v4015
      %v4653 = vunpack.c.l.b16 %v4016
      %v4654 = vunpack.c.l.b16 %v4017
      %v4655 = vunpack.c.l.b16 %v4018
      %v4656 = vunpack.c.l.b16 %v4019
      %v4657 = vunpack.c.l.b16 %v4020
      %v4658 = vunpack.c.l.b16 %v4021
      %v4659 = vunpack.c.l.b16 %v4022
      %v4660 = vunpack.c.l.b16 %v4023
      %v4661 = vunpack.c.l.b16 %v4024
      %v4662 = vunpack.c.l.b16 %v4025
      %v4663 = vunpack.c.l.b16 %v4026
      %v4664 = vunpack.c.l.b16 %v4027
      %v4665 = vunpack.c.l.b16 %v4028
      %v4666 = vunpack.c.l.b16 %v4029
      %v4667 = vunpack.c.l.b16 %v4030
      %v4668 = vunpack.c.l.b16 %v4031
      %v4669 = vunpack.c.l.b16 %v4032
      %v4670 = vunpack.c.l.b16 %v4033
      %v4671 = vunpack.c.l.b16 %v4034
      %v4672 = vunpack.c.l.b16 %v4035
      %v4673 = vunpack.c.l.b16 %v4036
      %v4674 = vunpack.c.l.b16 %v4037
      %v4675 = vunpack.c.l.b16 %v4038
      %v4676 = vunpack.c.l.b16 %v4039
      %v4677 = vunpack.c.l.b16 %v4040
      %v4678 = vunpack.c.l.b16 %v4041
      %v4679 = vunpack.c.l.b16 %v4042
      %v4680 = vunpack.c.l.b16 %v4043
      %v4681 = vunpack.c.l.b16 %v4044
      %v4682 = vunpack.c.l.b16 %v4045
      %v4683 = vunpack.c.l.b16 %v4046
      %v4684 = vunpack.c.l.b16 %v4047
      %v4685 = vunpack.c.l.b16 %v4048
      %v4686 = vunpack.c.l.b16 %v4049
      %v4687 = vunpack.c.l.b16 %v4050
      %v4688 = vunpack.c.l.b16 %v4051
      %v4689 = vunpack.c.l.b16 %v4052
      %v4690 = vunpack.c.l.b16 %v4053
      %v4691 = vpack.c.b16 %v4644, %v4643
      %v4692 = vpack.c.b16 %v4646, %v4645
      %v4693 = vpack.c.b16 %v4648, %v4647
      %v4694 = vpack.c.b16 %v4650, %v4649
      %v4695 = vpack.c.b16 %v4652, %v4651
      %v4696 = vpack.c.b16 %v4654, %v4653
      %v4697 = vpack.c.b16 %v4656, %v4655
      %v4698 = vpack.c.b16 %v4658, %v4657
      %v4699 = vpack.c.b16 %v4660, %v4659
      %v4700 = vpack.c.b16 %v4662, %v4661
      %v4701 = vpack.c.b16 %v4664, %v4663
      %v4702 = vpack.c.b16 %v4666, %v4665
      %v4703 = vpack.c.b16 %v4668, %v4667
      %v4704 = vpack.c.b16 %v4670, %v4669
      %v4705 = vpack.c.b16 %v4672, %v4671
      %v4706 = vpack.c.b16 %v4674, %v4673
      %v4707 = vpack.c.b16 %v4676, %v4675
      %v4708 = vpack.c.b16 %v4678, %v4677
      %v4709 = vpack.c.b16 %v4680, %v4679
      %v4710 = vpack.c.b16 %v4682, %v4681
      %v4711 = vpack.c.b16 %v4684, %v4683
      %v4712 = vpack.c.b16 %v4686, %v4685
      %v4713 = vpack.c.b16 %v4688, %v4687
      %v4714 = vpack.c.b16 %v4690, %v4689
      %4739 = vmatprep.subr.bf16.mxu0 0
      %4740 = vmatpush1.bf16.msra.mxu0 %v4691
      %4741 = vmatprep.subr.bf16.mxu0 0
      %4742 = vmatpush1.bf16.msra.mxu0 %v4692
      %4743 = vmatprep.subr.bf16.mxu0 0
      %4744 = vmatpush1.bf16.msra.mxu0 %v4693
      %4745 = vmatprep.subr.bf16.mxu0 0
      %4746 = vmatpush1.bf16.msra.mxu0 %v4694
      %4747 = vmatprep.subr.bf16.mxu0 0
      %4748 = vmatpush1.bf16.msra.mxu0 %v4695
      %4749 = vmatprep.subr.bf16.mxu0 0
      %4750 = vmatpush1.bf16.msra.mxu0 %v4696
      %4751 = vmatprep.subr.bf16.mxu0 0
      %4752 = vmatpush1.bf16.msra.mxu0 %v4697
      %4753 = vmatprep.subr.bf16.mxu0 0
      %4754 = vmatpush1.bf16.msra.mxu0 %v4698
      %4755 = vmatprep.subr.bf16.mxu0 0
      %4756 = vmatpush1.bf16.msra.mxu0 %v4699
      %4757 = vmatprep.subr.bf16.mxu0 0
      %4758 = vmatpush1.bf16.msra.mxu0 %v4700
      %4759 = vmatprep.subr.bf16.mxu0 0
      %4760 = vmatpush1.bf16.msra.mxu0 %v4701
      %4761 = vmatprep.subr.bf16.mxu0 0
      %4762 = vmatpush1.bf16.msra.mxu0 %v4702
      %4763 = vmatprep.subr.bf16.mxu0 0
      %4764 = vmatpush1.bf16.msra.mxu0 %v4703
      %4765 = vmatprep.subr.bf16.mxu0 0
      %4766 = vmatpush1.bf16.msra.mxu0 %v4704
      %4767 = vmatprep.subr.bf16.mxu0 0
      %4768 = vmatpush1.bf16.msra.mxu0 %v4705
      %4769 = vmatprep.subr.bf16.mxu0 0
      %4770 = vmatpush1.bf16.msra.mxu0 %v4706
      %4771 = vmatprep.mubr.bf16.mxu0 %v3745
      %4772 = vmatmul.mubr.bf16.gmra.mrb[0].mxu0 %v3654
      %v4773 = vpop.f32.mrb[0].mxu0
      %v4774 = vadd.f32 %v4469, %v4773
      %v4775 = vpop.f32.mrb[0].mxu0
      %v4776 = vpop.f32.mrb[0].mxu0
      %v4777 = vadd.f32 %v4472, %v4776
      %v4778 = vpop.f32.mrb[0].mxu0
      %4779 = vmatprep.mubr.bf16.mxu0 %v3757
      %4780 = vmatmul.mubr.bf16.gmra.mrb[0].mxu0 %v3655
      %v4781 = vpop.f32.mrb[0].mxu0
      %v4782 = vadd.f32 %v4477, %v4781
      %v4783 = vpop.f32.mrb[0].mxu0
      %v4784 = vpop.f32.mrb[0].mxu0
      %v4785 = vadd.f32 %v4480, %v4784
      %v4786 = vpop.f32.mrb[0].mxu0
      %4787 = vmatprep.mubr.bf16.mxu0 %v3769
      %4788 = vmatmul.mubr.bf16.gmra.mrb[0].mxu0 %v3656
      %v4789 = vpop.f32.mrb[0].mxu0
      %v4790 = vadd.f32 %v4485, %v4789
      %v4791 = vpop.f32.mrb[0].mxu0
      %v4792 = vpop.f32.mrb[0].mxu0
      %v4793 = vadd.f32 %v4488, %v4792
      %v4794 = vpop.f32.mrb[0].mxu0
      %4795 = vmatprep.mubr.bf16.mxu0 %v3781
      %4796 = vmatmul.mubr.bf16.gmra.mrb[0].mxu0 %v3657
      %v4797 = vpop.f32.mrb[0].mxu0
      %v4798 = vadd.f32 %v4493, %v4797
      %v4799 = vpop.f32.mrb[0].mxu0
      %v4800 = vpop.f32.mrb[0].mxu0
      %v4801 = vadd.f32 %v4496, %v4800
      %v4802 = vpop.f32.mrb[0].mxu0
      %4803 = vmatprep.mubr.bf16.mxu0 %v3793
      %4804 = vmatmul.mubr.bf16.gmra.mrb[0].mxu0 %v3658
      %v4805 = vpop.f32.mrb[0].mxu0
      %v4806 = vadd.f32 %v4501, %v4805
      %v4807 = vpop.f32.mrb[0].mxu0
      %v4808 = vpop.f32.mrb[0].mxu0
      %v4809 = vadd.f32 %v4504, %v4808
      %v4810 = vpop.f32.mrb[0].mxu0
      %4811 = vmatprep.mubr.bf16.mxu0 %v3805
      %4812 = vmatmul.mubr.bf16.gmra.mrb[0].mxu0 %v3659
      %v4813 = vpop.f32.mrb[0].mxu0
      %v4814 = vadd.f32 %v4509, %v4813
      %v4815 = vpop.f32.mrb[0].mxu0
      %v4816 = vpop.f32.mrb[0].mxu0
      %v4817 = vadd.f32 %v4512, %v4816
      %v4818 = vpop.f32.mrb[0].mxu0
      %4819 = vmatprep.mubr.bf16.mxu0 %v3817
      %4820 = vmatmul.mubr.bf16.gmra.mrb[0].mxu0 %v3660
      %v4821 = vpop.f32.mrb[0].mxu0
      %v4822 = vadd.f32 %v4517, %v4821
      %v4823 = vpop.f32.mrb[0].mxu0
      %v4824 = vpop.f32.mrb[0].mxu0
      %v4825 = vadd.f32 %v4520, %v4824
      %v4826 = vpop.f32.mrb[0].mxu0
      %4827 = vmatprep.mubr.bf16.mxu0 %v3829
      %4828 = vmatmul.mubr.bf16.gmra.mrb[0].mxu0 %v3661
      %v4829 = vpop.f32.mrb[0].mxu0
      %v4830 = vadd.f32 %v4525, %v4829
      %v4831 = vpop.f32.mrb[0].mxu0
      %v4832 = vpop.f32.mrb[0].mxu0
      %v4833 = vadd.f32 %v4528, %v4832
      %v4834 = vpop.f32.mrb[0].mxu0
      %4835 = vmatprep.mubr.bf16.mxu0 %v3841
      %4836 = vmatmul.mubr.bf16.gmra.mrb[0].mxu0 %v3662
      %v4837 = vpop.f32.mrb[0].mxu0
      %v4838 = vadd.f32 %v4533, %v4837
      %v4839 = vpop.f32.mrb[0].mxu0
      %v4840 = vpop.f32.mrb[0].mxu0
      %v4841 = vadd.f32 %v4536, %v4840
      %v4842 = vpop.f32.mrb[0].mxu0
      %4843 = vmatprep.mubr.bf16.mxu0 %v3853
      %4844 = vmatmul.mubr.bf16.gmra.mrb[0].mxu0 %v3663
      %v4845 = vpop.f32.mrb[0].mxu0
      %v4846 = vadd.f32 %v4541, %v4845
      %v4847 = vpop.f32.mrb[0].mxu0
      %v4848 = vpop.f32.mrb[0].mxu0
      %v4849 = vadd.f32 %v4544, %v4848
      %v4850 = vpop.f32.mrb[0].mxu0
      %4851 = vmatprep.mubr.bf16.mxu0 %v3865
      %4852 = vmatmul.mubr.bf16.gmra.mrb[0].mxu0 %v3664
      %v4853 = vpop.f32.mrb[0].mxu0
      %v4854 = vadd.f32 %v4549, %v4853
      %v4855 = vpop.f32.mrb[0].mxu0
      %v4856 = vpop.f32.mrb[0].mxu0
      %v4857 = vadd.f32 %v4552, %v4856
      %v4858 = vpop.f32.mrb[0].mxu0
      %4859 = vmatprep.mubr.bf16.mxu0 %v3877
      %4860 = vmatmul.mubr.bf16.gmra.mrb[0].mxu0 %v3665
      %v4861 = vpop.f32.mrb[0].mxu0
      %v4862 = vadd.f32 %v4557, %v4861
      %v4863 = vpop.f32.mrb[0].mxu0
      %v4864 = vpop.f32.mrb[0].mxu0
      %v4865 = vadd.f32 %v4560, %v4864
      %v4866 = vpop.f32.mrb[0].mxu0
      %4867 = vmatprep.mubr.bf16.mxu0 %v3889
      %4868 = vmatmul.mubr.bf16.gmra.mrb[0].mxu0 %v3666
      %v4869 = vpop.f32.mrb[0].mxu0
      %v4870 = vadd.f32 %v4565, %v4869
      %v4871 = vpop.f32.mrb[0].mxu0
      %v4872 = vpop.f32.mrb[0].mxu0
      %v4873 = vadd.f32 %v4568, %v4872
      %v4874 = vpop.f32.mrb[0].mxu0
      %4875 = vmatprep.mubr.bf16.mxu0 %v3901
      %4876 = vmatmul.mubr.bf16.gmra.mrb[0].mxu0 %v3667
      %v4877 = vpop.f32.mrb[0].mxu0
      %v4878 = vadd.f32 %v4573, %v4877
      %v4879 = vpop.f32.mrb[0].mxu0
      %v4880 = vpop.f32.mrb[0].mxu0
      %v4881 = vadd.f32 %v4576, %v4880
      %v4882 = vpop.f32.mrb[0].mxu0
      %4883 = vmatprep.mubr.bf16.mxu0 %v3913
      %4884 = vmatmul.mubr.bf16.gmra.mrb[0].mxu0 %v3668
      %v4885 = vpop.f32.mrb[0].mxu0
      %v4886 = vadd.f32 %v4581, %v4885
      %v4887 = vpop.f32.mrb[0].mxu0
      %v4888 = vpop.f32.mrb[0].mxu0
      %v4889 = vadd.f32 %v4584, %v4888
      %v4890 = vpop.f32.mrb[0].mxu0
      %4891 = vmatprep.mubr.bf16.mxu0 %v3925
      %4892 = vmatmul.mubr.bf16.gmra.mrb[0].mxu0 %v3669
      %v4893 = vpop.f32.mrb[0].mxu0
      %v4894 = vadd.f32 %v4589, %v4893
      %v4895 = vpop.f32.mrb[0].mxu0
      %v4896 = vpop.f32.mrb[0].mxu0
      %v4897 = vadd.f32 %v4592, %v4896
      %v4898 = vpop.f32.mrb[0].mxu0
      %4899 = vdwg.mxu0
      %4900 = vmatprep.subr.bf16.mxu0 0
      %4901 = vmatpush1.bf16.msra.mxu0 %v4707
      %4902 = vmatprep.subr.bf16.mxu0 0
      %4903 = vmatpush1.bf16.msra.mxu0 %v4708
      %4904 = vmatprep.subr.bf16.mxu0 0
      %4905 = vmatpush1.bf16.msra.mxu0 %v4709
      %4906 = vmatprep.subr.bf16.mxu0 0
      %4907 = vmatpush1.bf16.msra.mxu0 %v4710
      %4908 = vmatprep.subr.bf16.mxu0 0
      %4909 = vmatpush1.bf16.msra.mxu0 %v4711
      %4910 = vmatprep.subr.bf16.mxu0 0
      %4911 = vmatpush1.bf16.msra.mxu0 %v4712
      %4912 = vmatprep.subr.bf16.mxu0 0
      %4913 = vmatpush1.bf16.msra.mxu0 %v4713
      %4914 = vmatprep.subr.bf16.mxu0 0
      %4915 = vmatpush1.bf16.msra.mxu0 %v4714
      %4916 = vmatprep.subr.bf16.mxu0 0
      %4917 = vmatpush1.bf16.msra.mxu0 0
      %4918 = vmatprep.subr.bf16.mxu0 0
      %4919 = vmatpush1.bf16.msra.mxu0 0
      %4920 = vmatprep.subr.bf16.mxu0 0
      %4921 = vmatpush1.bf16.msra.mxu0 0
      %4922 = vmatprep.subr.bf16.mxu0 0
      %4923 = vmatpush1.bf16.msra.mxu0 0
      %4924 = vmatprep.subr.bf16.mxu0 0
      %4925 = vmatpush1.bf16.msra.mxu0 0
      %4926 = vmatprep.subr.bf16.mxu0 0
      %4927 = vmatpush1.bf16.msra.mxu0 0
      %4928 = vmatprep.subr.bf16.mxu0 0
      %4929 = vmatpush1.bf16.msra.mxu0 0
      %4930 = vmatprep.subr.bf16.mxu0 0
      %4931 = vmatpush1.bf16.msra.mxu0 0
      %4932 = vmatprep.mubr.bf16.mxu0 0
      %4933 = vmatmul.mubr.bf16.gmra.mrb[0].mxu0 %v3944
      %v4934 = vpop.f32.mrb[0].mxu0
      %v4935 = vadd.f32 %v4774, %v4934
      %v4936 = vpop.f32.mrb[0].mxu0
      %v4937 = vpop.f32.mrb[0].mxu0
      %v4938 = vadd.f32 %v4777, %v4937
      %v4939 = vpop.f32.mrb[0].mxu0
      %4940 = vmatprep.mubr.bf16.mxu0 0
      %4941 = vmatmul.mubr.bf16.gmra.mrb[0].mxu0 %v3947
      %v4942 = vpop.f32.mrb[0].mxu0
      %v4943 = vadd.f32 %v4782, %v4942
      %v4944 = vpop.f32.mrb[0].mxu0
      %v4945 = vpop.f32.mrb[0].mxu0
      %v4946 = vadd.f32 %v4785, %v4945
      %v4947 = vpop.f32.mrb[0].mxu0
      %4948 = vmatprep.mubr.bf16.mxu0 0
      %4949 = vmatmul.mubr.bf16.gmra.mrb[0].mxu0 %v3950
      %v4950 = vpop.f32.mrb[0].mxu0
      %v4951 = vadd.f32 %v4790, %v4950
      %v4952 = vpop.f32.mrb[0].mxu0
      %v4953 = vpop.f32.mrb[0].mxu0
      %v4954 = vadd.f32 %v4793, %v4953
      %v4955 = vpop.f32.mrb[0].mxu0
      %4956 = vmatprep.mubr.bf16.mxu0 0
      %4957 = vmatmul.mubr.bf16.gmra.mrb[0].mxu0 %v3953
      %v4958 = vpop.f32.mrb[0].mxu0
      %v4959 = vadd.f32 %v4798, %v4958
      %v4960 = vpop.f32.mrb[0].mxu0
      %v4961 = vpop.f32.mrb[0].mxu0
      %v4962 = vadd.f32 %v4801, %v4961
      %v4963 = vpop.f32.mrb[0].mxu0
      %4964 = vmatprep.mubr.bf16.mxu0 0
      %4965 = vmatmul.mubr.bf16.gmra.mrb[0].mxu0 %v3956
      %v4966 = vpop.f32.mrb[0].mxu0
      %v4967 = vadd.f32 %v4806, %v4966
      %v4968 = vpop.f32.mrb[0].mxu0
      %v4969 = vpop.f32.mrb[0].mxu0
      %v4970 = vadd.f32 %v4809, %v4969
      %v4971 = vpop.f32.mrb[0].mxu0
      %4972 = vmatprep.mubr.bf16.mxu0 0
      %4973 = vmatmul.mubr.bf16.gmra.mrb[0].mxu0 %v3959
      %v4974 = vpop.f32.mrb[0].mxu0
      %v4975 = vadd.f32 %v4814, %v4974
      %v4976 = vpop.f32.mrb[0].mxu0
      %v4977 = vpop.f32.mrb[0].mxu0
      %v4978 = vadd.f32 %v4817, %v4977
      %v4979 = vpop.f32.mrb[0].mxu0
      %4980 = vmatprep.mubr.bf16.mxu0 0
      %4981 = vmatmul.mubr.bf16.gmra.mrb[0].mxu0 %v3962
      %v4982 = vpop.f32.mrb[0].mxu0
      %v4983 = vadd.f32 %v4822, %v4982
      %v4984 = vpop.f32.mrb[0].mxu0
      %v4985 = vpop.f32.mrb[0].mxu0
      %v4986 = vadd.f32 %v4825, %v4985
      %v4987 = vpop.f32.mrb[0].mxu0
      %4988 = vmatprep.mubr.bf16.mxu0 0
      %4989 = vmatmul.mubr.bf16.gmra.mrb[0].mxu0 %v3965
      %v4990 = vpop.f32.mrb[0].mxu0
      %v4991 = vadd.f32 %v4830, %v4990
      %v4992 = vpop.f32.mrb[0].mxu0
      %v4993 = vpop.f32.mrb[0].mxu0
      %v4994 = vadd.f32 %v4833, %v4993
      %v4995 = vpop.f32.mrb[0].mxu0
      %4996 = vmatprep.mubr.bf16.mxu0 0
      %4997 = vmatmul.mubr.bf16.gmra.mrb[0].mxu0 %v3968
      %v4998 = vpop.f32.mrb[0].mxu0
      %v4999 = vadd.f32 %v4838, %v4998
      %v5000 = vpop.f32.mrb[0].mxu0
      %v5001 = vpop.f32.mrb[0].mxu0
      %v5002 = vadd.f32 %v4841, %v5001
      %v5003 = vpop.f32.mrb[0].mxu0
      %5004 = vmatprep.mubr.bf16.mxu0 0
      %5005 = vmatmul.mubr.bf16.gmra.mrb[0].mxu0 %v3971
      %v5006 = vpop.f32.mrb[0].mxu0
      %v5007 = vadd.f32 %v4846, %v5006
      %v5008 = vpop.f32.mrb[0].mxu0
      %v5009 = vpop.f32.mrb[0].mxu0
      %v5010 = vadd.f32 %v4849, %v5009
      %v5011 = vpop.f32.mrb[0].mxu0
      %5012 = vmatprep.mubr.bf16.mxu0 0
      %5013 = vmatmul.mubr.bf16.gmra.mrb[0].mxu0 %v3974
      %v5014 = vpop.f32.mrb[0].mxu0
      %v5015 = vadd.f32 %v4854, %v5014
      %v5016 = vpop.f32.mrb[0].mxu0
      %v5017 = vpop.f32.mrb[0].mxu0
      %v5018 = vadd.f32 %v4857, %v5017
      %v5019 = vpop.f32.mrb[0].mxu0
      %5020 = vmatprep.mubr.bf16.mxu0 0
      %5021 = vmatmul.mubr.bf16.gmra.mrb[0].mxu0 %v3977
      %v5022 = vpop.f32.mrb[0].mxu0
      %v5023 = vadd.f32 %v4862, %v5022
      %v5024 = vpop.f32.mrb[0].mxu0
      %v5025 = vpop.f32.mrb[0].mxu0
      %v5026 = vadd.f32 %v4865, %v5025
      %v5027 = vpop.f32.mrb[0].mxu0
      %5028 = vmatprep.mubr.bf16.mxu0 0
      %5029 = vmatmul.mubr.bf16.gmra.mrb[0].mxu0 %v3980
      %v5030 = vpop.f32.mrb[0].mxu0
      %v5031 = vadd.f32 %v4870, %v5030
      %v5032 = vpop.f32.mrb[0].mxu0
      %v5033 = vpop.f32.mrb[0].mxu0
      %v5034 = vadd.f32 %v4873, %v5033
      %v5035 = vpop.f32.mrb[0].mxu0
      %5036 = vmatprep.mubr.bf16.mxu0 0
      %5037 = vmatmul.mubr.bf16.gmra.mrb[0].mxu0 %v3983
      %v5038 = vpop.f32.mrb[0].mxu0
      %v5039 = vadd.f32 %v4878, %v5038
      %v5040 = vpop.f32.mrb[0].mxu0
      %v5041 = vpop.f32.mrb[0].mxu0
      %v5042 = vadd.f32 %v4881, %v5041
      %v5043 = vpop.f32.mrb[0].mxu0
      %5044 = vmatprep.mubr.bf16.mxu0 0
      %5045 = vmatmul.mubr.bf16.gmra.mrb[0].mxu0 %v3986
      %v5046 = vpop.f32.mrb[0].mxu0
      %v5047 = vadd.f32 %v4886, %v5046
      %v5048 = vpop.f32.mrb[0].mxu0
      %v5049 = vpop.f32.mrb[0].mxu0
      %v5050 = vadd.f32 %v4889, %v5049
      %v5051 = vpop.f32.mrb[0].mxu0
      %5052 = vmatprep.mubr.bf16.mxu0 0
      %5053 = vmatmul.mubr.bf16.gmra.mrb[0].mxu0 %v3989
      %v5054 = vpop.f32.mrb[0].mxu0
      %v5055 = vadd.f32 %v4894, %v5054
      %v5056 = vpop.f32.mrb[0].mxu0
      %v5057 = vpop.f32.mrb[0].mxu0
      %v5058 = vadd.f32 %v4897, %v5057
      %v5059 = vpop.f32.mrb[0].mxu0
      %5060 = vdwg.mxu0
      %v5063 = vunpack.c.l.b16 %v3587
      %v5064 = vunpack.c.l.b16 %v3588
      %v5065 = vpack.c.b16 %v5064, %v5063
      %v5068 = vunpack.c.l.b16 %v3589
      %v5069 = vpack.c.b16 %v5068, %v5068
      %v5071 = vshrl.u32 %v5065, 16
      %v5073 = vshll.u32 %v5065, 16
      %v5075 = vrot.slane %v5073, 1
      %v5076 = vor.u32 %v5071, %v5075
      %v5078 = vshll.u32 %v5069, 16
      %v5080 = vrot.slane %v5078, 1
      %v5081 = vsel %vm504, %v5076, %v5080
      %v5083 = vrot.slane %v5065, 1
      %v5084 = vrot.slane %v5069, 1
      %v5085 = vsel %vm739, %v5083, %v5084
      %s5087 = scalar_lea.vmem %s4, 384
      %v5088 = vld [vmem:[%s5087] sm:$0xf]
      %v5089 = vld [vmem:[%s5087 + $0x4] sm:$0xf]
      %v5090 = vld [vmem:[%s5087 + $0x8] sm:$0xf]
      %v5091 = vld [vmem:[%s5087 + $0xc] sm:$0xf]
      %v5092 = vld [vmem:[%s5087 + $0x10] sm:$0xf]
      %v5093 = vld [vmem:[%s5087 + $0x14] sm:$0xf]
      %v5094 = vld [vmem:[%s5087 + $0x18] sm:$0xf]
      %v5095 = vld [vmem:[%s5087 + $0x1c] sm:$0xf]
      %v5096 = vld [vmem:[%s5087 + $0x20] sm:$0xf]
      %v5097 = vld [vmem:[%s5087 + $0x24] sm:$0xf]
      %v5098 = vld [vmem:[%s5087 + $0x28] sm:$0xf]
      %v5099 = vld [vmem:[%s5087 + $0x2c] sm:$0xf]
      %v5100 = vld [vmem:[%s5087 + $0x30] sm:$0xf]
      %v5101 = vld [vmem:[%s5087 + $0x34] sm:$0xf]
      %v5102 = vld [vmem:[%s5087 + $0x38] sm:$0xf]
      %v5103 = vld [vmem:[%s5087 + $0x3c] sm:$0xf]
      %v5104 = vld [vmem:[%s5087 + $0x40] sm:$0xf]
      %v5105 = vld [vmem:[%s5087 + $0x44] sm:$0xf]
      %v5106 = vld [vmem:[%s5087 + $0x48] sm:$0xf]
      %v5107 = vld [vmem:[%s5087 + $0x4c] sm:$0xf]
      %v5108 = vld [vmem:[%s5087 + $0x50] sm:$0xf]
      %v5109 = vld [vmem:[%s5087 + $0x54] sm:$0xf]
      %v5110 = vld [vmem:[%s5087 + $0x58] sm:$0xf]
      %v5111 = vld [vmem:[%s5087 + $0x5c] sm:$0xf]
      %v5112 = vld [vmem:[%s5087 + $0x60] sm:$0xf]
      %v5113 = vld [vmem:[%s5087 + $0x64] sm:$0xf]
      %v5114 = vld [vmem:[%s5087 + $0x68] sm:$0xf]
      %v5115 = vld [vmem:[%s5087 + $0x6c] sm:$0xf]
      %v5116 = vld [vmem:[%s5087 + $0x70] sm:$0xf]
      %v5117 = vld [vmem:[%s5087 + $0x74] sm:$0xf]
      %v5118 = vld [vmem:[%s5087 + $0x78] sm:$0xf]
      %v5119 = vld [vmem:[%s5087 + $0x7c] sm:$0xf]
      %v5120 = vld [vmem:[%s5087 + $0x80] sm:$0xf]
      %v5121 = vld [vmem:[%s5087 + $0x84] sm:$0xf]
      %v5122 = vld [vmem:[%s5087 + $0x88] sm:$0xf]
      %v5123 = vld [vmem:[%s5087 + $0x8c] sm:$0xf]
      %v5124 = vld [vmem:[%s5087 + $0x90] sm:$0xf]
      %v5125 = vld [vmem:[%s5087 + $0x94] sm:$0xf]
      %v5126 = vld [vmem:[%s5087 + $0x98] sm:$0xf]
      %v5127 = vld [vmem:[%s5087 + $0x9c] sm:$0xf]
      %v5128 = vld [vmem:[%s5087 + $0xa0] sm:$0xf]
      %v5129 = vld [vmem:[%s5087 + $0xa4] sm:$0xf]
      %v5130 = vld [vmem:[%s5087 + $0xa8] sm:$0xf]
      %v5131 = vld [vmem:[%s5087 + $0xac] sm:$0xf]
      %v5132 = vld [vmem:[%s5087 + $0xb0] sm:$0xf]
      %v5133 = vld [vmem:[%s5087 + $0xb4] sm:$0xf]
      %v5134 = vld [vmem:[%s5087 + $0xb8] sm:$0xf]
      %v5135 = vld [vmem:[%s5087 + $0xbc] sm:$0xf]
      %v5184 = vunpack.c.l.b16 %v5088
      %v5185 = vunpack.c.l.b16 %v5089
      %v5186 = vunpack.c.l.b16 %v5090
      %v5187 = vunpack.c.l.b16 %v5091
      %v5188 = vunpack.c.l.b16 %v5092
      %v5189 = vunpack.c.l.b16 %v5093
      %v5190 = vunpack.c.l.b16 %v5094
      %v5191 = vunpack.c.l.b16 %v5095
      %v5192 = vunpack.c.l.b16 %v5096
      %v5193 = vunpack.c.l.b16 %v5097
      %v5194 = vunpack.c.l.b16 %v5098
      %v5195 = vunpack.c.l.b16 %v5099
      %v5196 = vunpack.c.l.b16 %v5100
      %v5197 = vunpack.c.l.b16 %v5101
      %v5198 = vunpack.c.l.b16 %v5102
      %v5199 = vunpack.c.l.b16 %v5103
      %v5200 = vunpack.c.l.b16 %v5104
      %v5201 = vunpack.c.l.b16 %v5105
      %v5202 = vunpack.c.l.b16 %v5106
      %v5203 = vunpack.c.l.b16 %v5107
      %v5204 = vunpack.c.l.b16 %v5108
      %v5205 = vunpack.c.l.b16 %v5109
      %v5206 = vunpack.c.l.b16 %v5110
      %v5207 = vunpack.c.l.b16 %v5111
      %v5208 = vunpack.c.l.b16 %v5112
      %v5209 = vunpack.c.l.b16 %v5113
      %v5210 = vunpack.c.l.b16 %v5114
      %v5211 = vunpack.c.l.b16 %v5115
      %v5212 = vunpack.c.l.b16 %v5116
      %v5213 = vunpack.c.l.b16 %v5117
      %v5214 = vunpack.c.l.b16 %v5118
      %v5215 = vunpack.c.l.b16 %v5119
      %v5216 = vunpack.c.l.b16 %v5120
      %v5217 = vunpack.c.l.b16 %v5121
      %v5218 = vunpack.c.l.b16 %v5122
      %v5219 = vunpack.c.l.b16 %v5123
      %v5220 = vunpack.c.l.b16 %v5124
      %v5221 = vunpack.c.l.b16 %v5125
      %v5222 = vunpack.c.l.b16 %v5126
      %v5223 = vunpack.c.l.b16 %v5127
      %v5224 = vunpack.c.l.b16 %v5128
      %v5225 = vunpack.c.l.b16 %v5129
      %v5226 = vunpack.c.l.b16 %v5130
      %v5227 = vunpack.c.l.b16 %v5131
      %v5228 = vunpack.c.l.b16 %v5132
      %v5229 = vunpack.c.l.b16 %v5133
      %v5230 = vunpack.c.l.b16 %v5134
      %v5231 = vunpack.c.l.b16 %v5135
      %v5232 = vpack.c.b16 %v5185, %v5184
      %v5233 = vpack.c.b16 %v5187, %v5186
      %v5234 = vpack.c.b16 %v5189, %v5188
      %v5235 = vpack.c.b16 %v5191, %v5190
      %v5236 = vpack.c.b16 %v5193, %v5192
      %v5237 = vpack.c.b16 %v5195, %v5194
      %v5238 = vpack.c.b16 %v5197, %v5196
      %v5239 = vpack.c.b16 %v5199, %v5198
      %v5240 = vpack.c.b16 %v5201, %v5200
      %v5241 = vpack.c.b16 %v5203, %v5202
      %v5242 = vpack.c.b16 %v5205, %v5204
      %v5243 = vpack.c.b16 %v5207, %v5206
      %v5244 = vpack.c.b16 %v5209, %v5208
      %v5245 = vpack.c.b16 %v5211, %v5210
      %v5246 = vpack.c.b16 %v5213, %v5212
      %v5247 = vpack.c.b16 %v5215, %v5214
      %v5248 = vpack.c.b16 %v5217, %v5216
      %v5249 = vpack.c.b16 %v5219, %v5218
      %v5250 = vpack.c.b16 %v5221, %v5220
      %v5251 = vpack.c.b16 %v5223, %v5222
      %v5252 = vpack.c.b16 %v5225, %v5224
      %v5253 = vpack.c.b16 %v5227, %v5226
      %v5254 = vpack.c.b16 %v5229, %v5228
      %v5255 = vpack.c.b16 %v5231, %v5230
      %5280 = vmatprep.subr.bf16.mxu0 0
      %5281 = vmatpush1.bf16.msra.mxu0 %v5232
      %5282 = vmatprep.subr.bf16.mxu0 0
      %5283 = vmatpush1.bf16.msra.mxu0 %v5233
      %5284 = vmatprep.subr.bf16.mxu0 0
      %5285 = vmatpush1.bf16.msra.mxu0 %v5234
      %5286 = vmatprep.subr.bf16.mxu0 0
      %5287 = vmatpush1.bf16.msra.mxu0 %v5235
      %5288 = vmatprep.subr.bf16.mxu0 0
      %5289 = vmatpush1.bf16.msra.mxu0 %v5236
      %5290 = vmatprep.subr.bf16.mxu0 0
      %5291 = vmatpush1.bf16.msra.mxu0 %v5237
      %5292 = vmatprep.subr.bf16.mxu0 0
      %5293 = vmatpush1.bf16.msra.mxu0 %v5238
      %5294 = vmatprep.subr.bf16.mxu0 0
      %5295 = vmatpush1.bf16.msra.mxu0 %v5239
      %5296 = vmatprep.subr.bf16.mxu0 0
      %5297 = vmatpush1.bf16.msra.mxu0 %v5240
      %5298 = vmatprep.subr.bf16.mxu0 0
      %5299 = vmatpush1.bf16.msra.mxu0 %v5241
      %5300 = vmatprep.subr.bf16.mxu0 0
      %5301 = vmatpush1.bf16.msra.mxu0 %v5242
      %5302 = vmatprep.subr.bf16.mxu0 0
      %5303 = vmatpush1.bf16.msra.mxu0 %v5243
      %5304 = vmatprep.subr.bf16.mxu0 0
      %5305 = vmatpush1.bf16.msra.mxu0 %v5244
      %5306 = vmatprep.subr.bf16.mxu0 0
      %5307 = vmatpush1.bf16.msra.mxu0 %v5245
      %5308 = vmatprep.subr.bf16.mxu0 0
      %5309 = vmatpush1.bf16.msra.mxu0 %v5246
      %5310 = vmatprep.subr.bf16.mxu0 0
      %5311 = vmatpush1.bf16.msra.mxu0 %v5247
      %5312 = vmatprep.mubr.bf16.mxu0 %v3769
      %5313 = vmatmul.mubr.bf16.gmra.mrb[0].mxu0 %v3656
      %v5314 = vpop.f32.mrb[0].mxu0
      %v5315 = vadd.f32 0.0, %v5314
      %v5316 = vpop.f32.mrb[0].mxu0
      %v5317 = vpop.f32.mrb[0].mxu0
      %v5318 = vadd.f32 0.0, %v5317
      %v5319 = vpop.f32.mrb[0].mxu0
      %5320 = vmatprep.mubr.bf16.mxu0 %v3781
      %5321 = vmatmul.mubr.bf16.gmra.mrb[0].mxu0 %v3657
      %v5322 = vpop.f32.mrb[0].mxu0
      %v5323 = vadd.f32 0.0, %v5322
      %v5324 = vpop.f32.mrb[0].mxu0
      %v5325 = vpop.f32.mrb[0].mxu0
      %v5326 = vadd.f32 0.0, %v5325
      %v5327 = vpop.f32.mrb[0].mxu0
      %5328 = vmatprep.mubr.bf16.mxu0 %v3793
      %5329 = vmatmul.mubr.bf16.gmra.mrb[0].mxu0 %v3658
      %v5330 = vpop.f32.mrb[0].mxu0
      %v5331 = vadd.f32 0.0, %v5330
      %v5332 = vpop.f32.mrb[0].mxu0
      %v5333 = vpop.f32.mrb[0].mxu0
      %v5334 = vadd.f32 0.0, %v5333
      %v5335 = vpop.f32.mrb[0].mxu0
      %5336 = vmatprep.mubr.bf16.mxu0 %v3805
      %5337 = vmatmul.mubr.bf16.gmra.mrb[0].mxu0 %v3659
      %v5338 = vpop.f32.mrb[0].mxu0
      %v5339 = vadd.f32 0.0, %v5338
      %v5340 = vpop.f32.mrb[0].mxu0
      %v5341 = vpop.f32.mrb[0].mxu0
      %v5342 = vadd.f32 0.0, %v5341
      %v5343 = vpop.f32.mrb[0].mxu0
      %5344 = vmatprep.mubr.bf16.mxu0 %v3817
      %5345 = vmatmul.mubr.bf16.gmra.mrb[0].mxu0 %v3660
      %v5346 = vpop.f32.mrb[0].mxu0
      %v5347 = vadd.f32 0.0, %v5346
      %v5348 = vpop.f32.mrb[0].mxu0
      %v5349 = vpop.f32.mrb[0].mxu0
      %v5350 = vadd.f32 0.0, %v5349
      %v5351 = vpop.f32.mrb[0].mxu0
      %5352 = vmatprep.mubr.bf16.mxu0 %v3829
      %5353 = vmatmul.mubr.bf16.gmra.mrb[0].mxu0 %v3661
      %v5354 = vpop.f32.mrb[0].mxu0
      %v5355 = vadd.f32 0.0, %v5354
      %v5356 = vpop.f32.mrb[0].mxu0
      %v5357 = vpop.f32.mrb[0].mxu0
      %v5358 = vadd.f32 0.0, %v5357
      %v5359 = vpop.f32.mrb[0].mxu0
      %5360 = vmatprep.mubr.bf16.mxu0 %v3841
      %5361 = vmatmul.mubr.bf16.gmra.mrb[0].mxu0 %v3662
      %v5362 = vpop.f32.mrb[0].mxu0
      %v5363 = vadd.f32 0.0, %v5362
      %v5364 = vpop.f32.mrb[0].mxu0
      %v5365 = vpop.f32.mrb[0].mxu0
      %v5366 = vadd.f32 0.0, %v5365
      %v5367 = vpop.f32.mrb[0].mxu0
      %5368 = vmatprep.mubr.bf16.mxu0 %v3853
      %5369 = vmatmul.mubr.bf16.gmra.mrb[0].mxu0 %v3663
      %v5370 = vpop.f32.mrb[0].mxu0
      %v5371 = vadd.f32 0.0, %v5370
      %v5372 = vpop.f32.mrb[0].mxu0
      %v5373 = vpop.f32.mrb[0].mxu0
      %v5374 = vadd.f32 0.0, %v5373
      %v5375 = vpop.f32.mrb[0].mxu0
      %5376 = vmatprep.mubr.bf16.mxu0 %v3865
      %5377 = vmatmul.mubr.bf16.gmra.mrb[0].mxu0 %v3664
      %v5378 = vpop.f32.mrb[0].mxu0
      %v5379 = vadd.f32 0.0, %v5378
      %v5380 = vpop.f32.mrb[0].mxu0
      %v5381 = vpop.f32.mrb[0].mxu0
      %v5382 = vadd.f32 0.0, %v5381
      %v5383 = vpop.f32.mrb[0].mxu0
      %5384 = vmatprep.mubr.bf16.mxu0 %v3877
      %5385 = vmatmul.mubr.bf16.gmra.mrb[0].mxu0 %v3665
      %v5386 = vpop.f32.mrb[0].mxu0
      %v5387 = vadd.f32 0.0, %v5386
      %v5388 = vpop.f32.mrb[0].mxu0
      %v5389 = vpop.f32.mrb[0].mxu0
      %v5390 = vadd.f32 0.0, %v5389
      %v5391 = vpop.f32.mrb[0].mxu0
      %5392 = vmatprep.mubr.bf16.mxu0 %v3889
      %5393 = vmatmul.mubr.bf16.gmra.mrb[0].mxu0 %v3666
      %v5394 = vpop.f32.mrb[0].mxu0
      %v5395 = vadd.f32 0.0, %v5394
      %v5396 = vpop.f32.mrb[0].mxu0
      %v5397 = vpop.f32.mrb[0].mxu0
      %v5398 = vadd.f32 0.0, %v5397
      %v5399 = vpop.f32.mrb[0].mxu0
      %5400 = vmatprep.mubr.bf16.mxu0 %v3901
      %5401 = vmatmul.mubr.bf16.gmra.mrb[0].mxu0 %v3667
      %v5402 = vpop.f32.mrb[0].mxu0
      %v5403 = vadd.f32 0.0, %v5402
      %v5404 = vpop.f32.mrb[0].mxu0
      %v5405 = vpop.f32.mrb[0].mxu0
      %v5406 = vadd.f32 0.0, %v5405
      %v5407 = vpop.f32.mrb[0].mxu0
      %5408 = vmatprep.mubr.bf16.mxu0 %v3913
      %5409 = vmatmul.mubr.bf16.gmra.mrb[0].mxu0 %v3668
      %v5410 = vpop.f32.mrb[0].mxu0
      %v5411 = vadd.f32 0.0, %v5410
      %v5412 = vpop.f32.mrb[0].mxu0
      %v5413 = vpop.f32.mrb[0].mxu0
      %v5414 = vadd.f32 0.0, %v5413
      %v5415 = vpop.f32.mrb[0].mxu0
      %5416 = vmatprep.mubr.bf16.mxu0 %v3925
      %5417 = vmatmul.mubr.bf16.gmra.mrb[0].mxu0 %v3669
      %v5418 = vpop.f32.mrb[0].mxu0
      %v5419 = vadd.f32 0.0, %v5418
      %v5420 = vpop.f32.mrb[0].mxu0
      %v5421 = vpop.f32.mrb[0].mxu0
      %v5422 = vadd.f32 0.0, %v5421
      %v5423 = vpop.f32.mrb[0].mxu0
      %5424 = vmatprep.mubr.bf16.mxu0 %v4074
      %5425 = vmatmul.mubr.bf16.gmra.mrb[0].mxu0 %v4058
      %v5426 = vpop.f32.mrb[0].mxu0
      %v5427 = vadd.f32 0.0, %v5426
      %v5428 = vpop.f32.mrb[0].mxu0
      %v5429 = vpop.f32.mrb[0].mxu0
      %v5430 = vadd.f32 0.0, %v5429
      %v5431 = vpop.f32.mrb[0].mxu0
      %5432 = vmatprep.mubr.bf16.mxu0 %v5081
      %5433 = vmatmul.mubr.bf16.gmra.mrb[0].mxu0 %v5065
      %v5434 = vpop.f32.mrb[0].mxu0
      %v5435 = vadd.f32 0.0, %v5434
      %v5436 = vpop.f32.mrb[0].mxu0
      %v5437 = vpop.f32.mrb[0].mxu0
      %v5438 = vadd.f32 0.0, %v5437
      %v5439 = vpop.f32.mrb[0].mxu0
      %5440 = vdwg.mxu0
      %5441 = vmatprep.subr.bf16.mxu0 0
      %5442 = vmatpush1.bf16.msra.mxu0 %v5248
      %5443 = vmatprep.subr.bf16.mxu0 0
      %5444 = vmatpush1.bf16.msra.mxu0 %v5249
      %5445 = vmatprep.subr.bf16.mxu0 0
      %5446 = vmatpush1.bf16.msra.mxu0 %v5250
      %5447 = vmatprep.subr.bf16.mxu0 0
      %5448 = vmatpush1.bf16.msra.mxu0 %v5251
      %5449 = vmatprep.subr.bf16.mxu0 0
      %5450 = vmatpush1.bf16.msra.mxu0 %v5252
      %5451 = vmatprep.subr.bf16.mxu0 0
      %5452 = vmatpush1.bf16.msra.mxu0 %v5253
      %5453 = vmatprep.subr.bf16.mxu0 0
      %5454 = vmatpush1.bf16.msra.mxu0 %v5254
      %5455 = vmatprep.subr.bf16.mxu0 0
      %5456 = vmatpush1.bf16.msra.mxu0 %v5255
      %5457 = vmatprep.subr.bf16.mxu0 0
      %5458 = vmatpush1.bf16.msra.mxu0 0
      %5459 = vmatprep.subr.bf16.mxu0 0
      %5460 = vmatpush1.bf16.msra.mxu0 0
      %5461 = vmatprep.subr.bf16.mxu0 0
      %5462 = vmatpush1.bf16.msra.mxu0 0
      %5463 = vmatprep.subr.bf16.mxu0 0
      %5464 = vmatpush1.bf16.msra.mxu0 0
      %5465 = vmatprep.subr.bf16.mxu0 0
      %5466 = vmatpush1.bf16.msra.mxu0 0
      %5467 = vmatprep.subr.bf16.mxu0 0
      %5468 = vmatpush1.bf16.msra.mxu0 0
      %5469 = vmatprep.subr.bf16.mxu0 0
      %5470 = vmatpush1.bf16.msra.mxu0 0
      %5471 = vmatprep.subr.bf16.mxu0 0
      %5472 = vmatpush1.bf16.msra.mxu0 0
      %5473 = vmatprep.mubr.bf16.mxu0 0
      %5474 = vmatmul.mubr.bf16.gmra.mrb[0].mxu0 %v3950
      %v5475 = vpop.f32.mrb[0].mxu0
      %v5476 = vadd.f32 %v5315, %v5475
      %v5477 = vpop.f32.mrb[0].mxu0
      %v5478 = vpop.f32.mrb[0].mxu0
      %v5479 = vadd.f32 %v5318, %v5478
      %v5480 = vpop.f32.mrb[0].mxu0
      %5481 = vmatprep.mubr.bf16.mxu0 0
      %5482 = vmatmul.mubr.bf16.gmra.mrb[0].mxu0 %v3953
      %v5483 = vpop.f32.mrb[0].mxu0
      %v5484 = vadd.f32 %v5323, %v5483
      %v5485 = vpop.f32.mrb[0].mxu0
      %v5486 = vpop.f32.mrb[0].mxu0
      %v5487 = vadd.f32 %v5326, %v5486
      %v5488 = vpop.f32.mrb[0].mxu0
      %5489 = vmatprep.mubr.bf16.mxu0 0
      %5490 = vmatmul.mubr.bf16.gmra.mrb[0].mxu0 %v3956
      %v5491 = vpop.f32.mrb[0].mxu0
      %v5492 = vadd.f32 %v5331, %v5491
      %v5493 = vpop.f32.mrb[0].mxu0
      %v5494 = vpop.f32.mrb[0].mxu0
      %v5495 = vadd.f32 %v5334, %v5494
      %v5496 = vpop.f32.mrb[0].mxu0
      %5497 = vmatprep.mubr.bf16.mxu0 0
      %5498 = vmatmul.mubr.bf16.gmra.mrb[0].mxu0 %v3959
      %v5499 = vpop.f32.mrb[0].mxu0
      %v5500 = vadd.f32 %v5339, %v5499
      %v5501 = vpop.f32.mrb[0].mxu0
      %v5502 = vpop.f32.mrb[0].mxu0
      %v5503 = vadd.f32 %v5342, %v5502
      %v5504 = vpop.f32.mrb[0].mxu0
      %5505 = vmatprep.mubr.bf16.mxu0 0
      %5506 = vmatmul.mubr.bf16.gmra.mrb[0].mxu0 %v3962
      %v5507 = vpop.f32.mrb[0].mxu0
      %v5508 = vadd.f32 %v5347, %v5507
      %v5509 = vpop.f32.mrb[0].mxu0
      %v5510 = vpop.f32.mrb[0].mxu0
      %v5511 = vadd.f32 %v5350, %v5510
      %v5512 = vpop.f32.mrb[0].mxu0
      %5513 = vmatprep.mubr.bf16.mxu0 0
      %5514 = vmatmul.mubr.bf16.gmra.mrb[0].mxu0 %v3965
      %v5515 = vpop.f32.mrb[0].mxu0
      %v5516 = vadd.f32 %v5355, %v5515
      %v5517 = vpop.f32.mrb[0].mxu0
      %v5518 = vpop.f32.mrb[0].mxu0
      %v5519 = vadd.f32 %v5358, %v5518
      %v5520 = vpop.f32.mrb[0].mxu0
      %5521 = vmatprep.mubr.bf16.mxu0 0
      %5522 = vmatmul.mubr.bf16.gmra.mrb[0].mxu0 %v3968
      %v5523 = vpop.f32.mrb[0].mxu0
      %v5524 = vadd.f32 %v5363, %v5523
      %v5525 = vpop.f32.mrb[0].mxu0
      %v5526 = vpop.f32.mrb[0].mxu0
      %v5527 = vadd.f32 %v5366, %v5526
      %v5528 = vpop.f32.mrb[0].mxu0
      %5529 = vmatprep.mubr.bf16.mxu0 0
      %5530 = vmatmul.mubr.bf16.gmra.mrb[0].mxu0 %v3971
      %v5531 = vpop.f32.mrb[0].mxu0
      %v5532 = vadd.f32 %v5371, %v5531
      %v5533 = vpop.f32.mrb[0].mxu0
      %v5534 = vpop.f32.mrb[0].mxu0
      %v5535 = vadd.f32 %v5374, %v5534
      %v5536 = vpop.f32.mrb[0].mxu0
      %5537 = vmatprep.mubr.bf16.mxu0 0
      %5538 = vmatmul.mubr.bf16.gmra.mrb[0].mxu0 %v3974
      %v5539 = vpop.f32.mrb[0].mxu0
      %v5540 = vadd.f32 %v5379, %v5539
      %v5541 = vpop.f32.mrb[0].mxu0
      %v5542 = vpop.f32.mrb[0].mxu0
      %v5543 = vadd.f32 %v5382, %v5542
      %v5544 = vpop.f32.mrb[0].mxu0
      %5545 = vmatprep.mubr.bf16.mxu0 0
      %5546 = vmatmul.mubr.bf16.gmra.mrb[0].mxu0 %v3977
      %v5547 = vpop.f32.mrb[0].mxu0
      %v5548 = vadd.f32 %v5387, %v5547
      %v5549 = vpop.f32.mrb[0].mxu0
      %v5550 = vpop.f32.mrb[0].mxu0
      %v5551 = vadd.f32 %v5390, %v5550
      %v5552 = vpop.f32.mrb[0].mxu0
      %5553 = vmatprep.mubr.bf16.mxu0 0
      %5554 = vmatmul.mubr.bf16.gmra.mrb[0].mxu0 %v3980
      %v5555 = vpop.f32.mrb[0].mxu0
      %v5556 = vadd.f32 %v5395, %v5555
      %v5557 = vpop.f32.mrb[0].mxu0
      %v5558 = vpop.f32.mrb[0].mxu0
      %v5559 = vadd.f32 %v5398, %v5558
      %v5560 = vpop.f32.mrb[0].mxu0
      %5561 = vmatprep.mubr.bf16.mxu0 0
      %5562 = vmatmul.mubr.bf16.gmra.mrb[0].mxu0 %v3983
      %v5563 = vpop.f32.mrb[0].mxu0
      %v5564 = vadd.f32 %v5403, %v5563
      %v5565 = vpop.f32.mrb[0].mxu0
      %v5566 = vpop.f32.mrb[0].mxu0
      %v5567 = vadd.f32 %v5406, %v5566
      %v5568 = vpop.f32.mrb[0].mxu0
      %5569 = vmatprep.mubr.bf16.mxu0 0
      %5570 = vmatmul.mubr.bf16.gmra.mrb[0].mxu0 %v3986
      %v5571 = vpop.f32.mrb[0].mxu0
      %v5572 = vadd.f32 %v5411, %v5571
      %v5573 = vpop.f32.mrb[0].mxu0
      %v5574 = vpop.f32.mrb[0].mxu0
      %v5575 = vadd.f32 %v5414, %v5574
      %v5576 = vpop.f32.mrb[0].mxu0
      %5577 = vmatprep.mubr.bf16.mxu0 0
      %5578 = vmatmul.mubr.bf16.gmra.mrb[0].mxu0 %v3989
      %v5579 = vpop.f32.mrb[0].mxu0
      %v5580 = vadd.f32 %v5419, %v5579
      %v5581 = vpop.f32.mrb[0].mxu0
      %v5582 = vpop.f32.mrb[0].mxu0
      %v5583 = vadd.f32 %v5422, %v5582
      %v5584 = vpop.f32.mrb[0].mxu0
      %5585 = vmatprep.mubr.bf16.mxu0 0
      %5586 = vmatmul.mubr.bf16.gmra.mrb[0].mxu0 %v4078
      %v5587 = vpop.f32.mrb[0].mxu0
      %v5588 = vadd.f32 %v5427, %v5587
      %v5589 = vpop.f32.mrb[0].mxu0
      %v5590 = vpop.f32.mrb[0].mxu0
      %v5591 = vadd.f32 %v5430, %v5590
      %v5592 = vpop.f32.mrb[0].mxu0
      %5593 = vmatprep.mubr.bf16.mxu0 0
      %5594 = vmatmul.mubr.bf16.gmra.mrb[0].mxu0 %v5085
      %v5595 = vpop.f32.mrb[0].mxu0
      %v5596 = vadd.f32 %v5435, %v5595
      %v5597 = vpop.f32.mrb[0].mxu0
      %v5598 = vpop.f32.mrb[0].mxu0
      %v5599 = vadd.f32 %v5438, %v5598
      %v5600 = vpop.f32.mrb[0].mxu0
      %5601 = vdwg.mxu0
      %v5602 = vadd.f32 %v4935, %v5476
      %v5603 = vadd.f32 %v4938, %v5479
      %v5604 = vadd.f32 %v4943, %v5484
      %v5605 = vadd.f32 %v4946, %v5487
      %v5606 = vadd.f32 %v4951, %v5492
      %v5607 = vadd.f32 %v4954, %v5495
      %v5608 = vadd.f32 %v4959, %v5500
      %v5609 = vadd.f32 %v4962, %v5503
      %v5610 = vadd.f32 %v4967, %v5508
      %v5611 = vadd.f32 %v4970, %v5511
      %v5612 = vadd.f32 %v4975, %v5516
      %v5613 = vadd.f32 %v4978, %v5519
      %v5614 = vadd.f32 %v4983, %v5524
      %v5615 = vadd.f32 %v4986, %v5527
      %v5616 = vadd.f32 %v4991, %v5532
      %v5617 = vadd.f32 %v4994, %v5535
      %v5618 = vadd.f32 %v4999, %v5540
      %v5619 = vadd.f32 %v5002, %v5543
      %v5620 = vadd.f32 %v5007, %v5548
      %v5621 = vadd.f32 %v5010, %v5551
      %v5622 = vadd.f32 %v5015, %v5556
      %v5623 = vadd.f32 %v5018, %v5559
      %v5624 = vadd.f32 %v5023, %v5564
      %v5625 = vadd.f32 %v5026, %v5567
      %v5626 = vadd.f32 %v5031, %v5572
      %v5627 = vadd.f32 %v5034, %v5575
      %v5628 = vadd.f32 %v5039, %v5580
      %v5629 = vadd.f32 %v5042, %v5583
      %v5630 = vadd.f32 %v5047, %v5588
      %v5631 = vadd.f32 %v5050, %v5591
      %v5632 = vadd.f32 %v5055, %v5596
      %v5633 = vadd.f32 %v5058, %v5599
      %v5634 = vld [vmem:[%s5] sm:$0x1]
      %v5636 = vlaneseq
      %v5637 = vshrl.u32 %v5636, 7
      %v5638 = vsub.s32 0, %v5637
      %v5639 = vrot.slane %v5634, %v5638
      %v5641 = vadd.f32 %v5602, %v5639
      %v5642 = vadd.f32 %v5603, %v5639
      %v5643 = vadd.f32 %v5604, %v5639
      %v5644 = vadd.f32 %v5605, %v5639
      %v5645 = vadd.f32 %v5606, %v5639
      %v5646 = vadd.f32 %v5607, %v5639
      %v5647 = vadd.f32 %v5608, %v5639
      %v5648 = vadd.f32 %v5609, %v5639
      %v5649 = vadd.f32 %v5610, %v5639
      %v5650 = vadd.f32 %v5611, %v5639
      %v5651 = vadd.f32 %v5612, %v5639
      %v5652 = vadd.f32 %v5613, %v5639
      %v5653 = vadd.f32 %v5614, %v5639
      %v5654 = vadd.f32 %v5615, %v5639
      %v5655 = vadd.f32 %v5616, %v5639
      %v5656 = vadd.f32 %v5617, %v5639
      %v5657 = vadd.f32 %v5618, %v5639
      %v5658 = vadd.f32 %v5619, %v5639
      %v5659 = vadd.f32 %v5620, %v5639
      %v5660 = vadd.f32 %v5621, %v5639
      %v5661 = vadd.f32 %v5622, %v5639
      %v5662 = vadd.f32 %v5623, %v5639
      %v5663 = vadd.f32 %v5624, %v5639
      %v5664 = vadd.f32 %v5625, %v5639
      %v5665 = vadd.f32 %v5626, %v5639
      %v5666 = vadd.f32 %v5627, %v5639
      %v5667 = vadd.f32 %v5628, %v5639
      %v5668 = vadd.f32 %v5629, %v5639
      %v5669 = vadd.f32 %v5630, %v5639
      %v5670 = vadd.f32 %v5631, %v5639
      %v5671 = vadd.f32 %v5632, %v5639
      %v5672 = vadd.f32 %v5633, %v5639
      %v5673 = vmul.f32 %v5641, 0.1
      %v5674 = vmul.f32 %v5642, 0.1
      %v5675 = vmul.f32 %v5643, 0.1
      %v5676 = vmul.f32 %v5644, 0.1
      %v5677 = vmul.f32 %v5645, 0.1
      %v5678 = vmul.f32 %v5646, 0.1
      %v5679 = vmul.f32 %v5647, 0.1
      %v5680 = vmul.f32 %v5648, 0.1
      %v5681 = vmul.f32 %v5649, 0.1
      %v5682 = vmul.f32 %v5650, 0.1
      %v5683 = vmul.f32 %v5651, 0.1
      %v5684 = vmul.f32 %v5652, 0.1
      %v5685 = vmul.f32 %v5653, 0.1
      %v5686 = vmul.f32 %v5654, 0.1
      %v5687 = vmul.f32 %v5655, 0.1
      %v5688 = vmul.f32 %v5656, 0.1
      %v5689 = vmul.f32 %v5657, 0.1
      %v5690 = vmul.f32 %v5658, 0.1
      %v5691 = vmul.f32 %v5659, 0.1
      %v5692 = vmul.f32 %v5660, 0.1
      %v5693 = vmul.f32 %v5661, 0.1
      %v5694 = vmul.f32 %v5662, 0.1
      %v5695 = vmul.f32 %v5663, 0.1
      %v5696 = vmul.f32 %v5664, 0.1
      %v5697 = vmul.f32 %v5665, 0.1
      %v5698 = vmul.f32 %v5666, 0.1
      %v5699 = vmul.f32 %v5667, 0.1
      %v5700 = vmul.f32 %v5668, 0.1
      %v5701 = vmul.f32 %v5669, 0.1
      %v5702 = vmul.f32 %v5670, 0.1
      %v5703 = vmul.f32 %v5671, 0.1
      %v5704 = vmul.f32 %v5672, 0.1
      %v5705 = vunpack.c.l.bf16 %v288
      %v5706 = vunpack.c.l.bf16 %v289
      %v5707 = vunpack.c.l.bf16 %v290
      %v5708 = vunpack.c.l.bf16 %v291
      %v5709 = vunpack.c.l.bf16 %v292
      %v5710 = vunpack.c.l.bf16 %v293
      %v5711 = vunpack.c.l.bf16 %v294
      %v5712 = vunpack.c.l.bf16 %v295
      %v5713 = vunpack.c.l.bf16 %v296
      %v5714 = vunpack.c.l.bf16 %v297
      %v5715 = vunpack.c.l.bf16 %v298
      %v5716 = vunpack.c.l.bf16 %v299
      %v5717 = vunpack.c.l.bf16 %v300
      %v5718 = vunpack.c.l.bf16 %v301
      %v5719 = vunpack.c.l.bf16 %v302
      %v5720 = vunpack.c.l.bf16 %v303
      %v5721 = vunpack.c.l.bf16 %v304
      %v5722 = vunpack.c.l.bf16 %v305
      %v5723 = vunpack.c.l.bf16 %v306
      %v5724 = vunpack.c.l.bf16 %v307
      %v5725 = vunpack.c.l.bf16 %v308
      %v5726 = vunpack.c.l.bf16 %v309
      %v5727 = vunpack.c.l.bf16 %v310
      %v5728 = vunpack.c.l.bf16 %v311
      %v5729 = vunpack.c.l.bf16 %v312
      %v5730 = vunpack.c.l.bf16 %v313
      %v5731 = vunpack.c.l.bf16 %v314
      %v5732 = vunpack.c.l.bf16 %v315
      %v5733 = vunpack.c.l.bf16 %v316
      %v5734 = vunpack.c.l.bf16 %v317
      %v5735 = vunpack.c.l.bf16 %v318
      %v5736 = vunpack.c.l.bf16 %v319
      %v5737 = vunpack.c.l.bf16 %v320
      %v5738 = vunpack.c.l.bf16 %v321
      %v5739 = vunpack.c.l.bf16 %v322
      %v5740 = vunpack.c.l.bf16 %v323
      %v5741 = vunpack.c.l.bf16 %v324
      %v5742 = vunpack.c.l.bf16 %v325
      %v5743 = vunpack.c.l.bf16 %v326
      %v5744 = vunpack.c.l.bf16 %v327
      %v5745 = vunpack.c.l.bf16 %v328
      %v5746 = vunpack.c.l.bf16 %v329
      %v5747 = vunpack.c.l.bf16 %v330
      %v5748 = vunpack.c.l.bf16 %v331
      %v5749 = vunpack.c.l.bf16 %v332
      %v5750 = vunpack.c.l.bf16 %v333
      %v5751 = vunpack.c.l.bf16 %v334
      %v5752 = vunpack.c.l.bf16 %v335
      %vm5801 = vcmask 1046528
      %v5802 = vrot.slane %v5705, 1
      %v5803 = vrot.slane %v5706, 1
      %v5804 = vsel %vm5801, %v5802, %v5803
      %v5805 = vrot.slane %v5707, 1
      %v5806 = vsel %vm5801, %v5803, %v5805
      %v5807 = vrot.slane %v5708, 1
      %v5808 = vrot.slane %v5709, 1
      %v5809 = vsel %vm5801, %v5807, %v5808
      %v5810 = vrot.slane %v5710, 1
      %v5811 = vsel %vm5801, %v5808, %v5810
      %v5812 = vrot.slane %v5711, 1
      %v5813 = vrot.slane %v5712, 1
      %v5814 = vsel %vm5801, %v5812, %v5813
      %v5815 = vrot.slane %v5713, 1
      %v5816 = vsel %vm5801, %v5813, %v5815
      %v5817 = vrot.slane %v5714, 1
      %v5818 = vrot.slane %v5715, 1
      %v5819 = vsel %vm5801, %v5817, %v5818
      %v5820 = vrot.slane %v5716, 1
      %v5821 = vsel %vm5801, %v5818, %v5820
      %v5822 = vrot.slane %v5717, 1
      %v5823 = vrot.slane %v5718, 1
      %v5824 = vsel %vm5801, %v5822, %v5823
      %v5825 = vrot.slane %v5719, 1
      %v5826 = vsel %vm5801, %v5823, %v5825
      %v5827 = vrot.slane %v5720, 1
      %v5828 = vrot.slane %v5721, 1
      %v5829 = vsel %vm5801, %v5827, %v5828
      %v5830 = vrot.slane %v5722, 1
      %v5831 = vsel %vm5801, %v5828, %v5830
      %v5832 = vrot.slane %v5723, 1
      %v5833 = vrot.slane %v5724, 1
      %v5834 = vsel %vm5801, %v5832, %v5833
      %v5835 = vrot.slane %v5725, 1
      %v5836 = vsel %vm5801, %v5833, %v5835
      %v5837 = vrot.slane %v5726, 1
      %v5838 = vrot.slane %v5727, 1
      %v5839 = vsel %vm5801, %v5837, %v5838
      %v5840 = vrot.slane %v5728, 1
      %v5841 = vsel %vm5801, %v5838, %v5840
      %v5842 = vrot.slane %v5729, 1
      %v5843 = vrot.slane %v5730, 1
      %v5844 = vsel %vm5801, %v5842, %v5843
      %v5845 = vrot.slane %v5731, 1
      %v5846 = vsel %vm5801, %v5843, %v5845
      %v5847 = vrot.slane %v5732, 1
      %v5848 = vrot.slane %v5733, 1
      %v5849 = vsel %vm5801, %v5847, %v5848
      %v5850 = vrot.slane %v5734, 1
      %v5851 = vsel %vm5801, %v5848, %v5850
      %v5852 = vrot.slane %v5735, 1
      %v5853 = vrot.slane %v5736, 1
      %v5854 = vsel %vm5801, %v5852, %v5853
      %v5855 = vrot.slane %v5737, 1
      %v5856 = vsel %vm5801, %v5853, %v5855
      %v5857 = vrot.slane %v5738, 1
      %v5858 = vrot.slane %v5739, 1
      %v5859 = vsel %vm5801, %v5857, %v5858
      %v5860 = vrot.slane %v5740, 1
      %v5861 = vsel %vm5801, %v5858, %v5860
      %v5862 = vrot.slane %v5741, 1
      %v5863 = vrot.slane %v5742, 1
      %v5864 = vsel %vm5801, %v5862, %v5863
      %v5865 = vrot.slane %v5743, 1
      %v5866 = vsel %vm5801, %v5863, %v5865
      %v5867 = vrot.slane %v5744, 1
      %v5868 = vrot.slane %v5745, 1
      %v5869 = vsel %vm5801, %v5867, %v5868
      %v5870 = vrot.slane %v5746, 1
      %v5871 = vsel %vm5801, %v5868, %v5870
      %v5872 = vrot.slane %v5747, 1
      %v5873 = vrot.slane %v5748, 1
      %v5874 = vsel %vm5801, %v5872, %v5873
      %v5875 = vrot.slane %v5749, 1
      %v5876 = vsel %vm5801, %v5873, %v5875
      %v5877 = vrot.slane %v5750, 1
      %v5878 = vrot.slane %v5751, 1
      %v5879 = vsel %vm5801, %v5877, %v5878
      %v5880 = vrot.slane %v5752, 1
      %v5881 = vsel %vm5801, %v5878, %v5880
      %v5914 = vadd.f32 %v5673, %v5804
      %v5915 = vadd.f32 %v5674, %v5806
      %v5916 = vadd.f32 %v5675, %v5809
      %v5917 = vadd.f32 %v5676, %v5811
      %v5918 = vadd.f32 %v5677, %v5814
      %v5919 = vadd.f32 %v5678, %v5816
      %v5920 = vadd.f32 %v5679, %v5819
      %v5921 = vadd.f32 %v5680, %v5821
      %v5922 = vadd.f32 %v5681, %v5824
      %v5923 = vadd.f32 %v5682, %v5826
      %v5924 = vadd.f32 %v5683, %v5829
      %v5925 = vadd.f32 %v5684, %v5831
      %v5926 = vadd.f32 %v5685, %v5834
      %v5927 = vadd.f32 %v5686, %v5836
      %v5928 = vadd.f32 %v5687, %v5839
      %v5929 = vadd.f32 %v5688, %v5841
      %v5930 = vadd.f32 %v5689, %v5844
      %v5931 = vadd.f32 %v5690, %v5846
      %v5932 = vadd.f32 %v5691, %v5849
      %v5933 = vadd.f32 %v5692, %v5851
      %v5934 = vadd.f32 %v5693, %v5854
      %v5935 = vadd.f32 %v5694, %v5856
      %v5936 = vadd.f32 %v5695, %v5859
      %v5937 = vadd.f32 %v5696, %v5861
      %v5938 = vadd.f32 %v5697, %v5864
      %v5939 = vadd.f32 %v5698, %v5866
      %v5940 = vadd.f32 %v5699, %v5869
      %v5941 = vadd.f32 %v5700, %v5871
      %v5942 = vadd.f32 %v5701, %v5874
      %v5943 = vadd.f32 %v5702, %v5876
      %v5944 = vadd.f32 %v5703, %v5879
      %v5945 = vadd.f32 %v5704, %v5881
      %5946 = vst [vmem:[%s275] sm:$0xff] %v5914
      %5947 = vst [vmem:[%s275 + $0x8] sm:$0xff] %v5915
      %5948 = vst [vmem:[%s275 + $0x10] sm:$0xff] %v5916
      %5949 = vst [vmem:[%s275 + $0x18] sm:$0xff] %v5917
      %5950 = vst [vmem:[%s275 + $0x20] sm:$0xff] %v5918
      %5951 = vst [vmem:[%s275 + $0x28] sm:$0xff] %v5919
      %5952 = vst [vmem:[%s275 + $0x30] sm:$0xff] %v5920
      %5953 = vst [vmem:[%s275 + $0x38] sm:$0xff] %v5921
      %5954 = vst [vmem:[%s275 + $0x40] sm:$0xff] %v5922
      %5955 = vst [vmem:[%s275 + $0x48] sm:$0xff] %v5923
      %5956 = vst [vmem:[%s275 + $0x50] sm:$0xff] %v5924
      %5957 = vst [vmem:[%s275 + $0x58] sm:$0xff] %v5925
      %5958 = vst [vmem:[%s275 + $0x60] sm:$0xff] %v5926
      %5959 = vst [vmem:[%s275 + $0x68] sm:$0xff] %v5927
      %5960 = vst [vmem:[%s275 + $0x70] sm:$0xff] %v5928
      %5961 = vst [vmem:[%s275 + $0x78] sm:$0xff] %v5929
      %5962 = vst [vmem:[%s275 + $0x80] sm:$0xff] %v5930
      %5963 = vst [vmem:[%s275 + $0x88] sm:$0xff] %v5931
      %5964 = vst [vmem:[%s275 + $0x90] sm:$0xff] %v5932
      %5965 = vst [vmem:[%s275 + $0x98] sm:$0xff] %v5933
      %5966 = vst [vmem:[%s275 + $0xa0] sm:$0xff] %v5934
      %5967 = vst [vmem:[%s275 + $0xa8] sm:$0xff] %v5935
      %5968 = vst [vmem:[%s275 + $0xb0] sm:$0xff] %v5936
      %5969 = vst [vmem:[%s275 + $0xb8] sm:$0xff] %v5937
      %5970 = vst [vmem:[%s275 + $0xc0] sm:$0xff] %v5938
      %5971 = vst [vmem:[%s275 + $0xc8] sm:$0xff] %v5939
      %5972 = vst [vmem:[%s275 + $0xd0] sm:$0xff] %v5940
      %5973 = vst [vmem:[%s275 + $0xd8] sm:$0xff] %v5941
      %5974 = vst [vmem:[%s275 + $0xe0] sm:$0xff] %v5942
      %5975 = vst [vmem:[%s275 + $0xe8] sm:$0xff] %v5943
      %5976 = vst [vmem:[%s275 + $0xf0] sm:$0xff] %v5944
      %5977 = vst [vmem:[%s275 + $0xf8] sm:$0xff] %v5945
      %s5978 = smul.u32 16, %s22
      %p5979 = scmp.lt.s32.totalorder %s21, 1
      %s5980 = scalar_select %p5979, %s21, 1
      %p5981 = scmp.lt.s32.totalorder %s5978, 15
      %s5982 = scalar_select %p5981, %s5978, 15
      %s5983 = smul.addr %s5982, 2
      %s5984 = smul.addr %s5980, 32
      %s5985 = sadd.s32 %s5983, %s5984
      %s5986 = smul.addr %s5985, 8
      %s5987 = scalar_lea.vmem %s6, %s5986
      // Predicated region
      $region49: #{residual_block_forward.1} parent=43 // pred_check
        %p5988 = pneg %p180
      $region50: #{residual_block_forward.1} parent=43 // pred_check_branch
        %5990 = sbr.rel (%p5988) target = $region52
      $region51: #{residual_block_forward.1} parent=43 // pred_region
        %s5991 = smul.u32 16, %s22
      $region52: #{residual_block_forward.1} parent=43 // pred_fallthru
        _
    $region44: #{residual_block_forward.1} parent=5 // pred_fallthru
      _
    %p5992 = scmp.le.s32.totalorder 2, %s12
    // Predicated region
    $region53: #{residual_block_forward.1} parent=5 // pred_check
      %p5993 = pneg %p5992
    $region54: #{residual_block_forward.1} parent=5 // pred_check_branch
      %5995 = sbr.rel (%p5993) target = $region56
    $region55: #{residual_block_forward.1} parent=5 // pred_region
      %s5996 = ssub.s32 %s12, 2
      // Predicated region
      $region57: #{residual_block_forward.1} parent=55 // pred_check
        %p5997 = pneg %p186
      $region58: #{residual_block_forward.1} parent=55 // pred_check_branch
        %5999 = sbr.rel (%p5997) target = $region60
      $region59: #{residual_block_forward.1} parent=55 // pred_region
        %s6000 = smul.u32 16, %s24
        %p6001 = scmp.lt.s32.totalorder %s23, 1
        %s6002 = scalar_select %p6001, %s23, 1
        %p6003 = scmp.lt.s32.totalorder %s6000, 15
        %s6004 = scalar_select %p6003, %s6000, 15
        %s6005 = smul.addr %s6004, 2
        %s6006 = smul.addr %s6002, 32
        %s6007 = sadd.s32 %s6005, %s6006
        %s6008 = smul.addr %s6007, 8
        %s6009 = scalar_lea.vmem %s6, %s6008
      $region60: #{residual_block_forward.1} parent=55 // pred_fallthru
        _
    $region56: #{residual_block_forward.1} parent=5 // pred_fallthru
      _
  $region6: #{residual_block_forward.1} parent=0 // loop_footer
    %s16 = sadd.s32 1, %s12
  $region7: #{residual_block_forward.1} parent=0 // loop_footer_branch
    %11 = sbr.rel target = $region3
  $region8: #{residual_block_forward.1} parent=0 // loop_exit
    _

</llo_original>
